<compile_context>
chip_gen: v5e
topology: v5e:2x2
jax: 0.10.0
libtpu: 0.0.40
codegen_flags: <defaults>
</compile_context>

<pallas_src>
import functools

import jax
import jax.numpy as jnp
import numpy as np
from jax.experimental import pallas as pl
from jax.experimental.pallas import tpu as pltpu


# ----------------------------------------------------------------------------
# Fused forward kernel: all layers, both directions, linear head
# ----------------------------------------------------------------------------
def _lstm_cell(gates_x, h, c, whh_T, H):
    """One LSTM cell step. gates_x already contains x @ W_ih^T + (b_ih + b_hh)."""
    g = gates_x + jnp.dot(h, whh_T, preferred_element_type=jnp.float32)
    i = jax.nn.sigmoid(g[:, 0 * H:1 * H])
    f = jax.nn.sigmoid(g[:, 1 * H:2 * H])
    gg = jnp.tanh(g[:, 2 * H:3 * H])
    o = jax.nn.sigmoid(g[:, 3 * H:4 * H])
    c_new = f * c + i * gg
    h_new = o * jnp.tanh(c_new)
    return h_new, c_new


def _make_fused_kernel(T, B, H, num_layers):
    H4 = 4 * H

    def kernel(*refs):
        # refs = (x2d, [wih_T, whh_T, bias] * num_layers, wout_T, bout,
        #         out_ref, hbuf_scratch)
        n_in = 1 + 3 * num_layers + 2
        x_ref = refs[0]
        wout_ref = refs[n_in - 2]
        bout_ref = refs[n_in - 1]
        out_ref = refs[n_in]
        hbuf = refs[n_in + 1]          # VMEM scratch (T*B, 2H)

        inp = x_ref[...]               # (T*B, Din) value, resident in VMEM
        for layer in range(num_layers):
            wih_ref, whh_ref, b_ref = refs[1 + 3 * layer:1 + 3 * layer + 3]
            # Input contribution for ALL timesteps and BOTH directions as one
            # wide MXU matmul; bias is folded in once (hoisted out of the
            # recurrence).  Columns [:4H] = forward gates, [4H:] = backward.
            xg = (jnp.dot(inp, wih_ref[...], preferred_element_type=jnp.float32)
                  + b_ref[...])        # (T*B, 8H)
            whh_f = whh_ref[:, :H4]    # (H, 4H)  lane-aligned slices, loaded once
            whh_b = whh_ref[:, H4:]
            h_f = jnp.zeros((B, H), jnp.float32)
            c_f = jnp.zeros((B, H), jnp.float32)
            h_b = jnp.zeros((B, H), jnp.float32)
            c_b = jnp.zeros((B, H), jnp.float32)
            # Fully unrolled time recurrence (T is small & static).  Forward
            # and backward run in lockstep from opposite ends and pack their
            # hidden states into one VMEM slab: [:, :H] = fwd, [:, H:] = bwd.
            for t in range(T):
                tb = T - 1 - t
                h_f, c_f = _lstm_cell(xg[t * B:(t + 1) * B, :H4],
                                      h_f, c_f, whh_f, H)
                h_b, c_b = _lstm_cell(xg[tb * B:(tb + 1) * B, H4:],
                                      h_b, c_b, whh_b, H)
                hbuf[t * B:(t + 1) * B, 0:H] = h_f
                hbuf[tb * B:(tb + 1) * B, H:2 * H] = h_b
            inp = hbuf[...]            # (T*B, 2H) -> input of next layer / head

        # Fused linear head; W_out^T pre-padded to 128 lanes so this single
        # whole-slab store is lane-dense (unmasked).
        out_ref[...] = (jnp.dot(inp, wout_ref[...],
                                preferred_element_type=jnp.float32)
                        + bout_ref[...])

    return kernel


def _prepare_kernel_params(params):
    """Pre-transpose / stack / pad weights into the kernel's layout."""
    layers = []
    for layer_p in params["lstm"]:
        w_ih_f, w_hh_f, b_f = layer_p["fwd"]
        w_ih_b, w_hh_b, b_b = layer_p["bwd"]
        wih_T = jnp.concatenate([w_ih_f.T, w_ih_b.T], axis=1)   # (Din, 8H)
        whh_T = jnp.concatenate([w_hh_f.T, w_hh_b.T], axis=1)   # (H,   8H)
        bias = jnp.concatenate([b_f, b_b], axis=1)              # (1,   8H)
        layers.append((wih_T, whh_T, bias))
    O = params["w_out"].shape[0]
    H2 = params["w_out"].shape[1]
    O_pad = ((O + 127) // 128) * 128
    wout_T = jnp.zeros((H2, O_pad), jnp.float32).at[:, :O].set(params["w_out"].T)
    bout = jnp.zeros((1, O_pad), jnp.float32).at[:, :O].set(params["b_out"])
    return layers, wout_T, bout, O, O_pad


def _blstm_forward_impl(x, params):
    T, B, D = x.shape
    layers, wout_T, bout, O, O_pad = _prepare_kernel_params(params)
    num_layers = len(layers)
    H = layers[0][1].shape[0]

    flat_w = [w for trio in layers for w in trio]
    in_arrays = [x.reshape(T * B, D)] + flat_w + [wout_T, bout]
    in_specs = [pl.BlockSpec(a.shape, lambda: (0, 0)) for a in in_arrays]

    out2d = pl.pallas_call(
        _make_fused_kernel(T, B, H, num_layers),
        out_shape=jax.ShapeDtypeStruct((T * B, O_pad), jnp.float32),
        in_specs=in_specs,
        out_specs=pl.BlockSpec((T * B, O_pad), lambda: (0, 0)),
        scratch_shapes=[pltpu.VMEM((T * B, 2 * H), jnp.float32)],
    )(*in_arrays)

    return out2d.reshape(T, B, O_pad)[:, :, :O]


blstm_forward = jax.jit(_blstm_forward_impl)


# ----------------------------------------------------------------------------
# Parameter init (deterministic, PyTorch-style uniform(-1/sqrt(H), 1/sqrt(H)))
# ----------------------------------------------------------------------------
def init_blstm_params(key, embed_size, output_size, hidden_size, num_layers):
    params = {"lstm": []}
    k = 1.0 / np.sqrt(hidden_size)
    for layer in range(num_layers):
        in_size = embed_size if layer == 0 else 2 * hidden_size
        layer_p = {}
        for tag in ("fwd", "bwd"):
            key, k1, k2, k3, k4 = jax.random.split(key, 5)
            w_ih = jax.random.uniform(k1, (4 * hidden_size, in_size), jnp.float32, -k, k)
            w_hh = jax.random.uniform(k2, (4 * hidden_size, hidden_size), jnp.float32, -k, k)
            b_ih = jax.random.uniform(k3, (4 * hidden_size,), jnp.float32, -k, k)
            b_hh = jax.random.uniform(k4, (4 * hidden_size,), jnp.float32, -k, k)
            layer_p[tag] = (w_ih, w_hh, (b_ih + b_hh).reshape(1, 4 * hidden_size))
        params["lstm"].append(layer_p)
    kl = 1.0 / np.sqrt(2 * hidden_size)
    key, k1, k2 = jax.random.split(key, 3)
    params["w_out"] = jax.random.uniform(
        k1, (output_size, 2 * hidden_size), jnp.float32, -kl, kl)
    params["b_out"] = jax.random.uniform(
        k2, (1, output_size), jnp.float32, -kl, kl)
    return params


# ----------------------------------------------------------------------------
# Pure-JAX reference (lax.scan) for correctness check
# ----------------------------------------------------------------------------
def _ref_lstm_dir(x, w_ih, w_hh, b):
    H = w_hh.shape[-1]
    B = x.shape[1]

    def step(carry, x_t):
        h, c = carry
        gates = x_t @ w_ih.T + h @ w_hh.T + b[0]
        i = jax.nn.sigmoid(gates[:, :H])
        f = jax.nn.sigmoid(gates[:, H:2 * H])
        g = jnp.tanh(gates[:, 2 * H:3 * H])
        o = jax.nn.sigmoid(gates[:, 3 * H:])
        c = f * c + i * g
        h = o * jnp.tanh(c)
        return (h, c), h

    init = (jnp.zeros((B, H), jnp.float32), jnp.zeros((B, H), jnp.float32))
    _, hs = jax.lax.scan(step, init, x)
    return hs


def _ref_forward(x, params):
    h = x
    for layer_p in params["lstm"]:
        f = _ref_lstm_dir(h, *layer_p["fwd"])
        b = jnp.flip(_ref_lstm_dir(jnp.flip(h, 0), *layer_p["bwd"]), 0)
        h = jnp.concatenate([f, b], axis=-1)
    return h @ params["w_out"].T + params["b_out"][0]


if __name__ == "__main__":
    SEQ_LEN, BATCH, EMBED = 8, 2, 16
    HIDDEN, OUTPUT, NUM_LAYERS = 32, 10, 2

    key = jax.random.PRNGKey(0)
    key_x, key_p = jax.random.split(key)
    x = jax.random.normal(key_x, (SEQ_LEN, BATCH, EMBED), jnp.float32)
    params = init_blstm_params(key_p, EMBED, OUTPUT, HIDDEN, NUM_LAYERS)

    out = jax.block_until_ready(blstm_forward(x, params))
    assert out.shape == (SEQ_LEN, BATCH, OUTPUT), out.shape

    ref = jax.block_until_ready(_ref_forward(x, params))
    np.testing.assert_allclose(np.asarray(out), np.asarray(ref),
                               rtol=1e-5, atol=1e-5)
    print("KERNEL_OK")
</pallas_src>

<mosaic_0001>
module attributes {stable_mosaic.version = 11 : i64} {
  func.func @kernel(%arg0: memref<16x16xf32, #tpu.memory_space<vmem>>, %arg1: memref<16x256xf32, #tpu.memory_space<vmem>>, %arg2: memref<32x256xf32, #tpu.memory_space<vmem>>, %arg3: memref<1x256xf32, #tpu.memory_space<vmem>>, %arg4: memref<64x256xf32, #tpu.memory_space<vmem>>, %arg5: memref<32x256xf32, #tpu.memory_space<vmem>>, %arg6: memref<1x256xf32, #tpu.memory_space<vmem>>, %arg7: memref<64x128xf32, #tpu.memory_space<vmem>>, %arg8: memref<1x128xf32, #tpu.memory_space<vmem>>, %arg9: memref<16x128xf32, #tpu.memory_space<vmem>>, %arg10: memref<16x64xf32, #tpu.memory_space<vmem>>) attributes {dimension_semantics = [], scalar_prefetch = 0 : i64, scratch_operands = 1 : i64, tpu.core_type = #tpu.core_type<tc>} {
    %c0 = arith.constant 0 : index
    %c0_0 = arith.constant 0 : index
    %0 = vector.load %arg0[%c0, %c0_0] : memref<16x16xf32, #tpu.memory_space<vmem>>, vector<16x16xf32>
    %c0_1 = arith.constant 0 : index
    %c0_2 = arith.constant 0 : index
    %1 = vector.load %arg1[%c0_1, %c0_2] : memref<16x256xf32, #tpu.memory_space<vmem>>, vector<16x256xf32>
    %cst = arith.constant dense<0.000000e+00> : vector<16x256xf32>
    %2 = tpu.matmul %0, %1, %cst {dimension_numbers = #tpu.dot_dimension_numbers<[1], [0], [0], [1], [0, 0, 1, 1], [], []>} : vector<16x16xf32>, vector<16x256xf32>, vector<16x256xf32> -> vector<16x256xf32>
    %c0_3 = arith.constant 0 : index
    %c0_4 = arith.constant 0 : index
    %3 = vector.load %arg3[%c0_3, %c0_4] : memref<1x256xf32, #tpu.memory_space<vmem>>, vector<1x256xf32>
    %4 = vector.broadcast %3 : vector<1x256xf32> to vector<16x256xf32>
    %5 = arith.addf %2, %4 : vector<16x256xf32>
    %c0_5 = arith.constant 0 : index
    %c0_6 = arith.constant 0 : index
    %6 = vector.load %arg2[%c0_5, %c0_6] : memref<32x256xf32, #tpu.memory_space<vmem>>, vector<32x128xf32>
    %c0_7 = arith.constant 0 : index
    %c128 = arith.constant 128 : index
    %7 = vector.load %arg2[%c0_7, %c128] : memref<32x256xf32, #tpu.memory_space<vmem>>, vector<32x128xf32>
    %cst_8 = arith.constant 0.000000e+00 : f32
    %8 = vector.broadcast %cst_8 : f32 to vector<2x32xf32>
    %cst_9 = arith.constant 0.000000e+00 : f32
    %9 = vector.broadcast %cst_9 : f32 to vector<2x32xf32>
    %cst_10 = arith.constant 0.000000e+00 : f32
    %10 = vector.broadcast %cst_10 : f32 to vector<2x32xf32>
    %cst_11 = arith.constant 0.000000e+00 : f32
    %11 = vector.broadcast %cst_11 : f32 to vector<2x32xf32>
    %12 = vector.extract_strided_slice %5 {offsets = [0, 0], sizes = [2, 128], strides = [1, 1]} : vector<16x256xf32> to vector<2x128xf32>
    %cst_12 = arith.constant dense<0.000000e+00> : vector<2x128xf32>
    %13 = tpu.matmul %8, %6, %cst_12 {dimension_numbers = #tpu.dot_dimension_numbers<[1], [0], [0], [1], [0, 0, 1, 1], [], []>} : vector<2x32xf32>, vector<32x128xf32>, vector<2x128xf32> -> vector<2x128xf32>
    %14 = arith.addf %12, %13 : vector<2x128xf32>
    %15 = vector.extract_strided_slice %14 {offsets = [0, 0], sizes = [2, 32], strides = [1, 1]} : vector<2x128xf32> to vector<2x32xf32>
    %16 = arith.negf %15 : vector<2x32xf32>
    %17 = math.exp %16 : vector<2x32xf32>
    %cst_13 = arith.constant 1.000000e+00 : f32
    %18 = vector.broadcast %cst_13 : f32 to vector<2x32xf32>
    %19 = arith.addf %18, %17 : vector<2x32xf32>
    %20 = arith.divf %18, %19 : vector<2x32xf32>
    %21 = vector.extract_strided_slice %14 {offsets = [0, 32], sizes = [2, 32], strides = [1, 1]} : vector<2x128xf32> to vector<2x32xf32>
    %22 = arith.negf %21 : vector<2x32xf32>
    %23 = math.exp %22 : vector<2x32xf32>
    %cst_14 = arith.constant 1.000000e+00 : f32
    %24 = vector.broadcast %cst_14 : f32 to vector<2x32xf32>
    %25 = arith.addf %24, %23 : vector<2x32xf32>
    %26 = arith.divf %24, %25 : vector<2x32xf32>
    %27 = vector.extract_strided_slice %14 {offsets = [0, 64], sizes = [2, 32], strides = [1, 1]} : vector<2x128xf32> to vector<2x32xf32>
    %28 = math.tanh %27 : vector<2x32xf32>
    %29 = vector.extract_strided_slice %14 {offsets = [0, 96], sizes = [2, 32], strides = [1, 1]} : vector<2x128xf32> to vector<2x32xf32>
    %30 = arith.negf %29 : vector<2x32xf32>
    %31 = math.exp %30 : vector<2x32xf32>
    %cst_15 = arith.constant 1.000000e+00 : f32
    %32 = vector.broadcast %cst_15 : f32 to vector<2x32xf32>
    %33 = arith.addf %32, %31 : vector<2x32xf32>
    %34 = arith.divf %32, %33 : vector<2x32xf32>
    %35 = arith.mulf %26, %9 : vector<2x32xf32>
    %36 = arith.mulf %20, %28 : vector<2x32xf32>
    %37 = arith.addf %35, %36 : vector<2x32xf32>
    %38 = math.tanh %37 : vector<2x32xf32>
    %39 = arith.mulf %34, %38 : vector<2x32xf32>
    %40 = vector.extract_strided_slice %5 {offsets = [14, 128], sizes = [2, 128], strides = [1, 1]} : vector<16x256xf32> to vector<2x128xf32>
    %cst_16 = arith.constant dense<0.000000e+00> : vector<2x128xf32>
    %41 = tpu.matmul %10, %7, %cst_16 {dimension_numbers = #tpu.dot_dimension_numbers<[1], [0], [0], [1], [0, 0, 1, 1], [], []>} : vector<2x32xf32>, vector<32x128xf32>, vector<2x128xf32> -> vector<2x128xf32>
    %42 = arith.addf %40, %41 : vector<2x128xf32>
    %43 = vector.extract_strided_slice %42 {offsets = [0, 0], sizes = [2, 32], strides = [1, 1]} : vector<2x128xf32> to vector<2x32xf32>
    %44 = arith.negf %43 : vector<2x32xf32>
    %45 = math.exp %44 : vector<2x32xf32>
    %cst_17 = arith.constant 1.000000e+00 : f32
    %46 = vector.broadcast %cst_17 : f32 to vector<2x32xf32>
    %47 = arith.addf %46, %45 : vector<2x32xf32>
    %48 = arith.divf %46, %47 : vector<2x32xf32>
    %49 = vector.extract_strided_slice %42 {offsets = [0, 32], sizes = [2, 32], strides = [1, 1]} : vector<2x128xf32> to vector<2x32xf32>
    %50 = arith.negf %49 : vector<2x32xf32>
    %51 = math.exp %50 : vector<2x32xf32>
    %cst_18 = arith.constant 1.000000e+00 : f32
    %52 = vector.broadcast %cst_18 : f32 to vector<2x32xf32>
    %53 = arith.addf %52, %51 : vector<2x32xf32>
    %54 = arith.divf %52, %53 : vector<2x32xf32>
    %55 = vector.extract_strided_slice %42 {offsets = [0, 64], sizes = [2, 32], strides = [1, 1]} : vector<2x128xf32> to vector<2x32xf32>
    %56 = math.tanh %55 : vector<2x32xf32>
    %57 = vector.extract_strided_slice %42 {offsets = [0, 96], sizes = [2, 32], strides = [1, 1]} : vector<2x128xf32> to vector<2x32xf32>
    %58 = arith.negf %57 : vector<2x32xf32>
    %59 = math.exp %58 : vector<2x32xf32>
    %cst_19 = arith.constant 1.000000e+00 : f32
    %60 = vector.broadcast %cst_19 : f32 to vector<2x32xf32>
    %61 = arith.addf %60, %59 : vector<2x32xf32>
    %62 = arith.divf %60, %61 : vector<2x32xf32>
    %63 = arith.mulf %54, %11 : vector<2x32xf32>
    %64 = arith.mulf %48, %56 : vector<2x32xf32>
    %65 = arith.addf %63, %64 : vector<2x32xf32>
    %66 = math.tanh %65 : vector<2x32xf32>
    %67 = arith.mulf %62, %66 : vector<2x32xf32>
    %c0_20 = arith.constant 0 : index
    %c0_21 = arith.constant 0 : index
    %68 = vector.load %arg10[%c0_20, %c0_21] : memref<16x64xf32, #tpu.memory_space<vmem>>, vector<2x32xf32>
    tpu.vector_store %arg10[%c0_20, %c0_21], %39 {strides = array<i32>} : memref<16x64xf32, #tpu.memory_space<vmem>>, vector<2x32xf32>,
    %c14 = arith.constant 14 : index
    %c32 = arith.constant 32 : index
    %69 = vector.load %arg10[%c14, %c32] : memref<16x64xf32, #tpu.memory_space<vmem>>, vector<2x32xf32>
    tpu.vector_store %arg10[%c14, %c32], %67 {strides = array<i32>} : memref<16x64xf32, #tpu.memory_space<vmem>>, vector<2x32xf32>,
    %70 = vector.extract_strided_slice %5 {offsets = [2, 0], sizes = [2, 128], strides = [1, 1]} : vector<16x256xf32> to vector<2x128xf32>
    %cst_22 = arith.constant dense<0.000000e+00> : vector<2x128xf32>
    %71 = tpu.matmul %39, %6, %cst_22 {dimension_numbers = #tpu.dot_dimension_numbers<[1], [0], [0], [1], [0, 0, 1, 1], [], []>} : vector<2x32xf32>, vector<32x128xf32>, vector<2x128xf32> -> vector<2x128xf32>
    %72 = arith.addf %70, %71 : vector<2x128xf32>
    %73 = vector.extract_strided_slice %72 {offsets = [0, 0], sizes = [2, 32], strides = [1, 1]} : vector<2x128xf32> to vector<2x32xf32>
    %74 = arith.negf %73 : vector<2x32xf32>
    %75 = math.exp %74 : vector<2x32xf32>
    %cst_23 = arith.constant 1.000000e+00 : f32
    %76 = vector.broadcast %cst_23 : f32 to vector<2x32xf32>
    %77 = arith.addf %76, %75 : vector<2x32xf32>
    %78 = arith.divf %76, %77 : vector<2x32xf32>
    %79 = vector.extract_strided_slice %72 {offsets = [0, 32], sizes = [2, 32], strides = [1, 1]} : vector<2x128xf32> to vector<2x32xf32>
    %80 = arith.negf %79 : vector<2x32xf32>
    %81 = math.exp %80 : vector<2x32xf32>
    %cst_24 = arith.constant 1.000000e+00 : f32
    %82 = vector.broadcast %cst_24 : f32 to vector<2x32xf32>
    %83 = arith.addf %82, %81 : vector<2x32xf32>
    %84 = arith.divf %82, %83 : vector<2x32xf32>
    %85 = vector.extract_strided_slice %72 {offsets = [0, 64], sizes = [2, 32], strides = [1, 1]} : vector<2x128xf32> to vector<2x32xf32>
    %86 = math.tanh %85 : vector<2x32xf32>
    %87 = vector.extract_strided_slice %72 {offsets = [0, 96], sizes = [2, 32], strides = [1, 1]} : vector<2x128xf32> to vector<2x32xf32>
    %88 = arith.negf %87 : vector<2x32xf32>
    %89 = math.exp %88 : vector<2x32xf32>
    %cst_25 = arith.constant 1.000000e+00 : f32
    %90 = vector.broadcast %cst_25 : f32 to vector<2x32xf32>
    %91 = arith.addf %90, %89 : vector<2x32xf32>
    %92 = arith.divf %90, %91 : vector<2x32xf32>
    %93 = arith.mulf %84, %37 : vector<2x32xf32>
    %94 = arith.mulf %78, %86 : vector<2x32xf32>
    %95 = arith.addf %93, %94 : vector<2x32xf32>
    %96 = math.tanh %95 : vector<2x32xf32>
    %97 = arith.mulf %92, %96 : vector<2x32xf32>
    %98 = vector.extract_strided_slice %5 {offsets = [12, 128], sizes = [2, 128], strides = [1, 1]} : vector<16x256xf32> to vector<2x128xf32>
    %cst_26 = arith.constant dense<0.000000e+00> : vector<2x128xf32>
    %99 = tpu.matmul %67, %7, %cst_26 {dimension_numbers = #tpu.dot_dimension_numbers<[1], [0], [0], [1], [0, 0, 1, 1], [], []>} : vector<2x32xf32>, vector<32x128xf32>, vector<2x128xf32> -> vector<2x128xf32>
    %100 = arith.addf %98, %99 : vector<2x128xf32>
    %101 = vector.extract_strided_slice %100 {offsets = [0, 0], sizes = [2, 32], strides = [1, 1]} : vector<2x128xf32> to vector<2x32xf32>
    %102 = arith.negf %101 : vector<2x32xf32>
    %103 = math.exp %102 : vector<2x32xf32>
    %cst_27 = arith.constant 1.000000e+00 : f32
    %104 = vector.broadcast %cst_27 : f32 to vector<2x32xf32>
    %105 = arith.addf %104, %103 : vector<2x32xf32>
    %106 = arith.divf %104, %105 : vector<2x32xf32>
    %107 = vector.extract_strided_slice %100 {offsets = [0, 32], sizes = [2, 32], strides = [1, 1]} : vector<2x128xf32> to vector<2x32xf32>
    %108 = arith.negf %107 : vector<2x32xf32>
    %109 = math.exp %108 : vector<2x32xf32>
    %cst_28 = arith.constant 1.000000e+00 : f32
    %110 = vector.broadcast %cst_28 : f32 to vector<2x32xf32>
    %111 = arith.addf %110, %109 : vector<2x32xf32>
    %112 = arith.divf %110, %111 : vector<2x32xf32>
    %113 = vector.extract_strided_slice %100 {offsets = [0, 64], sizes = [2, 32], strides = [1, 1]} : vector<2x128xf32> to vector<2x32xf32>
    %114 = math.tanh %113 : vector<2x32xf32>
    %115 = vector.extract_strided_slice %100 {offsets = [0, 96], sizes = [2, 32], strides = [1, 1]} : vector<2x128xf32> to vector<2x32xf32>
    %116 = arith.negf %115 : vector<2x32xf32>
    %117 = math.exp %116 : vector<2x32xf32>
    %cst_29 = arith.constant 1.000000e+00 : f32
    %118 = vector.broadcast %cst_29 : f32 to vector<2x32xf32>
    %119 = arith.addf %118, %117 : vector<2x32xf32>
    %120 = arith.divf %118, %119 : vector<2x32xf32>
    %121 = arith.mulf %112, %65 : vector<2x32xf32>
    %122 = arith.mulf %106, %114 : vector<2x32xf32>
    %123 = arith.addf %121, %122 : vector<2x32xf32>
    %124 = math.tanh %123 : vector<2x32xf32>
    %125 = arith.mulf %120, %124 : vector<2x32xf32>
    %c2 = arith.constant 2 : index
    %c0_30 = arith.constant 0 : index
    %126 = vector.load %arg10[%c2, %c0_30] : memref<16x64xf32, #tpu.memory_space<vmem>>, vector<2x32xf32>
    tpu.vector_store %arg10[%c2, %c0_30], %97 {strides = array<i32>} : memref<16x64xf32, #tpu.memory_space<vmem>>, vector<2x32xf32>,
    %c12 = arith.constant 12 : index
    %c32_31 = arith.constant 32 : index
    %127 = vector.load %arg10[%c12, %c32_31] : memref<16x64xf32, #tpu.memory_space<vmem>>, vector<2x32xf32>
    tpu.vector_store %arg10[%c12, %c32_31], %125 {strides = array<i32>} : memref<16x64xf32, #tpu.memory_space<vmem>>, vector<2x32xf32>,
    %128 = vector.extract_strided_slice %5 {offsets = [4, 0], sizes = [2, 128], strides = [1, 1]} : vector<16x256xf32> to vector<2x128xf32>
    %cst_32 = arith.constant dense<0.000000e+00> : vector<2x128xf32>
    %129 = tpu.matmul %97, %6, %cst_32 {dimension_numbers = #tpu.dot_dimension_numbers<[1], [0], [0], [1], [0, 0, 1, 1], [], []>} : vector<2x32xf32>, vector<32x128xf32>, vector<2x128xf32> -> vector<2x128xf32>
    %130 = arith.addf %128, %129 : vector<2x128xf32>
    %131 = vector.extract_strided_slice %130 {offsets = [0, 0], sizes = [2, 32], strides = [1, 1]} : vector<2x128xf32> to vector<2x32xf32>
    %132 = arith.negf %131 : vector<2x32xf32>
    %133 = math.exp %132 : vector<2x32xf32>
    %cst_33 = arith.constant 1.000000e+00 : f32
    %134 = vector.broadcast %cst_33 : f32 to vector<2x32xf32>
    %135 = arith.addf %134, %133 : vector<2x32xf32>
    %136 = arith.divf %134, %135 : vector<2x32xf32>
    %137 = vector.extract_strided_slice %130 {offsets = [0, 32], sizes = [2, 32], strides = [1, 1]} : vector<2x128xf32> to vector<2x32xf32>
    %138 = arith.negf %137 : vector<2x32xf32>
    %139 = math.exp %138 : vector<2x32xf32>
    %cst_34 = arith.constant 1.000000e+00 : f32
    %140 = vector.broadcast %cst_34 : f32 to vector<2x32xf32>
    %141 = arith.addf %140, %139 : vector<2x32xf32>
    %142 = arith.divf %140, %141 : vector<2x32xf32>
    %143 = vector.extract_strided_slice %130 {offsets = [0, 64], sizes = [2, 32], strides = [1, 1]} : vector<2x128xf32> to vector<2x32xf32>
    %144 = math.tanh %143 : vector<2x32xf32>
    %145 = vector.extract_strided_slice %130 {offsets = [0, 96], sizes = [2, 32], strides = [1, 1]} : vector<2x128xf32> to vector<2x32xf32>
    %146 = arith.negf %145 : vector<2x32xf32>
    %147 = math.exp %146 : vector<2x32xf32>
    %cst_35 = arith.constant 1.000000e+00 : f32
    %148 = vector.broadcast %cst_35 : f32 to vector<2x32xf32>
    %149 = arith.addf %148, %147 : vector<2x32xf32>
    %150 = arith.divf %148, %149 : vector<2x32xf32>
    %151 = arith.mulf %142, %95 : vector<2x32xf32>
    %152 = arith.mulf %136, %144 : vector<2x32xf32>
    %153 = arith.addf %151, %152 : vector<2x32xf32>
    %154 = math.tanh %153 : vector<2x32xf32>
    %155 = arith.mulf %150, %154 : vector<2x32xf32>
    %156 = vector.extract_strided_slice %5 {offsets = [10, 128], sizes = [2, 128], strides = [1, 1]} : vector<16x256xf32> to vector<2x128xf32>
    %cst_36 = arith.constant dense<0.000000e+00> : vector<2x128xf32>
    %157 = tpu.matmul %125, %7, %cst_36 {dimension_numbers = #tpu.dot_dimension_numbers<[1], [0], [0], [1], [0, 0, 1, 1], [], []>} : vector<2x32xf32>, vector<32x128xf32>, vector<2x128xf32> -> vector<2x128xf32>
    %158 = arith.addf %156, %157 : vector<2x128xf32>
    %159 = vector.extract_strided_slice %158 {offsets = [0, 0], sizes = [2, 32], strides = [1, 1]} : vector<2x128xf32> to vector<2x32xf32>
    %160 = arith.negf %159 : vector<2x32xf32>
    %161 = math.exp %160 : vector<2x32xf32>
    %cst_37 = arith.constant 1.000000e+00 : f32
    %162 = vector.broadcast %cst_37 : f32 to vector<2x32xf32>
    %163 = arith.addf %162, %161 : vector<2x32xf32>
    %164 = arith.divf %162, %163 : vector<2x32xf32>
    %165 = vector.extract_strided_slice %158 {offsets = [0, 32], sizes = [2, 32], strides = [1, 1]} : vector<2x128xf32> to vector<2x32xf32>
    %166 = arith.negf %165 : vector<2x32xf32>
    %167 = math.exp %166 : vector<2x32xf32>
    %cst_38 = arith.constant 1.000000e+00 : f32
    %168 = vector.broadcast %cst_38 : f32 to vector<2x32xf32>
    %169 = arith.addf %168, %167 : vector<2x32xf32>
    %170 = arith.divf %168, %169 : vector<2x32xf32>
    %171 = vector.extract_strided_slice %158 {offsets = [0, 64], sizes = [2, 32], strides = [1, 1]} : vector<2x128xf32> to vector<2x32xf32>
    %172 = math.tanh %171 : vector<2x32xf32>
    %173 = vector.extract_strided_slice %158 {offsets = [0, 96], sizes = [2, 32], strides = [1, 1]} : vector<2x128xf32> to vector<2x32xf32>
    %174 = arith.negf %173 : vector<2x32xf32>
    %175 = math.exp %174 : vector<2x32xf32>
    %cst_39 = arith.constant 1.000000e+00 : f32
    %176 = vector.broadcast %cst_39 : f32 to vector<2x32xf32>
    %177 = arith.addf %176, %175 : vector<2x32xf32>
    %178 = arith.divf %176, %177 : vector<2x32xf32>
    %179 = arith.mulf %170, %123 : vector<2x32xf32>
    %180 = arith.mulf %164, %172 : vector<2x32xf32>
    %181 = arith.addf %179, %180 : vector<2x32xf32>
    %182 = math.tanh %181 : vector<2x32xf32>
    %183 = arith.mulf %178, %182 : vector<2x32xf32>
    %c4 = arith.constant 4 : index
    %c0_40 = arith.constant 0 : index
    %184 = vector.load %arg10[%c4, %c0_40] : memref<16x64xf32, #tpu.memory_space<vmem>>, vector<2x32xf32>
    tpu.vector_store %arg10[%c4, %c0_40], %155 {strides = array<i32>} : memref<16x64xf32, #tpu.memory_space<vmem>>, vector<2x32xf32>,
    %c10 = arith.constant 10 : index
    %c32_41 = arith.constant 32 : index
    %185 = vector.load %arg10[%c10, %c32_41] : memref<16x64xf32, #tpu.memory_space<vmem>>, vector<2x32xf32>
    tpu.vector_store %arg10[%c10, %c32_41], %183 {strides = array<i32>} : memref<16x64xf32, #tpu.memory_space<vmem>>, vector<2x32xf32>,
    %186 = vector.extract_strided_slice %5 {offsets = [6, 0], sizes = [2, 128], strides = [1, 1]} : vector<16x256xf32> to vector<2x128xf32>
    %cst_42 = arith.constant dense<0.000000e+00> : vector<2x128xf32>
    %187 = tpu.matmul %155, %6, %cst_42 {dimension_numbers = #tpu.dot_dimension_numbers<[1], [0], [0], [1], [0, 0, 1, 1], [], []>} : vector<2x32xf32>, vector<32x128xf32>, vector<2x128xf32> -> vector<2x128xf32>
    %188 = arith.addf %186, %187 : vector<2x128xf32>
    %189 = vector.extract_strided_slice %188 {offsets = [0, 0], sizes = [2, 32], strides = [1, 1]} : vector<2x128xf32> to vector<2x32xf32>
    %190 = arith.negf %189 : vector<2x32xf32>
    %191 = math.exp %190 : vector<2x32xf32>
    %cst_43 = arith.constant 1.000000e+00 : f32
    %192 = vector.broadcast %cst_43 : f32 to vector<2x32xf32>
    %193 = arith.addf %192, %191 : vector<2x32xf32>
    %194 = arith.divf %192, %193 : vector<2x32xf32>
    %195 = vector.extract_strided_slice %188 {offsets = [0, 32], sizes = [2, 32], strides = [1, 1]} : vector<2x128xf32> to vector<2x32xf32>
    %196 = arith.negf %195 : vector<2x32xf32>
    %197 = math.exp %196 : vector<2x32xf32>
    %cst_44 = arith.constant 1.000000e+00 : f32
    %198 = vector.broadcast %cst_44 : f32 to vector<2x32xf32>
    %199 = arith.addf %198, %197 : vector<2x32xf32>
    %200 = arith.divf %198, %199 : vector<2x32xf32>
    %201 = vector.extract_strided_slice %188 {offsets = [0, 64], sizes = [2, 32], strides = [1, 1]} : vector<2x128xf32> to vector<2x32xf32>
    %202 = math.tanh %201 : vector<2x32xf32>
    %203 = vector.extract_strided_slice %188 {offsets = [0, 96], sizes = [2, 32], strides = [1, 1]} : vector<2x128xf32> to vector<2x32xf32>
    %204 = arith.negf %203 : vector<2x32xf32>
    %205 = math.exp %204 : vector<2x32xf32>
    %cst_45 = arith.constant 1.000000e+00 : f32
    %206 = vector.broadcast %cst_45 : f32 to vector<2x32xf32>
    %207 = arith.addf %206, %205 : vector<2x32xf32>
    %208 = arith.divf %206, %207 : vector<2x32xf32>
    %209 = arith.mulf %200, %153 : vector<2x32xf32>
    %210 = arith.mulf %194, %202 : vector<2x32xf32>
    %211 = arith.addf %209, %210 : vector<2x32xf32>
    %212 = math.tanh %211 : vector<2x32xf32>
    %213 = arith.mulf %208, %212 : vector<2x32xf32>
    %214 = vector.extract_strided_slice %5 {offsets = [8, 128], sizes = [2, 128], strides = [1, 1]} : vector<16x256xf32> to vector<2x128xf32>
    %cst_46 = arith.constant dense<0.000000e+00> : vector<2x128xf32>
    %215 = tpu.matmul %183, %7, %cst_46 {dimension_numbers = #tpu.dot_dimension_numbers<[1], [0], [0], [1], [0, 0, 1, 1], [], []>} : vector<2x32xf32>, vector<32x128xf32>, vector<2x128xf32> -> vector<2x128xf32>
    %216 = arith.addf %214, %215 : vector<2x128xf32>
    %217 = vector.extract_strided_slice %216 {offsets = [0, 0], sizes = [2, 32], strides = [1, 1]} : vector<2x128xf32> to vector<2x32xf32>
    %218 = arith.negf %217 : vector<2x32xf32>
    %219 = math.exp %218 : vector<2x32xf32>
    %cst_47 = arith.constant 1.000000e+00 : f32
    %220 = vector.broadcast %cst_47 : f32 to vector<2x32xf32>
    %221 = arith.addf %220, %219 : vector<2x32xf32>
    %222 = arith.divf %220, %221 : vector<2x32xf32>
    %223 = vector.extract_strided_slice %216 {offsets = [0, 32], sizes = [2, 32], strides = [1, 1]} : vector<2x128xf32> to vector<2x32xf32>
    %224 = arith.negf %223 : vector<2x32xf32>
    %225 = math.exp %224 : vector<2x32xf32>
    %cst_48 = arith.constant 1.000000e+00 : f32
    %226 = vector.broadcast %cst_48 : f32 to vector<2x32xf32>
    %227 = arith.addf %226, %225 : vector<2x32xf32>
    %228 = arith.divf %226, %227 : vector<2x32xf32>
    %229 = vector.extract_strided_slice %216 {offsets = [0, 64], sizes = [2, 32], strides = [1, 1]} : vector<2x128xf32> to vector<2x32xf32>
    %230 = math.tanh %229 : vector<2x32xf32>
    %231 = vector.extract_strided_slice %216 {offsets = [0, 96], sizes = [2, 32], strides = [1, 1]} : vector<2x128xf32> to vector<2x32xf32>
    %232 = arith.negf %231 : vector<2x32xf32>
    %233 = math.exp %232 : vector<2x32xf32>
    %cst_49 = arith.constant 1.000000e+00 : f32
    %234 = vector.broadcast %cst_49 : f32 to vector<2x32xf32>
    %235 = arith.addf %234, %233 : vector<2x32xf32>
    %236 = arith.divf %234, %235 : vector<2x32xf32>
    %237 = arith.mulf %228, %181 : vector<2x32xf32>
    %238 = arith.mulf %222, %230 : vector<2x32xf32>
    %239 = arith.addf %237, %238 : vector<2x32xf32>
    %240 = math.tanh %239 : vector<2x32xf32>
    %241 = arith.mulf %236, %240 : vector<2x32xf32>
    %c6 = arith.constant 6 : index
    %c0_50 = arith.constant 0 : index
    %242 = vector.load %arg10[%c6, %c0_50] : memref<16x64xf32, #tpu.memory_space<vmem>>, vector<2x32xf32>
    tpu.vector_store %arg10[%c6, %c0_50], %213 {strides = array<i32>} : memref<16x64xf32, #tpu.memory_space<vmem>>, vector<2x32xf32>,
    %c8 = arith.constant 8 : index
    %c32_51 = arith.constant 32 : index
    %243 = vector.load %arg10[%c8, %c32_51] : memref<16x64xf32, #tpu.memory_space<vmem>>, vector<2x32xf32>
    tpu.vector_store %arg10[%c8, %c32_51], %241 {strides = array<i32>} : memref<16x64xf32, #tpu.memory_space<vmem>>, vector<2x32xf32>,
    %244 = vector.extract_strided_slice %5 {offsets = [8, 0], sizes = [2, 128], strides = [1, 1]} : vector<16x256xf32> to vector<2x128xf32>
    %cst_52 = arith.constant dense<0.000000e+00> : vector<2x128xf32>
    %245 = tpu.matmul %213, %6, %cst_52 {dimension_numbers = #tpu.dot_dimension_numbers<[1], [0], [0], [1], [0, 0, 1, 1], [], []>} : vector<2x32xf32>, vector<32x128xf32>, vector<2x128xf32> -> vector<2x128xf32>
    %246 = arith.addf %244, %245 : vector<2x128xf32>
    %247 = vector.extract_strided_slice %246 {offsets = [0, 0], sizes = [2, 32], strides = [1, 1]} : vector<2x128xf32> to vector<2x32xf32>
    %248 = arith.negf %247 : vector<2x32xf32>
    %249 = math.exp %248 : vector<2x32xf32>
    %cst_53 = arith.constant 1.000000e+00 : f32
    %250 = vector.broadcast %cst_53 : f32 to vector<2x32xf32>
    %251 = arith.addf %250, %249 : vector<2x32xf32>
    %252 = arith.divf %250, %251 : vector<2x32xf32>
    %253 = vector.extract_strided_slice %246 {offsets = [0, 32], sizes = [2, 32], strides = [1, 1]} : vector<2x128xf32> to vector<2x32xf32>
    %254 = arith.negf %253 : vector<2x32xf32>
    %255 = math.exp %254 : vector<2x32xf32>
    %cst_54 = arith.constant 1.000000e+00 : f32
    %256 = vector.broadcast %cst_54 : f32 to vector<2x32xf32>
    %257 = arith.addf %256, %255 : vector<2x32xf32>
    %258 = arith.divf %256, %257 : vector<2x32xf32>
    %259 = vector.extract_strided_slice %246 {offsets = [0, 64], sizes = [2, 32], strides = [1, 1]} : vector<2x128xf32> to vector<2x32xf32>
    %260 = math.tanh %259 : vector<2x32xf32>
    %261 = vector.extract_strided_slice %246 {offsets = [0, 96], sizes = [2, 32], strides = [1, 1]} : vector<2x128xf32> to vector<2x32xf32>
    %262 = arith.negf %261 : vector<2x32xf32>
    %263 = math.exp %262 : vector<2x32xf32>
    %cst_55 = arith.constant 1.000000e+00 : f32
    %264 = vector.broadcast %cst_55 : f32 to vector<2x32xf32>
    %265 = arith.addf %264, %263 : vector<2x32xf32>
    %266 = arith.divf %264, %265 : vector<2x32xf32>
    %267 = arith.mulf %258, %211 : vector<2x32xf32>
    %268 = arith.mulf %252, %260 : vector<2x32xf32>
    %269 = arith.addf %267, %268 : vector<2x32xf32>
    %270 = math.tanh %269 : vector<2x32xf32>
    %271 = arith.mulf %266, %270 : vector<2x32xf32>
    %272 = vector.extract_strided_slice %5 {offsets = [6, 128], sizes = [2, 128], strides = [1, 1]} : vector<16x256xf32> to vector<2x128xf32>
    %cst_56 = arith.constant dense<0.000000e+00> : vector<2x128xf32>
    %273 = tpu.matmul %241, %7, %cst_56 {dimension_numbers = #tpu.dot_dimension_numbers<[1], [0], [0], [1], [0, 0, 1, 1], [], []>} : vector<2x32xf32>, vector<32x128xf32>, vector<2x128xf32> -> vector<2x128xf32>
    %274 = arith.addf %272, %273 : vector<2x128xf32>
    %275 = vector.extract_strided_slice %274 {offsets = [0, 0], sizes = [2, 32], strides = [1, 1]} : vector<2x128xf32> to vector<2x32xf32>
    %276 = arith.negf %275 : vector<2x32xf32>
    %277 = math.exp %276 : vector<2x32xf32>
    %cst_57 = arith.constant 1.000000e+00 : f32
    %278 = vector.broadcast %cst_57 : f32 to vector<2x32xf32>
    %279 = arith.addf %278, %277 : vector<2x32xf32>
    %280 = arith.divf %278, %279 : vector<2x32xf32>
    %281 = vector.extract_strided_slice %274 {offsets = [0, 32], sizes = [2, 32], strides = [1, 1]} : vector<2x128xf32> to vector<2x32xf32>
    %282 = arith.negf %281 : vector<2x32xf32>
    %283 = math.exp %282 : vector<2x32xf32>
    %cst_58 = arith.constant 1.000000e+00 : f32
    %284 = vector.broadcast %cst_58 : f32 to vector<2x32xf32>
    %285 = arith.addf %284, %283 : vector<2x32xf32>
    %286 = arith.divf %284, %285 : vector<2x32xf32>
    %287 = vector.extract_strided_slice %274 {offsets = [0, 64], sizes = [2, 32], strides = [1, 1]} : vector<2x128xf32> to vector<2x32xf32>
    %288 = math.tanh %287 : vector<2x32xf32>
    %289 = vector.extract_strided_slice %274 {offsets = [0, 96], sizes = [2, 32], strides = [1, 1]} : vector<2x128xf32> to vector<2x32xf32>
    %290 = arith.negf %289 : vector<2x32xf32>
    %291 = math.exp %290 : vector<2x32xf32>
    %cst_59 = arith.constant 1.000000e+00 : f32
    %292 = vector.broadcast %cst_59 : f32 to vector<2x32xf32>
    %293 = arith.addf %292, %291 : vector<2x32xf32>
    %294 = arith.divf %292, %293 : vector<2x32xf32>
    %295 = arith.mulf %286, %239 : vector<2x32xf32>
    %296 = arith.mulf %280, %288 : vector<2x32xf32>
    %297 = arith.addf %295, %296 : vector<2x32xf32>
    %298 = math.tanh %297 : vector<2x32xf32>
    %299 = arith.mulf %294, %298 : vector<2x32xf32>
    %c8_60 = arith.constant 8 : index
    %c0_61 = arith.constant 0 : index
    %300 = vector.load %arg10[%c8_60, %c0_61] : memref<16x64xf32, #tpu.memory_space<vmem>>, vector<2x32xf32>
    tpu.vector_store %arg10[%c8_60, %c0_61], %271 {strides = array<i32>} : memref<16x64xf32, #tpu.memory_space<vmem>>, vector<2x32xf32>,
    %c6_62 = arith.constant 6 : index
    %c32_63 = arith.constant 32 : index
    %301 = vector.load %arg10[%c6_62, %c32_63] : memref<16x64xf32, #tpu.memory_space<vmem>>, vector<2x32xf32>
    tpu.vector_store %arg10[%c6_62, %c32_63], %299 {strides = array<i32>} : memref<16x64xf32, #tpu.memory_space<vmem>>, vector<2x32xf32>,
    %302 = vector.extract_strided_slice %5 {offsets = [10, 0], sizes = [2, 128], strides = [1, 1]} : vector<16x256xf32> to vector<2x128xf32>
    %cst_64 = arith.constant dense<0.000000e+00> : vector<2x128xf32>
    %303 = tpu.matmul %271, %6, %cst_64 {dimension_numbers = #tpu.dot_dimension_numbers<[1], [0], [0], [1], [0, 0, 1, 1], [], []>} : vector<2x32xf32>, vector<32x128xf32>, vector<2x128xf32> -> vector<2x128xf32>
    %304 = arith.addf %302, %303 : vector<2x128xf32>
    %305 = vector.extract_strided_slice %304 {offsets = [0, 0], sizes = [2, 32], strides = [1, 1]} : vector<2x128xf32> to vector<2x32xf32>
    %306 = arith.negf %305 : vector<2x32xf32>
    %307 = math.exp %306 : vector<2x32xf32>
    %cst_65 = arith.constant 1.000000e+00 : f32
    %308 = vector.broadcast %cst_65 : f32 to vector<2x32xf32>
    %309 = arith.addf %308, %307 : vector<2x32xf32>
    %310 = arith.divf %308, %309 : vector<2x32xf32>
    %311 = vector.extract_strided_slice %304 {offsets = [0, 32], sizes = [2, 32], strides = [1, 1]} : vector<2x128xf32> to vector<2x32xf32>
    %312 = arith.negf %311 : vector<2x32xf32>
    %313 = math.exp %312 : vector<2x32xf32>
    %cst_66 = arith.constant 1.000000e+00 : f32
    %314 = vector.broadcast %cst_66 : f32 to vector<2x32xf32>
    %315 = arith.addf %314, %313 : vector<2x32xf32>
    %316 = arith.divf %314, %315 : vector<2x32xf32>
    %317 = vector.extract_strided_slice %304 {offsets = [0, 64], sizes = [2, 32], strides = [1, 1]} : vector<2x128xf32> to vector<2x32xf32>
    %318 = math.tanh %317 : vector<2x32xf32>
    %319 = vector.extract_strided_slice %304 {offsets = [0, 96], sizes = [2, 32], strides = [1, 1]} : vector<2x128xf32> to vector<2x32xf32>
    %320 = arith.negf %319 : vector<2x32xf32>
    %321 = math.exp %320 : vector<2x32xf32>
    %cst_67 = arith.constant 1.000000e+00 : f32
    %322 = vector.broadcast %cst_67 : f32 to vector<2x32xf32>
    %323 = arith.addf %322, %321 : vector<2x32xf32>
    %324 = arith.divf %322, %323 : vector<2x32xf32>
    %325 = arith.mulf %316, %269 : vector<2x32xf32>
    %326 = arith.mulf %310, %318 : vector<2x32xf32>
    %327 = arith.addf %325, %326 : vector<2x32xf32>
    %328 = math.tanh %327 : vector<2x32xf32>
    %329 = arith.mulf %324, %328 : vector<2x32xf32>
    %330 = vector.extract_strided_slice %5 {offsets = [4, 128], sizes = [2, 128], strides = [1, 1]} : vector<16x256xf32> to vector<2x128xf32>
    %cst_68 = arith.constant dense<0.000000e+00> : vector<2x128xf32>
    %331 = tpu.matmul %299, %7, %cst_68 {dimension_numbers = #tpu.dot_dimension_numbers<[1], [0], [0], [1], [0, 0, 1, 1], [], []>} : vector<2x32xf32>, vector<32x128xf32>, vector<2x128xf32> -> vector<2x128xf32>
    %332 = arith.addf %330, %331 : vector<2x128xf32>
    %333 = vector.extract_strided_slice %332 {offsets = [0, 0], sizes = [2, 32], strides = [1, 1]} : vector<2x128xf32> to vector<2x32xf32>
    %334 = arith.negf %333 : vector<2x32xf32>
    %335 = math.exp %334 : vector<2x32xf32>
    %cst_69 = arith.constant 1.000000e+00 : f32
    %336 = vector.broadcast %cst_69 : f32 to vector<2x32xf32>
    %337 = arith.addf %336, %335 : vector<2x32xf32>
    %338 = arith.divf %336, %337 : vector<2x32xf32>
    %339 = vector.extract_strided_slice %332 {offsets = [0, 32], sizes = [2, 32], strides = [1, 1]} : vector<2x128xf32> to vector<2x32xf32>
    %340 = arith.negf %339 : vector<2x32xf32>
    %341 = math.exp %340 : vector<2x32xf32>
    %cst_70 = arith.constant 1.000000e+00 : f32
    %342 = vector.broadcast %cst_70 : f32 to vector<2x32xf32>
    %343 = arith.addf %342, %341 : vector<2x32xf32>
    %344 = arith.divf %342, %343 : vector<2x32xf32>
    %345 = vector.extract_strided_slice %332 {offsets = [0, 64], sizes = [2, 32], strides = [1, 1]} : vector<2x128xf32> to vector<2x32xf32>
    %346 = math.tanh %345 : vector<2x32xf32>
    %347 = vector.extract_strided_slice %332 {offsets = [0, 96], sizes = [2, 32], strides = [1, 1]} : vector<2x128xf32> to vector<2x32xf32>
    %348 = arith.negf %347 : vector<2x32xf32>
    %349 = math.exp %348 : vector<2x32xf32>
    %cst_71 = arith.constant 1.000000e+00 : f32
    %350 = vector.broadcast %cst_71 : f32 to vector<2x32xf32>
    %351 = arith.addf %350, %349 : vector<2x32xf32>
    %352 = arith.divf %350, %351 : vector<2x32xf32>
    %353 = arith.mulf %344, %297 : vector<2x32xf32>
    %354 = arith.mulf %338, %346 : vector<2x32xf32>
    %355 = arith.addf %353, %354 : vector<2x32xf32>
    %356 = math.tanh %355 : vector<2x32xf32>
    %357 = arith.mulf %352, %356 : vector<2x32xf32>
    %c10_72 = arith.constant 10 : index
    %c0_73 = arith.constant 0 : index
    %358 = vector.load %arg10[%c10_72, %c0_73] : memref<16x64xf32, #tpu.memory_space<vmem>>, vector<2x32xf32>
    tpu.vector_store %arg10[%c10_72, %c0_73], %329 {strides = array<i32>} : memref<16x64xf32, #tpu.memory_space<vmem>>, vector<2x32xf32>,
    %c4_74 = arith.constant 4 : index
    %c32_75 = arith.constant 32 : index
    %359 = vector.load %arg10[%c4_74, %c32_75] : memref<16x64xf32, #tpu.memory_space<vmem>>, vector<2x32xf32>
    tpu.vector_store %arg10[%c4_74, %c32_75], %357 {strides = array<i32>} : memref<16x64xf32, #tpu.memory_space<vmem>>, vector<2x32xf32>,
    %360 = vector.extract_strided_slice %5 {offsets = [12, 0], sizes = [2, 128], strides = [1, 1]} : vector<16x256xf32> to vector<2x128xf32>
    %cst_76 = arith.constant dense<0.000000e+00> : vector<2x128xf32>
    %361 = tpu.matmul %329, %6, %cst_76 {dimension_numbers = #tpu.dot_dimension_numbers<[1], [0], [0], [1], [0, 0, 1, 1], [], []>} : vector<2x32xf32>, vector<32x128xf32>, vector<2x128xf32> -> vector<2x128xf32>
    %362 = arith.addf %360, %361 : vector<2x128xf32>
    %363 = vector.extract_strided_slice %362 {offsets = [0, 0], sizes = [2, 32], strides = [1, 1]} : vector<2x128xf32> to vector<2x32xf32>
    %364 = arith.negf %363 : vector<2x32xf32>
    %365 = math.exp %364 : vector<2x32xf32>
    %cst_77 = arith.constant 1.000000e+00 : f32
    %366 = vector.broadcast %cst_77 : f32 to vector<2x32xf32>
    %367 = arith.addf %366, %365 : vector<2x32xf32>
    %368 = arith.divf %366, %367 : vector<2x32xf32>
    %369 = vector.extract_strided_slice %362 {offsets = [0, 32], sizes = [2, 32], strides = [1, 1]} : vector<2x128xf32> to vector<2x32xf32>
    %370 = arith.negf %369 : vector<2x32xf32>
    %371 = math.exp %370 : vector<2x32xf32>
    %cst_78 = arith.constant 1.000000e+00 : f32
    %372 = vector.broadcast %cst_78 : f32 to vector<2x32xf32>
    %373 = arith.addf %372, %371 : vector<2x32xf32>
    %374 = arith.divf %372, %373 : vector<2x32xf32>
    %375 = vector.extract_strided_slice %362 {offsets = [0, 64], sizes = [2, 32], strides = [1, 1]} : vector<2x128xf32> to vector<2x32xf32>
    %376 = math.tanh %375 : vector<2x32xf32>
    %377 = vector.extract_strided_slice %362 {offsets = [0, 96], sizes = [2, 32], strides = [1, 1]} : vector<2x128xf32> to vector<2x32xf32>
    %378 = arith.negf %377 : vector<2x32xf32>
    %379 = math.exp %378 : vector<2x32xf32>
    %cst_79 = arith.constant 1.000000e+00 : f32
    %380 = vector.broadcast %cst_79 : f32 to vector<2x32xf32>
    %381 = arith.addf %380, %379 : vector<2x32xf32>
    %382 = arith.divf %380, %381 : vector<2x32xf32>
    %383 = arith.mulf %374, %327 : vector<2x32xf32>
    %384 = arith.mulf %368, %376 : vector<2x32xf32>
    %385 = arith.addf %383, %384 : vector<2x32xf32>
    %386 = math.tanh %385 : vector<2x32xf32>
    %387 = arith.mulf %382, %386 : vector<2x32xf32>
    %388 = vector.extract_strided_slice %5 {offsets = [2, 128], sizes = [2, 128], strides = [1, 1]} : vector<16x256xf32> to vector<2x128xf32>
    %cst_80 = arith.constant dense<0.000000e+00> : vector<2x128xf32>
    %389 = tpu.matmul %357, %7, %cst_80 {dimension_numbers = #tpu.dot_dimension_numbers<[1], [0], [0], [1], [0, 0, 1, 1], [], []>} : vector<2x32xf32>, vector<32x128xf32>, vector<2x128xf32> -> vector<2x128xf32>
    %390 = arith.addf %388, %389 : vector<2x128xf32>
    %391 = vector.extract_strided_slice %390 {offsets = [0, 0], sizes = [2, 32], strides = [1, 1]} : vector<2x128xf32> to vector<2x32xf32>
    %392 = arith.negf %391 : vector<2x32xf32>
    %393 = math.exp %392 : vector<2x32xf32>
    %cst_81 = arith.constant 1.000000e+00 : f32
    %394 = vector.broadcast %cst_81 : f32 to vector<2x32xf32>
    %395 = arith.addf %394, %393 : vector<2x32xf32>
    %396 = arith.divf %394, %395 : vector<2x32xf32>
    %397 = vector.extract_strided_slice %390 {offsets = [0, 32], sizes = [2, 32], strides = [1, 1]} : vector<2x128xf32> to vector<2x32xf32>
    %398 = arith.negf %397 : vector<2x32xf32>
    %399 = math.exp %398 : vector<2x32xf32>
    %cst_82 = arith.constant 1.000000e+00 : f32
    %400 = vector.broadcast %cst_82 : f32 to vector<2x32xf32>
    %401 = arith.addf %400, %399 : vector<2x32xf32>
    %402 = arith.divf %400, %401 : vector<2x32xf32>
    %403 = vector.extract_strided_slice %390 {offsets = [0, 64], sizes = [2, 32], strides = [1, 1]} : vector<2x128xf32> to vector<2x32xf32>
    %404 = math.tanh %403 : vector<2x32xf32>
    %405 = vector.extract_strided_slice %390 {offsets = [0, 96], sizes = [2, 32], strides = [1, 1]} : vector<2x128xf32> to vector<2x32xf32>
    %406 = arith.negf %405 : vector<2x32xf32>
    %407 = math.exp %406 : vector<2x32xf32>
    %cst_83 = arith.constant 1.000000e+00 : f32
    %408 = vector.broadcast %cst_83 : f32 to vector<2x32xf32>
    %409 = arith.addf %408, %407 : vector<2x32xf32>
    %410 = arith.divf %408, %409 : vector<2x32xf32>
    %411 = arith.mulf %402, %355 : vector<2x32xf32>
    %412 = arith.mulf %396, %404 : vector<2x32xf32>
    %413 = arith.addf %411, %412 : vector<2x32xf32>
    %414 = math.tanh %413 : vector<2x32xf32>
    %415 = arith.mulf %410, %414 : vector<2x32xf32>
    %c12_84 = arith.constant 12 : index
    %c0_85 = arith.constant 0 : index
    %416 = vector.load %arg10[%c12_84, %c0_85] : memref<16x64xf32, #tpu.memory_space<vmem>>, vector<2x32xf32>
    tpu.vector_store %arg10[%c12_84, %c0_85], %387 {strides = array<i32>} : memref<16x64xf32, #tpu.memory_space<vmem>>, vector<2x32xf32>,
    %c2_86 = arith.constant 2 : index
    %c32_87 = arith.constant 32 : index
    %417 = vector.load %arg10[%c2_86, %c32_87] : memref<16x64xf32, #tpu.memory_space<vmem>>, vector<2x32xf32>
    tpu.vector_store %arg10[%c2_86, %c32_87], %415 {strides = array<i32>} : memref<16x64xf32, #tpu.memory_space<vmem>>, vector<2x32xf32>,
    %418 = vector.extract_strided_slice %5 {offsets = [14, 0], sizes = [2, 128], strides = [1, 1]} : vector<16x256xf32> to vector<2x128xf32>
    %cst_88 = arith.constant dense<0.000000e+00> : vector<2x128xf32>
    %419 = tpu.matmul %387, %6, %cst_88 {dimension_numbers = #tpu.dot_dimension_numbers<[1], [0], [0], [1], [0, 0, 1, 1], [], []>} : vector<2x32xf32>, vector<32x128xf32>, vector<2x128xf32> -> vector<2x128xf32>
    %420 = arith.addf %418, %419 : vector<2x128xf32>
    %421 = vector.extract_strided_slice %420 {offsets = [0, 0], sizes = [2, 32], strides = [1, 1]} : vector<2x128xf32> to vector<2x32xf32>
    %422 = arith.negf %421 : vector<2x32xf32>
    %423 = math.exp %422 : vector<2x32xf32>
    %cst_89 = arith.constant 1.000000e+00 : f32
    %424 = vector.broadcast %cst_89 : f32 to vector<2x32xf32>
    %425 = arith.addf %424, %423 : vector<2x32xf32>
    %426 = arith.divf %424, %425 : vector<2x32xf32>
    %427 = vector.extract_strided_slice %420 {offsets = [0, 32], sizes = [2, 32], strides = [1, 1]} : vector<2x128xf32> to vector<2x32xf32>
    %428 = arith.negf %427 : vector<2x32xf32>
    %429 = math.exp %428 : vector<2x32xf32>
    %cst_90 = arith.constant 1.000000e+00 : f32
    %430 = vector.broadcast %cst_90 : f32 to vector<2x32xf32>
    %431 = arith.addf %430, %429 : vector<2x32xf32>
    %432 = arith.divf %430, %431 : vector<2x32xf32>
    %433 = vector.extract_strided_slice %420 {offsets = [0, 64], sizes = [2, 32], strides = [1, 1]} : vector<2x128xf32> to vector<2x32xf32>
    %434 = math.tanh %433 : vector<2x32xf32>
    %435 = vector.extract_strided_slice %420 {offsets = [0, 96], sizes = [2, 32], strides = [1, 1]} : vector<2x128xf32> to vector<2x32xf32>
    %436 = arith.negf %435 : vector<2x32xf32>
    %437 = math.exp %436 : vector<2x32xf32>
    %cst_91 = arith.constant 1.000000e+00 : f32
    %438 = vector.broadcast %cst_91 : f32 to vector<2x32xf32>
    %439 = arith.addf %438, %437 : vector<2x32xf32>
    %440 = arith.divf %438, %439 : vector<2x32xf32>
    %441 = arith.mulf %432, %385 : vector<2x32xf32>
    %442 = arith.mulf %426, %434 : vector<2x32xf32>
    %443 = arith.addf %441, %442 : vector<2x32xf32>
    %444 = math.tanh %443 : vector<2x32xf32>
    %445 = arith.mulf %440, %444 : vector<2x32xf32>
    %446 = vector.extract_strided_slice %5 {offsets = [0, 128], sizes = [2, 128], strides = [1, 1]} : vector<16x256xf32> to vector<2x128xf32>
    %cst_92 = arith.constant dense<0.000000e+00> : vector<2x128xf32>
    %447 = tpu.matmul %415, %7, %cst_92 {dimension_numbers = #tpu.dot_dimension_numbers<[1], [0], [0], [1], [0, 0, 1, 1], [], []>} : vector<2x32xf32>, vector<32x128xf32>, vector<2x128xf32> -> vector<2x128xf32>
    %448 = arith.addf %446, %447 : vector<2x128xf32>
    %449 = vector.extract_strided_slice %448 {offsets = [0, 0], sizes = [2, 32], strides = [1, 1]} : vector<2x128xf32> to vector<2x32xf32>
    %450 = arith.negf %449 : vector<2x32xf32>
    %451 = math.exp %450 : vector<2x32xf32>
    %cst_93 = arith.constant 1.000000e+00 : f32
    %452 = vector.broadcast %cst_93 : f32 to vector<2x32xf32>
    %453 = arith.addf %452, %451 : vector<2x32xf32>
    %454 = arith.divf %452, %453 : vector<2x32xf32>
    %455 = vector.extract_strided_slice %448 {offsets = [0, 32], sizes = [2, 32], strides = [1, 1]} : vector<2x128xf32> to vector<2x32xf32>
    %456 = arith.negf %455 : vector<2x32xf32>
    %457 = math.exp %456 : vector<2x32xf32>
    %cst_94 = arith.constant 1.000000e+00 : f32
    %458 = vector.broadcast %cst_94 : f32 to vector<2x32xf32>
    %459 = arith.addf %458, %457 : vector<2x32xf32>
    %460 = arith.divf %458, %459 : vector<2x32xf32>
    %461 = vector.extract_strided_slice %448 {offsets = [0, 64], sizes = [2, 32], strides = [1, 1]} : vector<2x128xf32> to vector<2x32xf32>
    %462 = math.tanh %461 : vector<2x32xf32>
    %463 = vector.extract_strided_slice %448 {offsets = [0, 96], sizes = [2, 32], strides = [1, 1]} : vector<2x128xf32> to vector<2x32xf32>
    %464 = arith.negf %463 : vector<2x32xf32>
    %465 = math.exp %464 : vector<2x32xf32>
    %cst_95 = arith.constant 1.000000e+00 : f32
    %466 = vector.broadcast %cst_95 : f32 to vector<2x32xf32>
    %467 = arith.addf %466, %465 : vector<2x32xf32>
    %468 = arith.divf %466, %467 : vector<2x32xf32>
    %469 = arith.mulf %460, %413 : vector<2x32xf32>
    %470 = arith.mulf %454, %462 : vector<2x32xf32>
    %471 = arith.addf %469, %470 : vector<2x32xf32>
    %472 = math.tanh %471 : vector<2x32xf32>
    %473 = arith.mulf %468, %472 : vector<2x32xf32>
    %c14_96 = arith.constant 14 : index
    %c0_97 = arith.constant 0 : index
    %474 = vector.load %arg10[%c14_96, %c0_97] : memref<16x64xf32, #tpu.memory_space<vmem>>, vector<2x32xf32>
    tpu.vector_store %arg10[%c14_96, %c0_97], %445 {strides = array<i32>} : memref<16x64xf32, #tpu.memory_space<vmem>>, vector<2x32xf32>,
    %c0_98 = arith.constant 0 : index
    %c32_99 = arith.constant 32 : index
    %475 = vector.load %arg10[%c0_98, %c32_99] : memref<16x64xf32, #tpu.memory_space<vmem>>, vector<2x32xf32>
    tpu.vector_store %arg10[%c0_98, %c32_99], %473 {strides = array<i32>} : memref<16x64xf32, #tpu.memory_space<vmem>>, vector<2x32xf32>,
    %c0_100 = arith.constant 0 : index
    %c0_101 = arith.constant 0 : index
    %476 = vector.load %arg10[%c0_100, %c0_101] : memref<16x64xf32, #tpu.memory_space<vmem>>, vector<16x64xf32>
    %c0_102 = arith.constant 0 : index
    %c0_103 = arith.constant 0 : index
    %477 = vector.load %arg4[%c0_102, %c0_103] : memref<64x256xf32, #tpu.memory_space<vmem>>, vector<64x256xf32>
    %cst_104 = arith.constant dense<0.000000e+00> : vector<16x256xf32>
    %478 = tpu.matmul %476, %477, %cst_104 {dimension_numbers = #tpu.dot_dimension_numbers<[1], [0], [0], [1], [0, 0, 1, 1], [], []>} : vector<16x64xf32>, vector<64x256xf32>, vector<16x256xf32> -> vector<16x256xf32>
    %c0_105 = arith.constant 0 : index
    %c0_106 = arith.constant 0 : index
    %479 = vector.load %arg6[%c0_105, %c0_106] : memref<1x256xf32, #tpu.memory_space<vmem>>, vector<1x256xf32>
    %480 = vector.broadcast %479 : vector<1x256xf32> to vector<16x256xf32>
    %481 = arith.addf %478, %480 : vector<16x256xf32>
    %c0_107 = arith.constant 0 : index
    %c0_108 = arith.constant 0 : index
    %482 = vector.load %arg5[%c0_107, %c0_108] : memref<32x256xf32, #tpu.memory_space<vmem>>, vector<32x128xf32>
    %c0_109 = arith.constant 0 : index
    %c128_110 = arith.constant 128 : index
    %483 = vector.load %arg5[%c0_109, %c128_110] : memref<32x256xf32, #tpu.memory_space<vmem>>, vector<32x128xf32>
    %cst_111 = arith.constant 0.000000e+00 : f32
    %484 = vector.broadcast %cst_111 : f32 to vector<2x32xf32>
    %cst_112 = arith.constant 0.000000e+00 : f32
    %485 = vector.broadcast %cst_112 : f32 to vector<2x32xf32>
    %cst_113 = arith.constant 0.000000e+00 : f32
    %486 = vector.broadcast %cst_113 : f32 to vector<2x32xf32>
    %cst_114 = arith.constant 0.000000e+00 : f32
    %487 = vector.broadcast %cst_114 : f32 to vector<2x32xf32>
    %488 = vector.extract_strided_slice %481 {offsets = [0, 0], sizes = [2, 128], strides = [1, 1]} : vector<16x256xf32> to vector<2x128xf32>
    %cst_115 = arith.constant dense<0.000000e+00> : vector<2x128xf32>
    %489 = tpu.matmul %484, %482, %cst_115 {dimension_numbers = #tpu.dot_dimension_numbers<[1], [0], [0], [1], [0, 0, 1, 1], [], []>} : vector<2x32xf32>, vector<32x128xf32>, vector<2x128xf32> -> vector<2x128xf32>
    %490 = arith.addf %488, %489 : vector<2x128xf32>
    %491 = vector.extract_strided_slice %490 {offsets = [0, 0], sizes = [2, 32], strides = [1, 1]} : vector<2x128xf32> to vector<2x32xf32>
    %492 = arith.negf %491 : vector<2x32xf32>
    %493 = math.exp %492 : vector<2x32xf32>
    %cst_116 = arith.constant 1.000000e+00 : f32
    %494 = vector.broadcast %cst_116 : f32 to vector<2x32xf32>
    %495 = arith.addf %494, %493 : vector<2x32xf32>
    %496 = arith.divf %494, %495 : vector<2x32xf32>
    %497 = vector.extract_strided_slice %490 {offsets = [0, 32], sizes = [2, 32], strides = [1, 1]} : vector<2x128xf32> to vector<2x32xf32>
    %498 = arith.negf %497 : vector<2x32xf32>
    %499 = math.exp %498 : vector<2x32xf32>
    %cst_117 = arith.constant 1.000000e+00 : f32
    %500 = vector.broadcast %cst_117 : f32 to vector<2x32xf32>
    %501 = arith.addf %500, %499 : vector<2x32xf32>
    %502 = arith.divf %500, %501 : vector<2x32xf32>
    %503 = vector.extract_strided_slice %490 {offsets = [0, 64], sizes = [2, 32], strides = [1, 1]} : vector<2x128xf32> to vector<2x32xf32>
    %504 = math.tanh %503 : vector<2x32xf32>
    %505 = vector.extract_strided_slice %490 {offsets = [0, 96], sizes = [2, 32], strides = [1, 1]} : vector<2x128xf32> to vector<2x32xf32>
    %506 = arith.negf %505 : vector<2x32xf32>
    %507 = math.exp %506 : vector<2x32xf32>
    %cst_118 = arith.constant 1.000000e+00 : f32
    %508 = vector.broadcast %cst_118 : f32 to vector<2x32xf32>
    %509 = arith.addf %508, %507 : vector<2x32xf32>
    %510 = arith.divf %508, %509 : vector<2x32xf32>
    %511 = arith.mulf %502, %485 : vector<2x32xf32>
    %512 = arith.mulf %496, %504 : vector<2x32xf32>
    %513 = arith.addf %511, %512 : vector<2x32xf32>
    %514 = math.tanh %513 : vector<2x32xf32>
    %515 = arith.mulf %510, %514 : vector<2x32xf32>
    %516 = vector.extract_strided_slice %481 {offsets = [14, 128], sizes = [2, 128], strides = [1, 1]} : vector<16x256xf32> to vector<2x128xf32>
    %cst_119 = arith.constant dense<0.000000e+00> : vector<2x128xf32>
    %517 = tpu.matmul %486, %483, %cst_119 {dimension_numbers = #tpu.dot_dimension_numbers<[1], [0], [0], [1], [0, 0, 1, 1], [], []>} : vector<2x32xf32>, vector<32x128xf32>, vector<2x128xf32> -> vector<2x128xf32>
    %518 = arith.addf %516, %517 : vector<2x128xf32>
    %519 = vector.extract_strided_slice %518 {offsets = [0, 0], sizes = [2, 32], strides = [1, 1]} : vector<2x128xf32> to vector<2x32xf32>
    %520 = arith.negf %519 : vector<2x32xf32>
    %521 = math.exp %520 : vector<2x32xf32>
    %cst_120 = arith.constant 1.000000e+00 : f32
    %522 = vector.broadcast %cst_120 : f32 to vector<2x32xf32>
    %523 = arith.addf %522, %521 : vector<2x32xf32>
    %524 = arith.divf %522, %523 : vector<2x32xf32>
    %525 = vector.extract_strided_slice %518 {offsets = [0, 32], sizes = [2, 32], strides = [1, 1]} : vector<2x128xf32> to vector<2x32xf32>
    %526 = arith.negf %525 : vector<2x32xf32>
    %527 = math.exp %526 : vector<2x32xf32>
    %cst_121 = arith.constant 1.000000e+00 : f32
    %528 = vector.broadcast %cst_121 : f32 to vector<2x32xf32>
    %529 = arith.addf %528, %527 : vector<2x32xf32>
    %530 = arith.divf %528, %529 : vector<2x32xf32>
    %531 = vector.extract_strided_slice %518 {offsets = [0, 64], sizes = [2, 32], strides = [1, 1]} : vector<2x128xf32> to vector<2x32xf32>
    %532 = math.tanh %531 : vector<2x32xf32>
    %533 = vector.extract_strided_slice %518 {offsets = [0, 96], sizes = [2, 32], strides = [1, 1]} : vector<2x128xf32> to vector<2x32xf32>
    %534 = arith.negf %533 : vector<2x32xf32>
    %535 = math.exp %534 : vector<2x32xf32>
    %cst_122 = arith.constant 1.000000e+00 : f32
    %536 = vector.broadcast %cst_122 : f32 to vector<2x32xf32>
    %537 = arith.addf %536, %535 : vector<2x32xf32>
    %538 = arith.divf %536, %537 : vector<2x32xf32>
    %539 = arith.mulf %530, %487 : vector<2x32xf32>
    %540 = arith.mulf %524, %532 : vector<2x32xf32>
    %541 = arith.addf %539, %540 : vector<2x32xf32>
    %542 = math.tanh %541 : vector<2x32xf32>
    %543 = arith.mulf %538, %542 : vector<2x32xf32>
    %c0_123 = arith.constant 0 : index
    %c0_124 = arith.constant 0 : index
    %544 = vector.load %arg10[%c0_123, %c0_124] : memref<16x64xf32, #tpu.memory_space<vmem>>, vector<2x32xf32>
    tpu.vector_store %arg10[%c0_123, %c0_124], %515 {strides = array<i32>} : memref<16x64xf32, #tpu.memory_space<vmem>>, vector<2x32xf32>,
    %c14_125 = arith.constant 14 : index
    %c32_126 = arith.constant 32 : index
    %545 = vector.load %arg10[%c14_125, %c32_126] : memref<16x64xf32, #tpu.memory_space<vmem>>, vector<2x32xf32>
    tpu.vector_store %arg10[%c14_125, %c32_126], %543 {strides = array<i32>} : memref<16x64xf32, #tpu.memory_space<vmem>>, vector<2x32xf32>,
    %546 = vector.extract_strided_slice %481 {offsets = [2, 0], sizes = [2, 128], strides = [1, 1]} : vector<16x256xf32> to vector<2x128xf32>
    %cst_127 = arith.constant dense<0.000000e+00> : vector<2x128xf32>
    %547 = tpu.matmul %515, %482, %cst_127 {dimension_numbers = #tpu.dot_dimension_numbers<[1], [0], [0], [1], [0, 0, 1, 1], [], []>} : vector<2x32xf32>, vector<32x128xf32>, vector<2x128xf32> -> vector<2x128xf32>
    %548 = arith.addf %546, %547 : vector<2x128xf32>
    %549 = vector.extract_strided_slice %548 {offsets = [0, 0], sizes = [2, 32], strides = [1, 1]} : vector<2x128xf32> to vector<2x32xf32>
    %550 = arith.negf %549 : vector<2x32xf32>
    %551 = math.exp %550 : vector<2x32xf32>
    %cst_128 = arith.constant 1.000000e+00 : f32
    %552 = vector.broadcast %cst_128 : f32 to vector<2x32xf32>
    %553 = arith.addf %552, %551 : vector<2x32xf32>
    %554 = arith.divf %552, %553 : vector<2x32xf32>
    %555 = vector.extract_strided_slice %548 {offsets = [0, 32], sizes = [2, 32], strides = [1, 1]} : vector<2x128xf32> to vector<2x32xf32>
    %556 = arith.negf %555 : vector<2x32xf32>
    %557 = math.exp %556 : vector<2x32xf32>
    %cst_129 = arith.constant 1.000000e+00 : f32
    %558 = vector.broadcast %cst_129 : f32 to vector<2x32xf32>
    %559 = arith.addf %558, %557 : vector<2x32xf32>
    %560 = arith.divf %558, %559 : vector<2x32xf32>
    %561 = vector.extract_strided_slice %548 {offsets = [0, 64], sizes = [2, 32], strides = [1, 1]} : vector<2x128xf32> to vector<2x32xf32>
    %562 = math.tanh %561 : vector<2x32xf32>
    %563 = vector.extract_strided_slice %548 {offsets = [0, 96], sizes = [2, 32], strides = [1, 1]} : vector<2x128xf32> to vector<2x32xf32>
    %564 = arith.negf %563 : vector<2x32xf32>
    %565 = math.exp %564 : vector<2x32xf32>
    %cst_130 = arith.constant 1.000000e+00 : f32
    %566 = vector.broadcast %cst_130 : f32 to vector<2x32xf32>
    %567 = arith.addf %566, %565 : vector<2x32xf32>
    %568 = arith.divf %566, %567 : vector<2x32xf32>
    %569 = arith.mulf %560, %513 : vector<2x32xf32>
    %570 = arith.mulf %554, %562 : vector<2x32xf32>
    %571 = arith.addf %569, %570 : vector<2x32xf32>
    %572 = math.tanh %571 : vector<2x32xf32>
    %573 = arith.mulf %568, %572 : vector<2x32xf32>
    %574 = vector.extract_strided_slice %481 {offsets = [12, 128], sizes = [2, 128], strides = [1, 1]} : vector<16x256xf32> to vector<2x128xf32>
    %cst_131 = arith.constant dense<0.000000e+00> : vector<2x128xf32>
    %575 = tpu.matmul %543, %483, %cst_131 {dimension_numbers = #tpu.dot_dimension_numbers<[1], [0], [0], [1], [0, 0, 1, 1], [], []>} : vector<2x32xf32>, vector<32x128xf32>, vector<2x128xf32> -> vector<2x128xf32>
    %576 = arith.addf %574, %575 : vector<2x128xf32>
    %577 = vector.extract_strided_slice %576 {offsets = [0, 0], sizes = [2, 32], strides = [1, 1]} : vector<2x128xf32> to vector<2x32xf32>
    %578 = arith.negf %577 : vector<2x32xf32>
    %579 = math.exp %578 : vector<2x32xf32>
    %cst_132 = arith.constant 1.000000e+00 : f32
    %580 = vector.broadcast %cst_132 : f32 to vector<2x32xf32>
    %581 = arith.addf %580, %579 : vector<2x32xf32>
    %582 = arith.divf %580, %581 : vector<2x32xf32>
    %583 = vector.extract_strided_slice %576 {offsets = [0, 32], sizes = [2, 32], strides = [1, 1]} : vector<2x128xf32> to vector<2x32xf32>
    %584 = arith.negf %583 : vector<2x32xf32>
    %585 = math.exp %584 : vector<2x32xf32>
    %cst_133 = arith.constant 1.000000e+00 : f32
    %586 = vector.broadcast %cst_133 : f32 to vector<2x32xf32>
    %587 = arith.addf %586, %585 : vector<2x32xf32>
    %588 = arith.divf %586, %587 : vector<2x32xf32>
    %589 = vector.extract_strided_slice %576 {offsets = [0, 64], sizes = [2, 32], strides = [1, 1]} : vector<2x128xf32> to vector<2x32xf32>
    %590 = math.tanh %589 : vector<2x32xf32>
    %591 = vector.extract_strided_slice %576 {offsets = [0, 96], sizes = [2, 32], strides = [1, 1]} : vector<2x128xf32> to vector<2x32xf32>
    %592 = arith.negf %591 : vector<2x32xf32>
    %593 = math.exp %592 : vector<2x32xf32>
    %cst_134 = arith.constant 1.000000e+00 : f32
    %594 = vector.broadcast %cst_134 : f32 to vector<2x32xf32>
    %595 = arith.addf %594, %593 : vector<2x32xf32>
    %596 = arith.divf %594, %595 : vector<2x32xf32>
    %597 = arith.mulf %588, %541 : vector<2x32xf32>
    %598 = arith.mulf %582, %590 : vector<2x32xf32>
    %599 = arith.addf %597, %598 : vector<2x32xf32>
    %600 = math.tanh %599 : vector<2x32xf32>
    %601 = arith.mulf %596, %600 : vector<2x32xf32>
    %c2_135 = arith.constant 2 : index
    %c0_136 = arith.constant 0 : index
    %602 = vector.load %arg10[%c2_135, %c0_136] : memref<16x64xf32, #tpu.memory_space<vmem>>, vector<2x32xf32>
    tpu.vector_store %arg10[%c2_135, %c0_136], %573 {strides = array<i32>} : memref<16x64xf32, #tpu.memory_space<vmem>>, vector<2x32xf32>,
    %c12_137 = arith.constant 12 : index
    %c32_138 = arith.constant 32 : index
    %603 = vector.load %arg10[%c12_137, %c32_138] : memref<16x64xf32, #tpu.memory_space<vmem>>, vector<2x32xf32>
    tpu.vector_store %arg10[%c12_137, %c32_138], %601 {strides = array<i32>} : memref<16x64xf32, #tpu.memory_space<vmem>>, vector<2x32xf32>,
    %604 = vector.extract_strided_slice %481 {offsets = [4, 0], sizes = [2, 128], strides = [1, 1]} : vector<16x256xf32> to vector<2x128xf32>
    %cst_139 = arith.constant dense<0.000000e+00> : vector<2x128xf32>
    %605 = tpu.matmul %573, %482, %cst_139 {dimension_numbers = #tpu.dot_dimension_numbers<[1], [0], [0], [1], [0, 0, 1, 1], [], []>} : vector<2x32xf32>, vector<32x128xf32>, vector<2x128xf32> -> vector<2x128xf32>
    %606 = arith.addf %604, %605 : vector<2x128xf32>
    %607 = vector.extract_strided_slice %606 {offsets = [0, 0], sizes = [2, 32], strides = [1, 1]} : vector<2x128xf32> to vector<2x32xf32>
    %608 = arith.negf %607 : vector<2x32xf32>
    %609 = math.exp %608 : vector<2x32xf32>
    %cst_140 = arith.constant 1.000000e+00 : f32
    %610 = vector.broadcast %cst_140 : f32 to vector<2x32xf32>
    %611 = arith.addf %610, %609 : vector<2x32xf32>
    %612 = arith.divf %610, %611 : vector<2x32xf32>
    %613 = vector.extract_strided_slice %606 {offsets = [0, 32], sizes = [2, 32], strides = [1, 1]} : vector<2x128xf32> to vector<2x32xf32>
    %614 = arith.negf %613 : vector<2x32xf32>
    %615 = math.exp %614 : vector<2x32xf32>
    %cst_141 = arith.constant 1.000000e+00 : f32
    %616 = vector.broadcast %cst_141 : f32 to vector<2x32xf32>
    %617 = arith.addf %616, %615 : vector<2x32xf32>
    %618 = arith.divf %616, %617 : vector<2x32xf32>
    %619 = vector.extract_strided_slice %606 {offsets = [0, 64], sizes = [2, 32], strides = [1, 1]} : vector<2x128xf32> to vector<2x32xf32>
    %620 = math.tanh %619 : vector<2x32xf32>
    %621 = vector.extract_strided_slice %606 {offsets = [0, 96], sizes = [2, 32], strides = [1, 1]} : vector<2x128xf32> to vector<2x32xf32>
    %622 = arith.negf %621 : vector<2x32xf32>
    %623 = math.exp %622 : vector<2x32xf32>
    %cst_142 = arith.constant 1.000000e+00 : f32
    %624 = vector.broadcast %cst_142 : f32 to vector<2x32xf32>
    %625 = arith.addf %624, %623 : vector<2x32xf32>
    %626 = arith.divf %624, %625 : vector<2x32xf32>
    %627 = arith.mulf %618, %571 : vector<2x32xf32>
    %628 = arith.mulf %612, %620 : vector<2x32xf32>
    %629 = arith.addf %627, %628 : vector<2x32xf32>
    %630 = math.tanh %629 : vector<2x32xf32>
    %631 = arith.mulf %626, %630 : vector<2x32xf32>
    %632 = vector.extract_strided_slice %481 {offsets = [10, 128], sizes = [2, 128], strides = [1, 1]} : vector<16x256xf32> to vector<2x128xf32>
    %cst_143 = arith.constant dense<0.000000e+00> : vector<2x128xf32>
    %633 = tpu.matmul %601, %483, %cst_143 {dimension_numbers = #tpu.dot_dimension_numbers<[1], [0], [0], [1], [0, 0, 1, 1], [], []>} : vector<2x32xf32>, vector<32x128xf32>, vector<2x128xf32> -> vector<2x128xf32>
    %634 = arith.addf %632, %633 : vector<2x128xf32>
    %635 = vector.extract_strided_slice %634 {offsets = [0, 0], sizes = [2, 32], strides = [1, 1]} : vector<2x128xf32> to vector<2x32xf32>
    %636 = arith.negf %635 : vector<2x32xf32>
    %637 = math.exp %636 : vector<2x32xf32>
    %cst_144 = arith.constant 1.000000e+00 : f32
    %638 = vector.broadcast %cst_144 : f32 to vector<2x32xf32>
    %639 = arith.addf %638, %637 : vector<2x32xf32>
    %640 = arith.divf %638, %639 : vector<2x32xf32>
    %641 = vector.extract_strided_slice %634 {offsets = [0, 32], sizes = [2, 32], strides = [1, 1]} : vector<2x128xf32> to vector<2x32xf32>
    %642 = arith.negf %641 : vector<2x32xf32>
    %643 = math.exp %642 : vector<2x32xf32>
    %cst_145 = arith.constant 1.000000e+00 : f32
    %644 = vector.broadcast %cst_145 : f32 to vector<2x32xf32>
    %645 = arith.addf %644, %643 : vector<2x32xf32>
    %646 = arith.divf %644, %645 : vector<2x32xf32>
    %647 = vector.extract_strided_slice %634 {offsets = [0, 64], sizes = [2, 32], strides = [1, 1]} : vector<2x128xf32> to vector<2x32xf32>
    %648 = math.tanh %647 : vector<2x32xf32>
    %649 = vector.extract_strided_slice %634 {offsets = [0, 96], sizes = [2, 32], strides = [1, 1]} : vector<2x128xf32> to vector<2x32xf32>
    %650 = arith.negf %649 : vector<2x32xf32>
    %651 = math.exp %650 : vector<2x32xf32>
    %cst_146 = arith.constant 1.000000e+00 : f32
    %652 = vector.broadcast %cst_146 : f32 to vector<2x32xf32>
    %653 = arith.addf %652, %651 : vector<2x32xf32>
    %654 = arith.divf %652, %653 : vector<2x32xf32>
    %655 = arith.mulf %646, %599 : vector<2x32xf32>
    %656 = arith.mulf %640, %648 : vector<2x32xf32>
    %657 = arith.addf %655, %656 : vector<2x32xf32>
    %658 = math.tanh %657 : vector<2x32xf32>
    %659 = arith.mulf %654, %658 : vector<2x32xf32>
    %c4_147 = arith.constant 4 : index
    %c0_148 = arith.constant 0 : index
    %660 = vector.load %arg10[%c4_147, %c0_148] : memref<16x64xf32, #tpu.memory_space<vmem>>, vector<2x32xf32>
    tpu.vector_store %arg10[%c4_147, %c0_148], %631 {strides = array<i32>} : memref<16x64xf32, #tpu.memory_space<vmem>>, vector<2x32xf32>,
    %c10_149 = arith.constant 10 : index
    %c32_150 = arith.constant 32 : index
    %661 = vector.load %arg10[%c10_149, %c32_150] : memref<16x64xf32, #tpu.memory_space<vmem>>, vector<2x32xf32>
    tpu.vector_store %arg10[%c10_149, %c32_150], %659 {strides = array<i32>} : memref<16x64xf32, #tpu.memory_space<vmem>>, vector<2x32xf32>,
    %662 = vector.extract_strided_slice %481 {offsets = [6, 0], sizes = [2, 128], strides = [1, 1]} : vector<16x256xf32> to vector<2x128xf32>
    %cst_151 = arith.constant dense<0.000000e+00> : vector<2x128xf32>
    %663 = tpu.matmul %631, %482, %cst_151 {dimension_numbers = #tpu.dot_dimension_numbers<[1], [0], [0], [1], [0, 0, 1, 1], [], []>} : vector<2x32xf32>, vector<32x128xf32>, vector<2x128xf32> -> vector<2x128xf32>
    %664 = arith.addf %662, %663 : vector<2x128xf32>
    %665 = vector.extract_strided_slice %664 {offsets = [0, 0], sizes = [2, 32], strides = [1, 1]} : vector<2x128xf32> to vector<2x32xf32>
    %666 = arith.negf %665 : vector<2x32xf32>
    %667 = math.exp %666 : vector<2x32xf32>
    %cst_152 = arith.constant 1.000000e+00 : f32
    %668 = vector.broadcast %cst_152 : f32 to vector<2x32xf32>
    %669 = arith.addf %668, %667 : vector<2x32xf32>
    %670 = arith.divf %668, %669 : vector<2x32xf32>
    %671 = vector.extract_strided_slice %664 {offsets = [0, 32], sizes = [2, 32], strides = [1, 1]} : vector<2x128xf32> to vector<2x32xf32>
    %672 = arith.negf %671 : vector<2x32xf32>
    %673 = math.exp %672 : vector<2x32xf32>
    %cst_153 = arith.constant 1.000000e+00 : f32
    %674 = vector.broadcast %cst_153 : f32 to vector<2x32xf32>
    %675 = arith.addf %674, %673 : vector<2x32xf32>
    %676 = arith.divf %674, %675 : vector<2x32xf32>
    %677 = vector.extract_strided_slice %664 {offsets = [0, 64], sizes = [2, 32], strides = [1, 1]} : vector<2x128xf32> to vector<2x32xf32>
    %678 = math.tanh %677 : vector<2x32xf32>
    %679 = vector.extract_strided_slice %664 {offsets = [0, 96], sizes = [2, 32], strides = [1, 1]} : vector<2x128xf32> to vector<2x32xf32>
    %680 = arith.negf %679 : vector<2x32xf32>
    %681 = math.exp %680 : vector<2x32xf32>
    %cst_154 = arith.constant 1.000000e+00 : f32
    %682 = vector.broadcast %cst_154 : f32 to vector<2x32xf32>
    %683 = arith.addf %682, %681 : vector<2x32xf32>
    %684 = arith.divf %682, %683 : vector<2x32xf32>
    %685 = arith.mulf %676, %629 : vector<2x32xf32>
    %686 = arith.mulf %670, %678 : vector<2x32xf32>
    %687 = arith.addf %685, %686 : vector<2x32xf32>
    %688 = math.tanh %687 : vector<2x32xf32>
    %689 = arith.mulf %684, %688 : vector<2x32xf32>
    %690 = vector.extract_strided_slice %481 {offsets = [8, 128], sizes = [2, 128], strides = [1, 1]} : vector<16x256xf32> to vector<2x128xf32>
    %cst_155 = arith.constant dense<0.000000e+00> : vector<2x128xf32>
    %691 = tpu.matmul %659, %483, %cst_155 {dimension_numbers = #tpu.dot_dimension_numbers<[1], [0], [0], [1], [0, 0, 1, 1], [], []>} : vector<2x32xf32>, vector<32x128xf32>, vector<2x128xf32> -> vector<2x128xf32>
    %692 = arith.addf %690, %691 : vector<2x128xf32>
    %693 = vector.extract_strided_slice %692 {offsets = [0, 0], sizes = [2, 32], strides = [1, 1]} : vector<2x128xf32> to vector<2x32xf32>
    %694 = arith.negf %693 : vector<2x32xf32>
    %695 = math.exp %694 : vector<2x32xf32>
    %cst_156 = arith.constant 1.000000e+00 : f32
    %696 = vector.broadcast %cst_156 : f32 to vector<2x32xf32>
    %697 = arith.addf %696, %695 : vector<2x32xf32>
    %698 = arith.divf %696, %697 : vector<2x32xf32>
    %699 = vector.extract_strided_slice %692 {offsets = [0, 32], sizes = [2, 32], strides = [1, 1]} : vector<2x128xf32> to vector<2x32xf32>
    %700 = arith.negf %699 : vector<2x32xf32>
    %701 = math.exp %700 : vector<2x32xf32>
    %cst_157 = arith.constant 1.000000e+00 : f32
    %702 = vector.broadcast %cst_157 : f32 to vector<2x32xf32>
    %703 = arith.addf %702, %701 : vector<2x32xf32>
    %704 = arith.divf %702, %703 : vector<2x32xf32>
    %705 = vector.extract_strided_slice %692 {offsets = [0, 64], sizes = [2, 32], strides = [1, 1]} : vector<2x128xf32> to vector<2x32xf32>
    %706 = math.tanh %705 : vector<2x32xf32>
    %707 = vector.extract_strided_slice %692 {offsets = [0, 96], sizes = [2, 32], strides = [1, 1]} : vector<2x128xf32> to vector<2x32xf32>
    %708 = arith.negf %707 : vector<2x32xf32>
    %709 = math.exp %708 : vector<2x32xf32>
    %cst_158 = arith.constant 1.000000e+00 : f32
    %710 = vector.broadcast %cst_158 : f32 to vector<2x32xf32>
    %711 = arith.addf %710, %709 : vector<2x32xf32>
    %712 = arith.divf %710, %711 : vector<2x32xf32>
    %713 = arith.mulf %704, %657 : vector<2x32xf32>
    %714 = arith.mulf %698, %706 : vector<2x32xf32>
    %715 = arith.addf %713, %714 : vector<2x32xf32>
    %716 = math.tanh %715 : vector<2x32xf32>
    %717 = arith.mulf %712, %716 : vector<2x32xf32>
    %c6_159 = arith.constant 6 : index
    %c0_160 = arith.constant 0 : index
    %718 = vector.load %arg10[%c6_159, %c0_160] : memref<16x64xf32, #tpu.memory_space<vmem>>, vector<2x32xf32>
    tpu.vector_store %arg10[%c6_159, %c0_160], %689 {strides = array<i32>} : memref<16x64xf32, #tpu.memory_space<vmem>>, vector<2x32xf32>,
    %c8_161 = arith.constant 8 : index
    %c32_162 = arith.constant 32 : index
    %719 = vector.load %arg10[%c8_161, %c32_162] : memref<16x64xf32, #tpu.memory_space<vmem>>, vector<2x32xf32>
    tpu.vector_store %arg10[%c8_161, %c32_162], %717 {strides = array<i32>} : memref<16x64xf32, #tpu.memory_space<vmem>>, vector<2x32xf32>,
    %720 = vector.extract_strided_slice %481 {offsets = [8, 0], sizes = [2, 128], strides = [1, 1]} : vector<16x256xf32> to vector<2x128xf32>
    %cst_163 = arith.constant dense<0.000000e+00> : vector<2x128xf32>
    %721 = tpu.matmul %689, %482, %cst_163 {dimension_numbers = #tpu.dot_dimension_numbers<[1], [0], [0], [1], [0, 0, 1, 1], [], []>} : vector<2x32xf32>, vector<32x128xf32>, vector<2x128xf32> -> vector<2x128xf32>
    %722 = arith.addf %720, %721 : vector<2x128xf32>
    %723 = vector.extract_strided_slice %722 {offsets = [0, 0], sizes = [2, 32], strides = [1, 1]} : vector<2x128xf32> to vector<2x32xf32>
    %724 = arith.negf %723 : vector<2x32xf32>
    %725 = math.exp %724 : vector<2x32xf32>
    %cst_164 = arith.constant 1.000000e+00 : f32
    %726 = vector.broadcast %cst_164 : f32 to vector<2x32xf32>
    %727 = arith.addf %726, %725 : vector<2x32xf32>
    %728 = arith.divf %726, %727 : vector<2x32xf32>
    %729 = vector.extract_strided_slice %722 {offsets = [0, 32], sizes = [2, 32], strides = [1, 1]} : vector<2x128xf32> to vector<2x32xf32>
    %730 = arith.negf %729 : vector<2x32xf32>
    %731 = math.exp %730 : vector<2x32xf32>
    %cst_165 = arith.constant 1.000000e+00 : f32
    %732 = vector.broadcast %cst_165 : f32 to vector<2x32xf32>
    %733 = arith.addf %732, %731 : vector<2x32xf32>
    %734 = arith.divf %732, %733 : vector<2x32xf32>
    %735 = vector.extract_strided_slice %722 {offsets = [0, 64], sizes = [2, 32], strides = [1, 1]} : vector<2x128xf32> to vector<2x32xf32>
    %736 = math.tanh %735 : vector<2x32xf32>
    %737 = vector.extract_strided_slice %722 {offsets = [0, 96], sizes = [2, 32], strides = [1, 1]} : vector<2x128xf32> to vector<2x32xf32>
    %738 = arith.negf %737 : vector<2x32xf32>
    %739 = math.exp %738 : vector<2x32xf32>
    %cst_166 = arith.constant 1.000000e+00 : f32
    %740 = vector.broadcast %cst_166 : f32 to vector<2x32xf32>
    %741 = arith.addf %740, %739 : vector<2x32xf32>
    %742 = arith.divf %740, %741 : vector<2x32xf32>
    %743 = arith.mulf %734, %687 : vector<2x32xf32>
    %744 = arith.mulf %728, %736 : vector<2x32xf32>
    %745 = arith.addf %743, %744 : vector<2x32xf32>
    %746 = math.tanh %745 : vector<2x32xf32>
    %747 = arith.mulf %742, %746 : vector<2x32xf32>
    %748 = vector.extract_strided_slice %481 {offsets = [6, 128], sizes = [2, 128], strides = [1, 1]} : vector<16x256xf32> to vector<2x128xf32>
    %cst_167 = arith.constant dense<0.000000e+00> : vector<2x128xf32>
    %749 = tpu.matmul %717, %483, %cst_167 {dimension_numbers = #tpu.dot_dimension_numbers<[1], [0], [0], [1], [0, 0, 1, 1], [], []>} : vector<2x32xf32>, vector<32x128xf32>, vector<2x128xf32> -> vector<2x128xf32>
    %750 = arith.addf %748, %749 : vector<2x128xf32>
    %751 = vector.extract_strided_slice %750 {offsets = [0, 0], sizes = [2, 32], strides = [1, 1]} : vector<2x128xf32> to vector<2x32xf32>
    %752 = arith.negf %751 : vector<2x32xf32>
    %753 = math.exp %752 : vector<2x32xf32>
    %cst_168 = arith.constant 1.000000e+00 : f32
    %754 = vector.broadcast %cst_168 : f32 to vector<2x32xf32>
    %755 = arith.addf %754, %753 : vector<2x32xf32>
    %756 = arith.divf %754, %755 : vector<2x32xf32>
    %757 = vector.extract_strided_slice %750 {offsets = [0, 32], sizes = [2, 32], strides = [1, 1]} : vector<2x128xf32> to vector<2x32xf32>
    %758 = arith.negf %757 : vector<2x32xf32>
    %759 = math.exp %758 : vector<2x32xf32>
    %cst_169 = arith.constant 1.000000e+00 : f32
    %760 = vector.broadcast %cst_169 : f32 to vector<2x32xf32>
    %761 = arith.addf %760, %759 : vector<2x32xf32>
    %762 = arith.divf %760, %761 : vector<2x32xf32>
    %763 = vector.extract_strided_slice %750 {offsets = [0, 64], sizes = [2, 32], strides = [1, 1]} : vector<2x128xf32> to vector<2x32xf32>
    %764 = math.tanh %763 : vector<2x32xf32>
    %765 = vector.extract_strided_slice %750 {offsets = [0, 96], sizes = [2, 32], strides = [1, 1]} : vector<2x128xf32> to vector<2x32xf32>
    %766 = arith.negf %765 : vector<2x32xf32>
    %767 = math.exp %766 : vector<2x32xf32>
    %cst_170 = arith.constant 1.000000e+00 : f32
    %768 = vector.broadcast %cst_170 : f32 to vector<2x32xf32>
    %769 = arith.addf %768, %767 : vector<2x32xf32>
    %770 = arith.divf %768, %769 : vector<2x32xf32>
    %771 = arith.mulf %762, %715 : vector<2x32xf32>
    %772 = arith.mulf %756, %764 : vector<2x32xf32>
    %773 = arith.addf %771, %772 : vector<2x32xf32>
    %774 = math.tanh %773 : vector<2x32xf32>
    %775 = arith.mulf %770, %774 : vector<2x32xf32>
    %c8_171 = arith.constant 8 : index
    %c0_172 = arith.constant 0 : index
    %776 = vector.load %arg10[%c8_171, %c0_172] : memref<16x64xf32, #tpu.memory_space<vmem>>, vector<2x32xf32>
    tpu.vector_store %arg10[%c8_171, %c0_172], %747 {strides = array<i32>} : memref<16x64xf32, #tpu.memory_space<vmem>>, vector<2x32xf32>,
    %c6_173 = arith.constant 6 : index
    %c32_174 = arith.constant 32 : index
    %777 = vector.load %arg10[%c6_173, %c32_174] : memref<16x64xf32, #tpu.memory_space<vmem>>, vector<2x32xf32>
    tpu.vector_store %arg10[%c6_173, %c32_174], %775 {strides = array<i32>} : memref<16x64xf32, #tpu.memory_space<vmem>>, vector<2x32xf32>,
    %778 = vector.extract_strided_slice %481 {offsets = [10, 0], sizes = [2, 128], strides = [1, 1]} : vector<16x256xf32> to vector<2x128xf32>
    %cst_175 = arith.constant dense<0.000000e+00> : vector<2x128xf32>
    %779 = tpu.matmul %747, %482, %cst_175 {dimension_numbers = #tpu.dot_dimension_numbers<[1], [0], [0], [1], [0, 0, 1, 1], [], []>} : vector<2x32xf32>, vector<32x128xf32>, vector<2x128xf32> -> vector<2x128xf32>
    %780 = arith.addf %778, %779 : vector<2x128xf32>
    %781 = vector.extract_strided_slice %780 {offsets = [0, 0], sizes = [2, 32], strides = [1, 1]} : vector<2x128xf32> to vector<2x32xf32>
    %782 = arith.negf %781 : vector<2x32xf32>
    %783 = math.exp %782 : vector<2x32xf32>
    %cst_176 = arith.constant 1.000000e+00 : f32
    %784 = vector.broadcast %cst_176 : f32 to vector<2x32xf32>
    %785 = arith.addf %784, %783 : vector<2x32xf32>
    %786 = arith.divf %784, %785 : vector<2x32xf32>
    %787 = vector.extract_strided_slice %780 {offsets = [0, 32], sizes = [2, 32], strides = [1, 1]} : vector<2x128xf32> to vector<2x32xf32>
    %788 = arith.negf %787 : vector<2x32xf32>
    %789 = math.exp %788 : vector<2x32xf32>
    %cst_177 = arith.constant 1.000000e+00 : f32
    %790 = vector.broadcast %cst_177 : f32 to vector<2x32xf32>
    %791 = arith.addf %790, %789 : vector<2x32xf32>
    %792 = arith.divf %790, %791 : vector<2x32xf32>
    %793 = vector.extract_strided_slice %780 {offsets = [0, 64], sizes = [2, 32], strides = [1, 1]} : vector<2x128xf32> to vector<2x32xf32>
    %794 = math.tanh %793 : vector<2x32xf32>
    %795 = vector.extract_strided_slice %780 {offsets = [0, 96], sizes = [2, 32], strides = [1, 1]} : vector<2x128xf32> to vector<2x32xf32>
    %796 = arith.negf %795 : vector<2x32xf32>
    %797 = math.exp %796 : vector<2x32xf32>
    %cst_178 = arith.constant 1.000000e+00 : f32
    %798 = vector.broadcast %cst_178 : f32 to vector<2x32xf32>
    %799 = arith.addf %798, %797 : vector<2x32xf32>
    %800 = arith.divf %798, %799 : vector<2x32xf32>
    %801 = arith.mulf %792, %745 : vector<2x32xf32>
    %802 = arith.mulf %786, %794 : vector<2x32xf32>
    %803 = arith.addf %801, %802 : vector<2x32xf32>
    %804 = math.tanh %803 : vector<2x32xf32>
    %805 = arith.mulf %800, %804 : vector<2x32xf32>
    %806 = vector.extract_strided_slice %481 {offsets = [4, 128], sizes = [2, 128], strides = [1, 1]} : vector<16x256xf32> to vector<2x128xf32>
    %cst_179 = arith.constant dense<0.000000e+00> : vector<2x128xf32>
    %807 = tpu.matmul %775, %483, %cst_179 {dimension_numbers = #tpu.dot_dimension_numbers<[1], [0], [0], [1], [0, 0, 1, 1], [], []>} : vector<2x32xf32>, vector<32x128xf32>, vector<2x128xf32> -> vector<2x128xf32>
    %808 = arith.addf %806, %807 : vector<2x128xf32>
    %809 = vector.extract_strided_slice %808 {offsets = [0, 0], sizes = [2, 32], strides = [1, 1]} : vector<2x128xf32> to vector<2x32xf32>
    %810 = arith.negf %809 : vector<2x32xf32>
    %811 = math.exp %810 : vector<2x32xf32>
    %cst_180 = arith.constant 1.000000e+00 : f32
    %812 = vector.broadcast %cst_180 : f32 to vector<2x32xf32>
    %813 = arith.addf %812, %811 : vector<2x32xf32>
    %814 = arith.divf %812, %813 : vector<2x32xf32>
    %815 = vector.extract_strided_slice %808 {offsets = [0, 32], sizes = [2, 32], strides = [1, 1]} : vector<2x128xf32> to vector<2x32xf32>
    %816 = arith.negf %815 : vector<2x32xf32>
    %817 = math.exp %816 : vector<2x32xf32>
    %cst_181 = arith.constant 1.000000e+00 : f32
    %818 = vector.broadcast %cst_181 : f32 to vector<2x32xf32>
    %819 = arith.addf %818, %817 : vector<2x32xf32>
    %820 = arith.divf %818, %819 : vector<2x32xf32>
    %821 = vector.extract_strided_slice %808 {offsets = [0, 64], sizes = [2, 32], strides = [1, 1]} : vector<2x128xf32> to vector<2x32xf32>
    %822 = math.tanh %821 : vector<2x32xf32>
    %823 = vector.extract_strided_slice %808 {offsets = [0, 96], sizes = [2, 32], strides = [1, 1]} : vector<2x128xf32> to vector<2x32xf32>
    %824 = arith.negf %823 : vector<2x32xf32>
    %825 = math.exp %824 : vector<2x32xf32>
    %cst_182 = arith.constant 1.000000e+00 : f32
    %826 = vector.broadcast %cst_182 : f32 to vector<2x32xf32>
    %827 = arith.addf %826, %825 : vector<2x32xf32>
    %828 = arith.divf %826, %827 : vector<2x32xf32>
    %829 = arith.mulf %820, %773 : vector<2x32xf32>
    %830 = arith.mulf %814, %822 : vector<2x32xf32>
    %831 = arith.addf %829, %830 : vector<2x32xf32>
    %832 = math.tanh %831 : vector<2x32xf32>
    %833 = arith.mulf %828, %832 : vector<2x32xf32>
    %c10_183 = arith.constant 10 : index
    %c0_184 = arith.constant 0 : index
    %834 = vector.load %arg10[%c10_183, %c0_184] : memref<16x64xf32, #tpu.memory_space<vmem>>, vector<2x32xf32>
    tpu.vector_store %arg10[%c10_183, %c0_184], %805 {strides = array<i32>} : memref<16x64xf32, #tpu.memory_space<vmem>>, vector<2x32xf32>,
    %c4_185 = arith.constant 4 : index
    %c32_186 = arith.constant 32 : index
    %835 = vector.load %arg10[%c4_185, %c32_186] : memref<16x64xf32, #tpu.memory_space<vmem>>, vector<2x32xf32>
    tpu.vector_store %arg10[%c4_185, %c32_186], %833 {strides = array<i32>} : memref<16x64xf32, #tpu.memory_space<vmem>>, vector<2x32xf32>,
    %836 = vector.extract_strided_slice %481 {offsets = [12, 0], sizes = [2, 128], strides = [1, 1]} : vector<16x256xf32> to vector<2x128xf32>
    %cst_187 = arith.constant dense<0.000000e+00> : vector<2x128xf32>
    %837 = tpu.matmul %805, %482, %cst_187 {dimension_numbers = #tpu.dot_dimension_numbers<[1], [0], [0], [1], [0, 0, 1, 1], [], []>} : vector<2x32xf32>, vector<32x128xf32>, vector<2x128xf32> -> vector<2x128xf32>
    %838 = arith.addf %836, %837 : vector<2x128xf32>
    %839 = vector.extract_strided_slice %838 {offsets = [0, 0], sizes = [2, 32], strides = [1, 1]} : vector<2x128xf32> to vector<2x32xf32>
    %840 = arith.negf %839 : vector<2x32xf32>
    %841 = math.exp %840 : vector<2x32xf32>
    %cst_188 = arith.constant 1.000000e+00 : f32
    %842 = vector.broadcast %cst_188 : f32 to vector<2x32xf32>
    %843 = arith.addf %842, %841 : vector<2x32xf32>
    %844 = arith.divf %842, %843 : vector<2x32xf32>
    %845 = vector.extract_strided_slice %838 {offsets = [0, 32], sizes = [2, 32], strides = [1, 1]} : vector<2x128xf32> to vector<2x32xf32>
    %846 = arith.negf %845 : vector<2x32xf32>
    %847 = math.exp %846 : vector<2x32xf32>
    %cst_189 = arith.constant 1.000000e+00 : f32
    %848 = vector.broadcast %cst_189 : f32 to vector<2x32xf32>
    %849 = arith.addf %848, %847 : vector<2x32xf32>
    %850 = arith.divf %848, %849 : vector<2x32xf32>
    %851 = vector.extract_strided_slice %838 {offsets = [0, 64], sizes = [2, 32], strides = [1, 1]} : vector<2x128xf32> to vector<2x32xf32>
    %852 = math.tanh %851 : vector<2x32xf32>
    %853 = vector.extract_strided_slice %838 {offsets = [0, 96], sizes = [2, 32], strides = [1, 1]} : vector<2x128xf32> to vector<2x32xf32>
    %854 = arith.negf %853 : vector<2x32xf32>
    %855 = math.exp %854 : vector<2x32xf32>
    %cst_190 = arith.constant 1.000000e+00 : f32
    %856 = vector.broadcast %cst_190 : f32 to vector<2x32xf32>
    %857 = arith.addf %856, %855 : vector<2x32xf32>
    %858 = arith.divf %856, %857 : vector<2x32xf32>
    %859 = arith.mulf %850, %803 : vector<2x32xf32>
    %860 = arith.mulf %844, %852 : vector<2x32xf32>
    %861 = arith.addf %859, %860 : vector<2x32xf32>
    %862 = math.tanh %861 : vector<2x32xf32>
    %863 = arith.mulf %858, %862 : vector<2x32xf32>
    %864 = vector.extract_strided_slice %481 {offsets = [2, 128], sizes = [2, 128], strides = [1, 1]} : vector<16x256xf32> to vector<2x128xf32>
    %cst_191 = arith.constant dense<0.000000e+00> : vector<2x128xf32>
    %865 = tpu.matmul %833, %483, %cst_191 {dimension_numbers = #tpu.dot_dimension_numbers<[1], [0], [0], [1], [0, 0, 1, 1], [], []>} : vector<2x32xf32>, vector<32x128xf32>, vector<2x128xf32> -> vector<2x128xf32>
    %866 = arith.addf %864, %865 : vector<2x128xf32>
    %867 = vector.extract_strided_slice %866 {offsets = [0, 0], sizes = [2, 32], strides = [1, 1]} : vector<2x128xf32> to vector<2x32xf32>
    %868 = arith.negf %867 : vector<2x32xf32>
    %869 = math.exp %868 : vector<2x32xf32>
    %cst_192 = arith.constant 1.000000e+00 : f32
    %870 = vector.broadcast %cst_192 : f32 to vector<2x32xf32>
    %871 = arith.addf %870, %869 : vector<2x32xf32>
    %872 = arith.divf %870, %871 : vector<2x32xf32>
    %873 = vector.extract_strided_slice %866 {offsets = [0, 32], sizes = [2, 32], strides = [1, 1]} : vector<2x128xf32> to vector<2x32xf32>
    %874 = arith.negf %873 : vector<2x32xf32>
    %875 = math.exp %874 : vector<2x32xf32>
    %cst_193 = arith.constant 1.000000e+00 : f32
    %876 = vector.broadcast %cst_193 : f32 to vector<2x32xf32>
    %877 = arith.addf %876, %875 : vector<2x32xf32>
    %878 = arith.divf %876, %877 : vector<2x32xf32>
    %879 = vector.extract_strided_slice %866 {offsets = [0, 64], sizes = [2, 32], strides = [1, 1]} : vector<2x128xf32> to vector<2x32xf32>
    %880 = math.tanh %879 : vector<2x32xf32>
    %881 = vector.extract_strided_slice %866 {offsets = [0, 96], sizes = [2, 32], strides = [1, 1]} : vector<2x128xf32> to vector<2x32xf32>
    %882 = arith.negf %881 : vector<2x32xf32>
    %883 = math.exp %882 : vector<2x32xf32>
    %cst_194 = arith.constant 1.000000e+00 : f32
    %884 = vector.broadcast %cst_194 : f32 to vector<2x32xf32>
    %885 = arith.addf %884, %883 : vector<2x32xf32>
    %886 = arith.divf %884, %885 : vector<2x32xf32>
    %887 = arith.mulf %878, %831 : vector<2x32xf32>
    %888 = arith.mulf %872, %880 : vector<2x32xf32>
    %889 = arith.addf %887, %888 : vector<2x32xf32>
    %890 = math.tanh %889 : vector<2x32xf32>
    %891 = arith.mulf %886, %890 : vector<2x32xf32>
    %c12_195 = arith.constant 12 : index
    %c0_196 = arith.constant 0 : index
    %892 = vector.load %arg10[%c12_195, %c0_196] : memref<16x64xf32, #tpu.memory_space<vmem>>, vector<2x32xf32>
    tpu.vector_store %arg10[%c12_195, %c0_196], %863 {strides = array<i32>} : memref<16x64xf32, #tpu.memory_space<vmem>>, vector<2x32xf32>,
    %c2_197 = arith.constant 2 : index
    %c32_198 = arith.constant 32 : index
    %893 = vector.load %arg10[%c2_197, %c32_198] : memref<16x64xf32, #tpu.memory_space<vmem>>, vector<2x32xf32>
    tpu.vector_store %arg10[%c2_197, %c32_198], %891 {strides = array<i32>} : memref<16x64xf32, #tpu.memory_space<vmem>>, vector<2x32xf32>,
    %894 = vector.extract_strided_slice %481 {offsets = [14, 0], sizes = [2, 128], strides = [1, 1]} : vector<16x256xf32> to vector<2x128xf32>
    %cst_199 = arith.constant dense<0.000000e+00> : vector<2x128xf32>
    %895 = tpu.matmul %863, %482, %cst_199 {dimension_numbers = #tpu.dot_dimension_numbers<[1], [0], [0], [1], [0, 0, 1, 1], [], []>} : vector<2x32xf32>, vector<32x128xf32>, vector<2x128xf32> -> vector<2x128xf32>
    %896 = arith.addf %894, %895 : vector<2x128xf32>
    %897 = vector.extract_strided_slice %896 {offsets = [0, 0], sizes = [2, 32], strides = [1, 1]} : vector<2x128xf32> to vector<2x32xf32>
    %898 = arith.negf %897 : vector<2x32xf32>
    %899 = math.exp %898 : vector<2x32xf32>
    %cst_200 = arith.constant 1.000000e+00 : f32
    %900 = vector.broadcast %cst_200 : f32 to vector<2x32xf32>
    %901 = arith.addf %900, %899 : vector<2x32xf32>
    %902 = arith.divf %900, %901 : vector<2x32xf32>
    %903 = vector.extract_strided_slice %896 {offsets = [0, 32], sizes = [2, 32], strides = [1, 1]} : vector<2x128xf32> to vector<2x32xf32>
    %904 = arith.negf %903 : vector<2x32xf32>
    %905 = math.exp %904 : vector<2x32xf32>
    %cst_201 = arith.constant 1.000000e+00 : f32
    %906 = vector.broadcast %cst_201 : f32 to vector<2x32xf32>
    %907 = arith.addf %906, %905 : vector<2x32xf32>
    %908 = arith.divf %906, %907 : vector<2x32xf32>
    %909 = vector.extract_strided_slice %896 {offsets = [0, 64], sizes = [2, 32], strides = [1, 1]} : vector<2x128xf32> to vector<2x32xf32>
    %910 = math.tanh %909 : vector<2x32xf32>
    %911 = vector.extract_strided_slice %896 {offsets = [0, 96], sizes = [2, 32], strides = [1, 1]} : vector<2x128xf32> to vector<2x32xf32>
    %912 = arith.negf %911 : vector<2x32xf32>
    %913 = math.exp %912 : vector<2x32xf32>
    %cst_202 = arith.constant 1.000000e+00 : f32
    %914 = vector.broadcast %cst_202 : f32 to vector<2x32xf32>
    %915 = arith.addf %914, %913 : vector<2x32xf32>
    %916 = arith.divf %914, %915 : vector<2x32xf32>
    %917 = arith.mulf %908, %861 : vector<2x32xf32>
    %918 = arith.mulf %902, %910 : vector<2x32xf32>
    %919 = arith.addf %917, %918 : vector<2x32xf32>
    %920 = math.tanh %919 : vector<2x32xf32>
    %921 = arith.mulf %916, %920 : vector<2x32xf32>
    %922 = vector.extract_strided_slice %481 {offsets = [0, 128], sizes = [2, 128], strides = [1, 1]} : vector<16x256xf32> to vector<2x128xf32>
    %cst_203 = arith.constant dense<0.000000e+00> : vector<2x128xf32>
    %923 = tpu.matmul %891, %483, %cst_203 {dimension_numbers = #tpu.dot_dimension_numbers<[1], [0], [0], [1], [0, 0, 1, 1], [], []>} : vector<2x32xf32>, vector<32x128xf32>, vector<2x128xf32> -> vector<2x128xf32>
    %924 = arith.addf %922, %923 : vector<2x128xf32>
    %925 = vector.extract_strided_slice %924 {offsets = [0, 0], sizes = [2, 32], strides = [1, 1]} : vector<2x128xf32> to vector<2x32xf32>
    %926 = arith.negf %925 : vector<2x32xf32>
    %927 = math.exp %926 : vector<2x32xf32>
    %cst_204 = arith.constant 1.000000e+00 : f32
    %928 = vector.broadcast %cst_204 : f32 to vector<2x32xf32>
    %929 = arith.addf %928, %927 : vector<2x32xf32>
    %930 = arith.divf %928, %929 : vector<2x32xf32>
    %931 = vector.extract_strided_slice %924 {offsets = [0, 32], sizes = [2, 32], strides = [1, 1]} : vector<2x128xf32> to vector<2x32xf32>
    %932 = arith.negf %931 : vector<2x32xf32>
    %933 = math.exp %932 : vector<2x32xf32>
    %cst_205 = arith.constant 1.000000e+00 : f32
    %934 = vector.broadcast %cst_205 : f32 to vector<2x32xf32>
    %935 = arith.addf %934, %933 : vector<2x32xf32>
    %936 = arith.divf %934, %935 : vector<2x32xf32>
    %937 = vector.extract_strided_slice %924 {offsets = [0, 64], sizes = [2, 32], strides = [1, 1]} : vector<2x128xf32> to vector<2x32xf32>
    %938 = math.tanh %937 : vector<2x32xf32>
    %939 = vector.extract_strided_slice %924 {offsets = [0, 96], sizes = [2, 32], strides = [1, 1]} : vector<2x128xf32> to vector<2x32xf32>
    %940 = arith.negf %939 : vector<2x32xf32>
    %941 = math.exp %940 : vector<2x32xf32>
    %cst_206 = arith.constant 1.000000e+00 : f32
    %942 = vector.broadcast %cst_206 : f32 to vector<2x32xf32>
    %943 = arith.addf %942, %941 : vector<2x32xf32>
    %944 = arith.divf %942, %943 : vector<2x32xf32>
    %945 = arith.mulf %936, %889 : vector<2x32xf32>
    %946 = arith.mulf %930, %938 : vector<2x32xf32>
    %947 = arith.addf %945, %946 : vector<2x32xf32>
    %948 = math.tanh %947 : vector<2x32xf32>
    %949 = arith.mulf %944, %948 : vector<2x32xf32>
    %c14_207 = arith.constant 14 : index
    %c0_208 = arith.constant 0 : index
    %950 = vector.load %arg10[%c14_207, %c0_208] : memref<16x64xf32, #tpu.memory_space<vmem>>, vector<2x32xf32>
    tpu.vector_store %arg10[%c14_207, %c0_208], %921 {strides = array<i32>} : memref<16x64xf32, #tpu.memory_space<vmem>>, vector<2x32xf32>,
    %c0_209 = arith.constant 0 : index
    %c32_210 = arith.constant 32 : index
    %951 = vector.load %arg10[%c0_209, %c32_210] : memref<16x64xf32, #tpu.memory_space<vmem>>, vector<2x32xf32>
    tpu.vector_store %arg10[%c0_209, %c32_210], %949 {strides = array<i32>} : memref<16x64xf32, #tpu.memory_space<vmem>>, vector<2x32xf32>,
    %c0_211 = arith.constant 0 : index
    %c0_212 = arith.constant 0 : index
    %952 = vector.load %arg10[%c0_211, %c0_212] : memref<16x64xf32, #tpu.memory_space<vmem>>, vector<16x64xf32>
    %c0_213 = arith.constant 0 : index
    %c0_214 = arith.constant 0 : index
    %953 = vector.load %arg7[%c0_213, %c0_214] : memref<64x128xf32, #tpu.memory_space<vmem>>, vector<64x128xf32>
    %cst_215 = arith.constant dense<0.000000e+00> : vector<16x128xf32>
    %954 = tpu.matmul %952, %953, %cst_215 {dimension_numbers = #tpu.dot_dimension_numbers<[1], [0], [0], [1], [0, 0, 1, 1], [], []>} : vector<16x64xf32>, vector<64x128xf32>, vector<16x128xf32> -> vector<16x128xf32>
    %c0_216 = arith.constant 0 : index
    %c0_217 = arith.constant 0 : index
    %955 = vector.load %arg8[%c0_216, %c0_217] : memref<1x128xf32, #tpu.memory_space<vmem>>, vector<1x128xf32>
    %956 = vector.broadcast %955 : vector<1x128xf32> to vector<16x128xf32>
    %957 = arith.addf %954, %956 : vector<16x128xf32>
    %c0_218 = arith.constant 0 : index
    %c0_219 = arith.constant 0 : index
    %958 = vector.load %arg9[%c0_218, %c0_219] : memref<16x128xf32, #tpu.memory_space<vmem>>, vector<16x128xf32>
    tpu.vector_store %arg9[%c0_218, %c0_219], %957 {strides = array<i32>} : memref<16x128xf32, #tpu.memory_space<vmem>>, vector<16x128xf32>,
    return
  }
}

</mosaic_0001>

<llo_original>
// kernel: _blstm_forward_impl.1
$region0: #{_blstm_forward_impl.1}
  #allocation0 [shape = 'u32[]', space=smem, size = 0x4, offset = 0x4, fixed_abs, tag = 'smem constant byte address 0x4 - core index']
  #allocation1 [shape = 'u32[72,128]{1,0:T(1,128)}', space=vmem, size = 0x9000, scoped, tag = 'internal scratch']
  #allocation2 [shape = 'f32[16,64]{1,0:T(8,128)}', space=vmem, size = 0x2000, scoped, tag = 'scratch operand']
  %s0 = inlined_call_operand.vmem [shape: f32[16,16], index: 0, kind: input, shape index: {}]
  %s1 = inlined_call_operand.vmem [shape: f32[16,256], index: 1, kind: input, shape index: {}]
  %s2 = inlined_call_operand.vmem [shape: f32[32,256], index: 2, kind: input, shape index: {}]
  %s3 = inlined_call_operand.vmem [shape: f32[1,256], index: 3, kind: input, shape index: {}]
  %s4 = inlined_call_operand.vmem [shape: f32[64,256], index: 4, kind: input, shape index: {}]
  %s5 = inlined_call_operand.vmem [shape: f32[32,256], index: 5, kind: input, shape index: {}]
  %s6 = inlined_call_operand.vmem [shape: f32[1,256], index: 6, kind: input, shape index: {}]
  %s7 = inlined_call_operand.vmem [shape: f32[64,128], index: 7, kind: input, shape index: {}]
  %s8 = inlined_call_operand.vmem [shape: f32[1,128], index: 8, kind: input, shape index: {}]
  %s9 = inlined_call_operand.hbm [shape: f32[16,128], index: 9, kind: output, shape index: {}]
  %s10 = sld [smem:[#allocation0]]
  $region46: #{_blstm_forward_impl.1} parent=0
    _
  %s12 = ssub.s32 1, %s10
  %s13 = scalar_select 0, %s12, %s10
  $region1: #{_blstm_forward_impl.1} parent=0
    #allocation3 [shape = 'u8[8192]{0}', space=vmem, size = 0x2000, scoped, tag = 'output window, operand 0, single buffered']
    #allocation4 [shape = 's32[1]{0}', space=sflag, size = 0x4, scoped, tag = 'scoped memory for _blstm_forward_impl.1']
    %14 = vsyncpa [#allocation4], 0
    // Predicated region
    $region2: #{_blstm_forward_impl.1} parent=1 // pred_check
      _
    $region3: #{_blstm_forward_impl.1} parent=1 // pred_check_branch
      %16 = sbr.rel (0) target = $region5
    $region4: #{_blstm_forward_impl.1} parent=1 // pred_region
      _
    $region5: #{_blstm_forward_impl.1} parent=1 // pred_fallthru
      _
    // Predicated region
    $region6: #{_blstm_forward_impl.1} parent=1 // pred_check
      _
    $region7: #{_blstm_forward_impl.1} parent=1 // pred_check_branch
      %18 = sbr.rel (0) target = $region9
    $region8: #{_blstm_forward_impl.1} parent=1 // pred_region
      _
    $region9: #{_blstm_forward_impl.1} parent=1 // pred_fallthru
      _
    // Predicated region
    $region10: #{_blstm_forward_impl.1} parent=1 // pred_check
      _
    $region11: #{_blstm_forward_impl.1} parent=1 // pred_check_branch
      %20 = sbr.rel (0) target = $region13
    $region12: #{_blstm_forward_impl.1} parent=1 // pred_region
      _
    $region13: #{_blstm_forward_impl.1} parent=1 // pred_fallthru
      _
    // Predicated region
    $region14: #{_blstm_forward_impl.1} parent=1 // pred_check
      _
    $region15: #{_blstm_forward_impl.1} parent=1 // pred_check_branch
      %22 = sbr.rel (0) target = $region17
    $region16: #{_blstm_forward_impl.1} parent=1 // pred_region
      _
    $region17: #{_blstm_forward_impl.1} parent=1 // pred_fallthru
      _
    // Predicated region
    $region18: #{_blstm_forward_impl.1} parent=1 // pred_check
      _
    $region19: #{_blstm_forward_impl.1} parent=1 // pred_check_branch
      %24 = sbr.rel (0) target = $region21
    $region20: #{_blstm_forward_impl.1} parent=1 // pred_region
      _
    $region21: #{_blstm_forward_impl.1} parent=1 // pred_fallthru
      _
    // Predicated region
    $region22: #{_blstm_forward_impl.1} parent=1 // pred_check
      _
    $region23: #{_blstm_forward_impl.1} parent=1 // pred_check_branch
      %26 = sbr.rel (0) target = $region25
    $region24: #{_blstm_forward_impl.1} parent=1 // pred_region
      _
    $region25: #{_blstm_forward_impl.1} parent=1 // pred_fallthru
      _
    // Predicated region
    $region26: #{_blstm_forward_impl.1} parent=1 // pred_check
      _
    $region27: #{_blstm_forward_impl.1} parent=1 // pred_check_branch
      %28 = sbr.rel (0) target = $region29
    $region28: #{_blstm_forward_impl.1} parent=1 // pred_region
      _
    $region29: #{_blstm_forward_impl.1} parent=1 // pred_fallthru
      _
    // Predicated region
    $region30: #{_blstm_forward_impl.1} parent=1 // pred_check
      _
    $region31: #{_blstm_forward_impl.1} parent=1 // pred_check_branch
      %30 = sbr.rel (0) target = $region33
    $region32: #{_blstm_forward_impl.1} parent=1 // pred_region
      _
    $region33: #{_blstm_forward_impl.1} parent=1 // pred_fallthru
      _
    // Predicated region
    $region34: #{_blstm_forward_impl.1} parent=1 // pred_check
      _
    $region35: #{_blstm_forward_impl.1} parent=1 // pred_check_branch
      %32 = sbr.rel (0) target = $region37
    $region36: #{_blstm_forward_impl.1} parent=1 // pred_region
      _
    $region37: #{_blstm_forward_impl.1} parent=1 // pred_fallthru
      _
    %v33 = vld [vmem:[%s0] sm:$0xff]
    %v34 = vld [vmem:[%s0 + $0x8] sm:$0xff]
    %v35 = vld [vmem:[%s1] sm:$0xff]
    %v36 = vld [vmem:[%s1 + $0x8] sm:$0xff]
    %v37 = vld [vmem:[%s1 + $0x10] sm:$0xff]
    %v38 = vld [vmem:[%s1 + $0x18] sm:$0xff]
    %v39 = vld [vmem:[%s3] sm:$0x3]
    %v41 = vperm.slane %v39, 0
    %v42 = vperm.slane %v39, 1
    %vm45 = vcmask 130048
    %v47 = vsel %vm45, %v33, 0
    %v50 = vsel %vm45, %v34, 0
    %52 = vmatpush.msra.mxu0 0.0
    %53 = vmatpush.msra.mxu0 0.0
    %54 = vmatpush.msra.mxu0 0.0
    %55 = vmatpush.msra.mxu0 0.0
    %56 = vmatpush.msra.mxu0 0.0
    %57 = vmatpush.msra.mxu0 0.0
    %58 = vmatpush.msra.mxu0 0.0
    %59 = vmatpush.msra.mxu0 0.0
    %60 = vmatpush.msra.mxu0 0.0
    %61 = vmatpush.msra.mxu0 0.0
    %62 = vmatpush.msra.mxu0 0.0
    %63 = vmatpush.msra.mxu0 0.0
    %64 = vmatpush.msra.mxu0 0.0
    %65 = vmatpush.msra.mxu0 0.0
    %66 = vmatpush.msra.mxu0 %v37
    %67 = vmatpush.msra.mxu0 %v35
    %68 = vmatmul.f32.gmra.mxu0 %v47
    %v69 = vpop.f32.mrf.mxu0
    %v70 = vadd.f32 %v41, %v69
    %71 = vmatmul.f32.gmra.mxu0 %v50
    %v72 = vpop.f32.mrf.mxu0
    %v73 = vadd.f32 %v41, %v72
    %74 = vdwg.mxu0
    %75 = vmatpush.msra.mxu0 0.0
    %76 = vmatpush.msra.mxu0 0.0
    %77 = vmatpush.msra.mxu0 0.0
    %78 = vmatpush.msra.mxu0 0.0
    %79 = vmatpush.msra.mxu0 0.0
    %80 = vmatpush.msra.mxu0 0.0
    %81 = vmatpush.msra.mxu0 0.0
    %82 = vmatpush.msra.mxu0 0.0
    %83 = vmatpush.msra.mxu0 0.0
    %84 = vmatpush.msra.mxu0 0.0
    %85 = vmatpush.msra.mxu0 0.0
    %86 = vmatpush.msra.mxu0 0.0
    %87 = vmatpush.msra.mxu0 0.0
    %88 = vmatpush.msra.mxu0 0.0
    %89 = vmatpush.msra.mxu0 %v38
    %90 = vmatpush.msra.mxu0 %v36
    %91 = vmatmul.f32.gmra.mxu0 %v47
    %v92 = vpop.f32.mrf.mxu0
    %v93 = vadd.f32 %v42, %v92
    %94 = vmatmul.f32.gmra.mxu0 %v50
    %v95 = vpop.f32.mrf.mxu0
    %v96 = vadd.f32 %v42, %v95
    %97 = vdwg.mxu0
    %v98 = vld [vmem:[%s2] sm:$0xff]
    %v99 = vld [vmem:[%s2 + $0x10] sm:$0xff]
    %v100 = vld [vmem:[%s2 + $0x20] sm:$0xff]
    %v101 = vld [vmem:[%s2 + $0x30] sm:$0xff]
    %v102 = vld [vmem:[%s2 + $0x8] sm:$0xff]
    %v103 = vld [vmem:[%s2 + $0x18] sm:$0xff]
    %v104 = vld [vmem:[%s2 + $0x28] sm:$0xff]
    %v105 = vld [vmem:[%s2 + $0x38] sm:$0xff]
    %vm106 = vcmask 261120
    %v108 = vsel %vm106, 0.0, 0
    %110 = vmatpush.msra.mxu0 0.0
    %111 = vmatpush.msra.mxu0 0.0
    %112 = vmatpush.msra.mxu0 0.0
    %113 = vmatpush.msra.mxu0 0.0
    %114 = vmatpush.msra.mxu0 0.0
    %115 = vmatpush.msra.mxu0 0.0
    %116 = vmatpush.msra.mxu0 0.0
    %117 = vmatpush.msra.mxu0 0.0
    %118 = vmatpush.msra.mxu0 0.0
    %119 = vmatpush.msra.mxu0 0.0
    %120 = vmatpush.msra.mxu0 0.0
    %121 = vmatpush.msra.mxu0 0.0
    %122 = vmatpush.msra.mxu0 %v101
    %123 = vmatpush.msra.mxu0 %v100
    %124 = vmatpush.msra.mxu0 %v99
    %125 = vmatpush.msra.mxu0 %v98
    %126 = vmatmul.f32.gmra.mxu0 %v108
    %v127 = vpop.f32.mrf.mxu0
    %v128 = vadd.f32 0.0, %v127
    %129 = vdwg.mxu0
    %v130 = vadd.f32 %v70, %v128
    %v131 = vxor.u32 %v130, 2147483648
    %v132 = vmul.f32 %v131, 1.442695
    %v133 = vpow.pop %v132
    %v134 = vadd.f32 %v133, 1.0
    %v135 = vrcp.pop %v134
    %v136 = vmul.f32 %v134, %v135
    %v137 = vsub.f32 1.0, %v136
    %v138 = vmul.f32 %v135, %v137
    %v139 = vadd.f32 %v135, %v138
    %vm140 = vweird.f32 %v134
    %vm141 = vweird.f32 %v135
    %vm142 = vmor %vm140, %vm141
    %v143 = vsel %vm142, %v135, %v139
    %v144 = vand.u32 2147483647, %v134
    %vm145 = vcmp.eq.f32.partialorder %v144, 8.507059e+37
    %v146 = vand.u32 %v134, 2147483648
    %v147 = vor.u32 1.1754944e-38, %v146
    %v148 = vsel %vm145, %v147, %v143
    %v149 = vmul.f32 1.0, %v148
    %v150 = vtanh.pop %v130
    %v151 = vmul.f32 %v149, 0.0
    %153 = vrot.lane.b32.xlu0 %v150, 64
    %v154 = vpop.permute.xlu0 %153
    %v156 = vmul.f32 %v149, %v154
    %158 = vrot.lane.b32.xlu0 %v156, 32
    %v159 = vpop.permute.xlu0 %158
    %v161 = vadd.f32 %v151, %v159
    %v162 = vtanh.pop %v161
    %164 = vrot.lane.b32.xlu0 %v162, 64
    %v165 = vpop.permute.xlu0 %164
    %v167 = vmul.f32 %v149, %v165
    %168 = vmatpush.msra.mxu0 0.0
    %169 = vmatpush.msra.mxu0 0.0
    %170 = vmatpush.msra.mxu0 0.0
    %171 = vmatpush.msra.mxu0 0.0
    %172 = vmatpush.msra.mxu0 0.0
    %173 = vmatpush.msra.mxu0 0.0
    %174 = vmatpush.msra.mxu0 0.0
    %175 = vmatpush.msra.mxu0 0.0
    %176 = vmatpush.msra.mxu0 0.0
    %177 = vmatpush.msra.mxu0 0.0
    %178 = vmatpush.msra.mxu0 0.0
    %179 = vmatpush.msra.mxu0 0.0
    %180 = vmatpush.msra.mxu0 %v105
    %181 = vmatpush.msra.mxu0 %v104
    %182 = vmatpush.msra.mxu0 %v103
    %183 = vmatpush.msra.mxu0 %v102
    %184 = vmatmul.f32.gmra.mxu0 %v108
    %v185 = vpop.f32.mrf.mxu0
    %v186 = vadd.f32 0.0, %v185
    %187 = vdwg.mxu0
    %v189 = vrot.slane %v186, 2
    %v191 = vadd.f32 %v96, %v189
    %v192 = vxor.u32 %v191, 2147483648
    %v193 = vmul.f32 %v192, 1.442695
    %v194 = vpow.pop %v193
    %v195 = vadd.f32 %v194, 1.0
    %v196 = vrcp.pop %v195
    %v197 = vmul.f32 %v195, %v196
    %v198 = vsub.f32 1.0, %v197
    %v199 = vmul.f32 %v196, %v198
    %v200 = vadd.f32 %v196, %v199
    %vm201 = vweird.f32 %v195
    %vm202 = vweird.f32 %v196
    %vm203 = vmor %vm201, %vm202
    %v204 = vsel %vm203, %v196, %v200
    %v205 = vand.u32 2147483647, %v195
    %vm206 = vcmp.eq.f32.partialorder %v205, 8.507059e+37
    %v207 = vand.u32 %v195, 2147483648
    %v208 = vor.u32 1.1754944e-38, %v207
    %v209 = vsel %vm206, %v208, %v204
    %v210 = vmul.f32 1.0, %v209
    %v211 = vtanh.pop %v191
    %v212 = vmul.f32 %v210, 0.0
    %214 = vrot.lane.b32.xlu0 %v211, 64
    %v215 = vpop.permute.xlu0 %214
    %v217 = vmul.f32 %v210, %v215
    %219 = vrot.lane.b32.xlu0 %v217, 32
    %v220 = vpop.permute.xlu0 %219
    %v222 = vadd.f32 %v212, %v220
    %v223 = vtanh.pop %v222
    %225 = vrot.lane.b32.xlu0 %v223, 64
    %v226 = vpop.permute.xlu0 %225
    %v228 = vmul.f32 %v210, %v226
    %230 = vrot.lane.b32.xlu0 %v167, 32
    %v231 = vpop.permute.xlu0 %230
    %vm233 = vcmask 254976
    %234 = vst.msk [vmem:[#allocation2] sm:$0x3] %vm233, %v231
    %236 = vrot.lane.b32.xlu0 %v228, 64
    %v237 = vpop.permute.xlu0 %236
    %vm239 = vcmask 523526
    %240 = vst.msk [vmem:[#allocation2 + $0x8] sm:$0xc0] %vm239, %v237
    %v241 = vsel %vm106, %v231, 0
    %243 = vmatpush.msra.mxu0 0.0
    %244 = vmatpush.msra.mxu0 0.0
    %245 = vmatpush.msra.mxu0 0.0
    %246 = vmatpush.msra.mxu0 0.0
    %247 = vmatpush.msra.mxu0 0.0
    %248 = vmatpush.msra.mxu0 0.0
    %249 = vmatpush.msra.mxu0 0.0
    %250 = vmatpush.msra.mxu0 0.0
    %251 = vmatpush.msra.mxu0 0.0
    %252 = vmatpush.msra.mxu0 0.0
    %253 = vmatpush.msra.mxu0 0.0
    %254 = vmatpush.msra.mxu0 0.0
    %255 = vmatpush.msra.mxu0 %v101
    %256 = vmatpush.msra.mxu0 %v100
    %257 = vmatpush.msra.mxu0 %v99
    %258 = vmatpush.msra.mxu0 %v98
    %259 = vmatmul.f32.gmra.mxu0 %v241
    %v260 = vpop.f32.mrf.mxu0
    %v261 = vadd.f32 0.0, %v260
    %262 = vdwg.mxu0
    %v264 = vrot.slane %v261, 6
    %v266 = vadd.f32 %v70, %v264
    %v267 = vxor.u32 %v266, 2147483648
    %v268 = vmul.f32 %v267, 1.442695
    %v269 = vpow.pop %v268
    %v270 = vadd.f32 %v269, 1.0
    %v271 = vrcp.pop %v270
    %v272 = vmul.f32 %v270, %v271
    %v273 = vsub.f32 1.0, %v272
    %v274 = vmul.f32 %v271, %v273
    %v275 = vadd.f32 %v271, %v274
    %vm276 = vweird.f32 %v270
    %vm277 = vweird.f32 %v271
    %vm278 = vmor %vm276, %vm277
    %v279 = vsel %vm278, %v271, %v275
    %v280 = vand.u32 2147483647, %v270
    %vm281 = vcmp.eq.f32.partialorder %v280, 8.507059e+37
    %v282 = vand.u32 %v270, 2147483648
    %v283 = vor.u32 1.1754944e-38, %v282
    %v284 = vsel %vm281, %v283, %v279
    %v285 = vmul.f32 1.0, %v284
    %v286 = vtanh.pop %v266
    %v288 = vrot.slane %v161, 6
    %v290 = vmul.f32 %v285, %v288
    %292 = vrot.lane.b32.xlu0 %v286, 64
    %v293 = vpop.permute.xlu0 %292
    %v295 = vmul.f32 %v285, %v293
    %297 = vrot.lane.b32.xlu0 %v295, 32
    %v298 = vpop.permute.xlu0 %297
    %v300 = vadd.f32 %v290, %v298
    %v301 = vtanh.pop %v300
    %303 = vrot.lane.b32.xlu0 %v301, 64
    %v304 = vpop.permute.xlu0 %303
    %v306 = vmul.f32 %v285, %v304
    %v307 = vrot.slane %v228, 6
    %308 = vrot.lane.b32.xlu0 %v307, 32
    %v309 = vpop.permute.xlu0 %308
    %v310 = vsel %vm106, %v309, 0
    %312 = vmatpush.msra.mxu0 0.0
    %313 = vmatpush.msra.mxu0 0.0
    %314 = vmatpush.msra.mxu0 0.0
    %315 = vmatpush.msra.mxu0 0.0
    %316 = vmatpush.msra.mxu0 0.0
    %317 = vmatpush.msra.mxu0 0.0
    %318 = vmatpush.msra.mxu0 0.0
    %319 = vmatpush.msra.mxu0 0.0
    %320 = vmatpush.msra.mxu0 0.0
    %321 = vmatpush.msra.mxu0 0.0
    %322 = vmatpush.msra.mxu0 0.0
    %323 = vmatpush.msra.mxu0 0.0
    %324 = vmatpush.msra.mxu0 %v105
    %325 = vmatpush.msra.mxu0 %v104
    %326 = vmatpush.msra.mxu0 %v103
    %327 = vmatpush.msra.mxu0 %v102
    %328 = vmatmul.f32.gmra.mxu0 %v310
    %v329 = vpop.f32.mrf.mxu0
    %v330 = vadd.f32 0.0, %v329
    %331 = vdwg.mxu0
    %v333 = vrot.slane %v330, 4
    %v335 = vadd.f32 %v96, %v333
    %v336 = vxor.u32 %v335, 2147483648
    %v337 = vmul.f32 %v336, 1.442695
    %v338 = vpow.pop %v337
    %v339 = vadd.f32 %v338, 1.0
    %v340 = vrcp.pop %v339
    %v341 = vmul.f32 %v339, %v340
    %v342 = vsub.f32 1.0, %v341
    %v343 = vmul.f32 %v340, %v342
    %v344 = vadd.f32 %v340, %v343
    %vm345 = vweird.f32 %v339
    %vm346 = vweird.f32 %v340
    %vm347 = vmor %vm345, %vm346
    %v348 = vsel %vm347, %v340, %v344
    %v349 = vand.u32 2147483647, %v339
    %vm350 = vcmp.eq.f32.partialorder %v349, 8.507059e+37
    %v351 = vand.u32 %v339, 2147483648
    %v352 = vor.u32 1.1754944e-38, %v351
    %v353 = vsel %vm350, %v352, %v348
    %v354 = vmul.f32 1.0, %v353
    %v355 = vtanh.pop %v335
    %v357 = vrot.slane %v222, 2
    %v359 = vmul.f32 %v354, %v357
    %361 = vrot.lane.b32.xlu0 %v355, 64
    %v362 = vpop.permute.xlu0 %361
    %v364 = vmul.f32 %v354, %v362
    %366 = vrot.lane.b32.xlu0 %v364, 32
    %v367 = vpop.permute.xlu0 %366
    %v369 = vadd.f32 %v359, %v367
    %v370 = vtanh.pop %v369
    %372 = vrot.lane.b32.xlu0 %v370, 64
    %v373 = vpop.permute.xlu0 %372
    %v375 = vmul.f32 %v354, %v373
    %377 = vrot.lane.b32.xlu0 %v306, 32
    %v378 = vpop.permute.xlu0 %377
    %vm380 = vcmask 257026
    %381 = vst.msk [vmem:[#allocation2] sm:$0xc] %vm380, %v378
    %383 = vrot.lane.b32.xlu0 %v375, 64
    %v384 = vpop.permute.xlu0 %383
    %vm386 = vcmask 521476
    %387 = vst.msk [vmem:[#allocation2 + $0x8] sm:$0x30] %vm386, %v384
    %v388 = vrot.slane %v306, 2
    %389 = vrot.lane.b32.xlu0 %v388, 32
    %v390 = vpop.permute.xlu0 %389
    %v391 = vsel %vm106, %v390, 0
    %393 = vmatpush.msra.mxu0 0.0
    %394 = vmatpush.msra.mxu0 0.0
    %395 = vmatpush.msra.mxu0 0.0
    %396 = vmatpush.msra.mxu0 0.0
    %397 = vmatpush.msra.mxu0 0.0
    %398 = vmatpush.msra.mxu0 0.0
    %399 = vmatpush.msra.mxu0 0.0
    %400 = vmatpush.msra.mxu0 0.0
    %401 = vmatpush.msra.mxu0 0.0
    %402 = vmatpush.msra.mxu0 0.0
    %403 = vmatpush.msra.mxu0 0.0
    %404 = vmatpush.msra.mxu0 0.0
    %405 = vmatpush.msra.mxu0 %v101
    %406 = vmatpush.msra.mxu0 %v100
    %407 = vmatpush.msra.mxu0 %v99
    %408 = vmatpush.msra.mxu0 %v98
    %409 = vmatmul.f32.gmra.mxu0 %v391
    %v410 = vpop.f32.mrf.mxu0
    %v411 = vadd.f32 0.0, %v410
    %412 = vdwg.mxu0
    %v414 = vrot.slane %v411, 4
    %v416 = vadd.f32 %v70, %v414
    %v417 = vxor.u32 %v416, 2147483648
    %v418 = vmul.f32 %v417, 1.442695
    %v419 = vpow.pop %v418
    %v420 = vadd.f32 %v419, 1.0
    %v421 = vrcp.pop %v420
    %v422 = vmul.f32 %v420, %v421
    %v423 = vsub.f32 1.0, %v422
    %v424 = vmul.f32 %v421, %v423
    %v425 = vadd.f32 %v421, %v424
    %vm426 = vweird.f32 %v420
    %vm427 = vweird.f32 %v421
    %vm428 = vmor %vm426, %vm427
    %v429 = vsel %vm428, %v421, %v425
    %v430 = vand.u32 2147483647, %v420
    %vm431 = vcmp.eq.f32.partialorder %v430, 8.507059e+37
    %v432 = vand.u32 %v420, 2147483648
    %v433 = vor.u32 1.1754944e-38, %v432
    %v434 = vsel %vm431, %v433, %v429
    %v435 = vmul.f32 1.0, %v434
    %v436 = vtanh.pop %v416
    %v438 = vrot.slane %v300, 6
    %v440 = vmul.f32 %v435, %v438
    %442 = vrot.lane.b32.xlu0 %v436, 64
    %v443 = vpop.permute.xlu0 %442
    %v445 = vmul.f32 %v435, %v443
    %447 = vrot.lane.b32.xlu0 %v445, 32
    %v448 = vpop.permute.xlu0 %447
    %v450 = vadd.f32 %v440, %v448
    %v451 = vtanh.pop %v450
    %453 = vrot.lane.b32.xlu0 %v451, 64
    %v454 = vpop.permute.xlu0 %453
    %v456 = vmul.f32 %v435, %v454
    %v457 = vrot.slane %v375, 4
    %458 = vrot.lane.b32.xlu0 %v457, 32
    %v459 = vpop.permute.xlu0 %458
    %v460 = vsel %vm106, %v459, 0
    %462 = vmatpush.msra.mxu0 0.0
    %463 = vmatpush.msra.mxu0 0.0
    %464 = vmatpush.msra.mxu0 0.0
    %465 = vmatpush.msra.mxu0 0.0
    %466 = vmatpush.msra.mxu0 0.0
    %467 = vmatpush.msra.mxu0 0.0
    %468 = vmatpush.msra.mxu0 0.0
    %469 = vmatpush.msra.mxu0 0.0
    %470 = vmatpush.msra.mxu0 0.0
    %471 = vmatpush.msra.mxu0 0.0
    %472 = vmatpush.msra.mxu0 0.0
    %473 = vmatpush.msra.mxu0 0.0
    %474 = vmatpush.msra.mxu0 %v105
    %475 = vmatpush.msra.mxu0 %v104
    %476 = vmatpush.msra.mxu0 %v103
    %477 = vmatpush.msra.mxu0 %v102
    %478 = vmatmul.f32.gmra.mxu0 %v460
    %v479 = vpop.f32.mrf.mxu0
    %v480 = vadd.f32 0.0, %v479
    %481 = vdwg.mxu0
    %v483 = vrot.slane %v480, 6
    %v485 = vadd.f32 %v96, %v483
    %v486 = vxor.u32 %v485, 2147483648
    %v487 = vmul.f32 %v486, 1.442695
    %v488 = vpow.pop %v487
    %v489 = vadd.f32 %v488, 1.0
    %v490 = vrcp.pop %v489
    %v491 = vmul.f32 %v489, %v490
    %v492 = vsub.f32 1.0, %v491
    %v493 = vmul.f32 %v490, %v492
    %v494 = vadd.f32 %v490, %v493
    %vm495 = vweird.f32 %v489
    %vm496 = vweird.f32 %v490
    %vm497 = vmor %vm495, %vm496
    %v498 = vsel %vm497, %v490, %v494
    %v499 = vand.u32 2147483647, %v489
    %vm500 = vcmp.eq.f32.partialorder %v499, 8.507059e+37
    %v501 = vand.u32 %v489, 2147483648
    %v502 = vor.u32 1.1754944e-38, %v501
    %v503 = vsel %vm500, %v502, %v498
    %v504 = vmul.f32 1.0, %v503
    %v505 = vtanh.pop %v485
    %v507 = vrot.slane %v369, 2
    %v509 = vmul.f32 %v504, %v507
    %511 = vrot.lane.b32.xlu0 %v505, 64
    %v512 = vpop.permute.xlu0 %511
    %v514 = vmul.f32 %v504, %v512
    %516 = vrot.lane.b32.xlu0 %v514, 32
    %v517 = vpop.permute.xlu0 %516
    %v519 = vadd.f32 %v509, %v517
    %v520 = vtanh.pop %v519
    %522 = vrot.lane.b32.xlu0 %v520, 64
    %v523 = vpop.permute.xlu0 %522
    %v525 = vmul.f32 %v504, %v523
    %527 = vrot.lane.b32.xlu0 %v456, 32
    %v528 = vpop.permute.xlu0 %527
    %vm530 = vcmask 259076
    %531 = vst.msk [vmem:[#allocation2] sm:$0x30] %vm530, %v528
    %533 = vrot.lane.b32.xlu0 %v525, 64
    %v534 = vpop.permute.xlu0 %533
    %vm536 = vcmask 519426
    %537 = vst.msk [vmem:[#allocation2 + $0x8] sm:$0xc] %vm536, %v534
    %v538 = vrot.slane %v456, 4
    %539 = vrot.lane.b32.xlu0 %v538, 32
    %v540 = vpop.permute.xlu0 %539
    %v541 = vsel %vm106, %v540, 0
    %543 = vmatpush.msra.mxu0 0.0
    %544 = vmatpush.msra.mxu0 0.0
    %545 = vmatpush.msra.mxu0 0.0
    %546 = vmatpush.msra.mxu0 0.0
    %547 = vmatpush.msra.mxu0 0.0
    %548 = vmatpush.msra.mxu0 0.0
    %549 = vmatpush.msra.mxu0 0.0
    %550 = vmatpush.msra.mxu0 0.0
    %551 = vmatpush.msra.mxu0 0.0
    %552 = vmatpush.msra.mxu0 0.0
    %553 = vmatpush.msra.mxu0 0.0
    %554 = vmatpush.msra.mxu0 0.0
    %555 = vmatpush.msra.mxu0 %v101
    %556 = vmatpush.msra.mxu0 %v100
    %557 = vmatpush.msra.mxu0 %v99
    %558 = vmatpush.msra.mxu0 %v98
    %559 = vmatmul.f32.gmra.mxu0 %v541
    %v560 = vpop.f32.mrf.mxu0
    %v561 = vadd.f32 0.0, %v560
    %562 = vdwg.mxu0
    %v564 = vrot.slane %v561, 2
    %v566 = vadd.f32 %v70, %v564
    %v567 = vxor.u32 %v566, 2147483648
    %v568 = vmul.f32 %v567, 1.442695
    %v569 = vpow.pop %v568
    %v570 = vadd.f32 %v569, 1.0
    %v571 = vrcp.pop %v570
    %v572 = vmul.f32 %v570, %v571
    %v573 = vsub.f32 1.0, %v572
    %v574 = vmul.f32 %v571, %v573
    %v575 = vadd.f32 %v571, %v574
    %vm576 = vweird.f32 %v570
    %vm577 = vweird.f32 %v571
    %vm578 = vmor %vm576, %vm577
    %v579 = vsel %vm578, %v571, %v575
    %v580 = vand.u32 2147483647, %v570
    %vm581 = vcmp.eq.f32.partialorder %v580, 8.507059e+37
    %v582 = vand.u32 %v570, 2147483648
    %v583 = vor.u32 1.1754944e-38, %v582
    %v584 = vsel %vm581, %v583, %v579
    %v585 = vmul.f32 1.0, %v584
    %v586 = vtanh.pop %v566
    %v588 = vrot.slane %v450, 6
    %v590 = vmul.f32 %v585, %v588
    %592 = vrot.lane.b32.xlu0 %v586, 64
    %v593 = vpop.permute.xlu0 %592
    %v595 = vmul.f32 %v585, %v593
    %597 = vrot.lane.b32.xlu0 %v595, 32
    %v598 = vpop.permute.xlu0 %597
    %v600 = vadd.f32 %v590, %v598
    %v601 = vtanh.pop %v600
    %603 = vrot.lane.b32.xlu0 %v601, 64
    %v604 = vpop.permute.xlu0 %603
    %v606 = vmul.f32 %v585, %v604
    %v607 = vrot.slane %v525, 2
    %608 = vrot.lane.b32.xlu0 %v607, 32
    %v609 = vpop.permute.xlu0 %608
    %v610 = vsel %vm106, %v609, 0
    %612 = vmatpush.msra.mxu0 0.0
    %613 = vmatpush.msra.mxu0 0.0
    %614 = vmatpush.msra.mxu0 0.0
    %615 = vmatpush.msra.mxu0 0.0
    %616 = vmatpush.msra.mxu0 0.0
    %617 = vmatpush.msra.mxu0 0.0
    %618 = vmatpush.msra.mxu0 0.0
    %619 = vmatpush.msra.mxu0 0.0
    %620 = vmatpush.msra.mxu0 0.0
    %621 = vmatpush.msra.mxu0 0.0
    %622 = vmatpush.msra.mxu0 0.0
    %623 = vmatpush.msra.mxu0 0.0
    %624 = vmatpush.msra.mxu0 %v105
    %625 = vmatpush.msra.mxu0 %v104
    %626 = vmatpush.msra.mxu0 %v103
    %627 = vmatpush.msra.mxu0 %v102
    %628 = vmatmul.f32.gmra.mxu0 %v610
    %v629 = vpop.f32.mrf.mxu0
    %v630 = vadd.f32 0.0, %v629
    %631 = vdwg.mxu0
    %v632 = vadd.f32 %v96, %v630
    %v633 = vxor.u32 %v632, 2147483648
    %v634 = vmul.f32 %v633, 1.442695
    %v635 = vpow.pop %v634
    %v636 = vadd.f32 %v635, 1.0
    %v637 = vrcp.pop %v636
    %v638 = vmul.f32 %v636, %v637
    %v639 = vsub.f32 1.0, %v638
    %v640 = vmul.f32 %v637, %v639
    %v641 = vadd.f32 %v637, %v640
    %vm642 = vweird.f32 %v636
    %vm643 = vweird.f32 %v637
    %vm644 = vmor %vm642, %vm643
    %v645 = vsel %vm644, %v637, %v641
    %v646 = vand.u32 2147483647, %v636
    %vm647 = vcmp.eq.f32.partialorder %v646, 8.507059e+37
    %v648 = vand.u32 %v636, 2147483648
    %v649 = vor.u32 1.1754944e-38, %v648
    %v650 = vsel %vm647, %v649, %v645
    %v651 = vmul.f32 1.0, %v650
    %v652 = vtanh.pop %v632
    %v654 = vrot.slane %v519, 2
    %v656 = vmul.f32 %v651, %v654
    %658 = vrot.lane.b32.xlu0 %v652, 64
    %v659 = vpop.permute.xlu0 %658
    %v661 = vmul.f32 %v651, %v659
    %663 = vrot.lane.b32.xlu0 %v661, 32
    %v664 = vpop.permute.xlu0 %663
    %v666 = vadd.f32 %v656, %v664
    %v667 = vtanh.pop %v666
    %669 = vrot.lane.b32.xlu0 %v667, 64
    %v670 = vpop.permute.xlu0 %669
    %v672 = vmul.f32 %v651, %v670
    %674 = vrot.lane.b32.xlu0 %v606, 32
    %v675 = vpop.permute.xlu0 %674
    %vm677 = vcmask 261126
    %678 = vst.msk [vmem:[#allocation2] sm:$0xc0] %vm677, %v675
    %680 = vrot.lane.b32.xlu0 %v672, 64
    %v681 = vpop.permute.xlu0 %680
    %vm683 = vcmask 517376
    %684 = vst.msk [vmem:[#allocation2 + $0x8] sm:$0x3] %vm683, %v681
    %v685 = vrot.slane %v606, 6
    %686 = vrot.lane.b32.xlu0 %v685, 32
    %v687 = vpop.permute.xlu0 %686
    %v688 = vsel %vm106, %v687, 0
    %690 = vmatpush.msra.mxu0 0.0
    %691 = vmatpush.msra.mxu0 0.0
    %692 = vmatpush.msra.mxu0 0.0
    %693 = vmatpush.msra.mxu0 0.0
    %694 = vmatpush.msra.mxu0 0.0
    %695 = vmatpush.msra.mxu0 0.0
    %696 = vmatpush.msra.mxu0 0.0
    %697 = vmatpush.msra.mxu0 0.0
    %698 = vmatpush.msra.mxu0 0.0
    %699 = vmatpush.msra.mxu0 0.0
    %700 = vmatpush.msra.mxu0 0.0
    %701 = vmatpush.msra.mxu0 0.0
    %702 = vmatpush.msra.mxu0 %v101
    %703 = vmatpush.msra.mxu0 %v100
    %704 = vmatpush.msra.mxu0 %v99
    %705 = vmatpush.msra.mxu0 %v98
    %706 = vmatmul.f32.gmra.mxu0 %v688
    %v707 = vpop.f32.mrf.mxu0
    %v708 = vadd.f32 0.0, %v707
    %709 = vdwg.mxu0
    %v710 = vadd.f32 %v73, %v708
    %v711 = vxor.u32 %v710, 2147483648
    %v712 = vmul.f32 %v711, 1.442695
    %v713 = vpow.pop %v712
    %v714 = vadd.f32 %v713, 1.0
    %v715 = vrcp.pop %v714
    %v716 = vmul.f32 %v714, %v715
    %v717 = vsub.f32 1.0, %v716
    %v718 = vmul.f32 %v715, %v717
    %v719 = vadd.f32 %v715, %v718
    %vm720 = vweird.f32 %v714
    %vm721 = vweird.f32 %v715
    %vm722 = vmor %vm720, %vm721
    %v723 = vsel %vm722, %v715, %v719
    %v724 = vand.u32 2147483647, %v714
    %vm725 = vcmp.eq.f32.partialorder %v724, 8.507059e+37
    %v726 = vand.u32 %v714, 2147483648
    %v727 = vor.u32 1.1754944e-38, %v726
    %v728 = vsel %vm725, %v727, %v723
    %v729 = vmul.f32 1.0, %v728
    %v730 = vtanh.pop %v710
    %v732 = vrot.slane %v600, 6
    %v734 = vmul.f32 %v729, %v732
    %736 = vrot.lane.b32.xlu0 %v730, 64
    %v737 = vpop.permute.xlu0 %736
    %v739 = vmul.f32 %v729, %v737
    %741 = vrot.lane.b32.xlu0 %v739, 32
    %v742 = vpop.permute.xlu0 %741
    %v744 = vadd.f32 %v734, %v742
    %v745 = vtanh.pop %v744
    %747 = vrot.lane.b32.xlu0 %v745, 64
    %v748 = vpop.permute.xlu0 %747
    %v750 = vmul.f32 %v729, %v748
    %751 = vrot.lane.b32.xlu0 %v672, 32
    %v752 = vpop.permute.xlu0 %751
    %v753 = vsel %vm106, %v752, 0
    %755 = vmatpush.msra.mxu0 0.0
    %756 = vmatpush.msra.mxu0 0.0
    %757 = vmatpush.msra.mxu0 0.0
    %758 = vmatpush.msra.mxu0 0.0
    %759 = vmatpush.msra.mxu0 0.0
    %760 = vmatpush.msra.mxu0 0.0
    %761 = vmatpush.msra.mxu0 0.0
    %762 = vmatpush.msra.mxu0 0.0
    %763 = vmatpush.msra.mxu0 0.0
    %764 = vmatpush.msra.mxu0 0.0
    %765 = vmatpush.msra.mxu0 0.0
    %766 = vmatpush.msra.mxu0 0.0
    %767 = vmatpush.msra.mxu0 %v105
    %768 = vmatpush.msra.mxu0 %v104
    %769 = vmatpush.msra.mxu0 %v103
    %770 = vmatpush.msra.mxu0 %v102
    %771 = vmatmul.f32.gmra.mxu0 %v753
    %v772 = vpop.f32.mrf.mxu0
    %v773 = vadd.f32 0.0, %v772
    %774 = vdwg.mxu0
    %v776 = vrot.slane %v773, 2
    %v778 = vadd.f32 %v93, %v776
    %v779 = vxor.u32 %v778, 2147483648
    %v780 = vmul.f32 %v779, 1.442695
    %v781 = vpow.pop %v780
    %v782 = vadd.f32 %v781, 1.0
    %v783 = vrcp.pop %v782
    %v784 = vmul.f32 %v782, %v783
    %v785 = vsub.f32 1.0, %v784
    %v786 = vmul.f32 %v783, %v785
    %v787 = vadd.f32 %v783, %v786
    %vm788 = vweird.f32 %v782
    %vm789 = vweird.f32 %v783
    %vm790 = vmor %vm788, %vm789
    %v791 = vsel %vm790, %v783, %v787
    %v792 = vand.u32 2147483647, %v782
    %vm793 = vcmp.eq.f32.partialorder %v792, 8.507059e+37
    %v794 = vand.u32 %v782, 2147483648
    %v795 = vor.u32 1.1754944e-38, %v794
    %v796 = vsel %vm793, %v795, %v791
    %v797 = vmul.f32 1.0, %v796
    %v798 = vtanh.pop %v778
    %v800 = vrot.slane %v666, 2
    %v802 = vmul.f32 %v797, %v800
    %804 = vrot.lane.b32.xlu0 %v798, 64
    %v805 = vpop.permute.xlu0 %804
    %v807 = vmul.f32 %v797, %v805
    %809 = vrot.lane.b32.xlu0 %v807, 32
    %v810 = vpop.permute.xlu0 %809
    %v812 = vadd.f32 %v802, %v810
    %v813 = vtanh.pop %v812
    %815 = vrot.lane.b32.xlu0 %v813, 64
    %v816 = vpop.permute.xlu0 %815
    %v818 = vmul.f32 %v797, %v816
    %820 = vrot.lane.b32.xlu0 %v750, 32
    %v821 = vpop.permute.xlu0 %820
    %823 = vst.msk [vmem:[#allocation2 + $0x8] sm:$0x3] %vm233, %v821
    %825 = vrot.lane.b32.xlu0 %v818, 64
    %v826 = vpop.permute.xlu0 %825
    %828 = vst.msk [vmem:[#allocation2] sm:$0xc0] %vm239, %v826
    %v829 = vsel %vm106, %v821, 0
    %831 = vmatpush.msra.mxu0 0.0
    %832 = vmatpush.msra.mxu0 0.0
    %833 = vmatpush.msra.mxu0 0.0
    %834 = vmatpush.msra.mxu0 0.0
    %835 = vmatpush.msra.mxu0 0.0
    %836 = vmatpush.msra.mxu0 0.0
    %837 = vmatpush.msra.mxu0 0.0
    %838 = vmatpush.msra.mxu0 0.0
    %839 = vmatpush.msra.mxu0 0.0
    %840 = vmatpush.msra.mxu0 0.0
    %841 = vmatpush.msra.mxu0 0.0
    %842 = vmatpush.msra.mxu0 0.0
    %843 = vmatpush.msra.mxu0 %v101
    %844 = vmatpush.msra.mxu0 %v100
    %845 = vmatpush.msra.mxu0 %v99
    %846 = vmatpush.msra.mxu0 %v98
    %847 = vmatmul.f32.gmra.mxu0 %v829
    %v848 = vpop.f32.mrf.mxu0
    %v849 = vadd.f32 0.0, %v848
    %850 = vdwg.mxu0
    %v852 = vrot.slane %v849, 6
    %v854 = vadd.f32 %v73, %v852
    %v855 = vxor.u32 %v854, 2147483648
    %v856 = vmul.f32 %v855, 1.442695
    %v857 = vpow.pop %v856
    %v858 = vadd.f32 %v857, 1.0
    %v859 = vrcp.pop %v858
    %v860 = vmul.f32 %v858, %v859
    %v861 = vsub.f32 1.0, %v860
    %v862 = vmul.f32 %v859, %v861
    %v863 = vadd.f32 %v859, %v862
    %vm864 = vweird.f32 %v858
    %vm865 = vweird.f32 %v859
    %vm866 = vmor %vm864, %vm865
    %v867 = vsel %vm866, %v859, %v863
    %v868 = vand.u32 2147483647, %v858
    %vm869 = vcmp.eq.f32.partialorder %v868, 8.507059e+37
    %v870 = vand.u32 %v858, 2147483648
    %v871 = vor.u32 1.1754944e-38, %v870
    %v872 = vsel %vm869, %v871, %v867
    %v873 = vmul.f32 1.0, %v872
    %v874 = vtanh.pop %v854
    %v876 = vrot.slane %v744, 6
    %v878 = vmul.f32 %v873, %v876
    %880 = vrot.lane.b32.xlu0 %v874, 64
    %v881 = vpop.permute.xlu0 %880
    %v883 = vmul.f32 %v873, %v881
    %885 = vrot.lane.b32.xlu0 %v883, 32
    %v886 = vpop.permute.xlu0 %885
    %v888 = vadd.f32 %v878, %v886
    %v889 = vtanh.pop %v888
    %891 = vrot.lane.b32.xlu0 %v889, 64
    %v892 = vpop.permute.xlu0 %891
    %v894 = vmul.f32 %v873, %v892
    %v895 = vrot.slane %v818, 6
    %896 = vrot.lane.b32.xlu0 %v895, 32
    %v897 = vpop.permute.xlu0 %896
    %v898 = vsel %vm106, %v897, 0
    %900 = vmatpush.msra.mxu0 0.0
    %901 = vmatpush.msra.mxu0 0.0
    %902 = vmatpush.msra.mxu0 0.0
    %903 = vmatpush.msra.mxu0 0.0
    %904 = vmatpush.msra.mxu0 0.0
    %905 = vmatpush.msra.mxu0 0.0
    %906 = vmatpush.msra.mxu0 0.0
    %907 = vmatpush.msra.mxu0 0.0
    %908 = vmatpush.msra.mxu0 0.0
    %909 = vmatpush.msra.mxu0 0.0
    %910 = vmatpush.msra.mxu0 0.0
    %911 = vmatpush.msra.mxu0 0.0
    %912 = vmatpush.msra.mxu0 %v105
    %913 = vmatpush.msra.mxu0 %v104
    %914 = vmatpush.msra.mxu0 %v103
    %915 = vmatpush.msra.mxu0 %v102
    %916 = vmatmul.f32.gmra.mxu0 %v898
    %v917 = vpop.f32.mrf.mxu0
    %v918 = vadd.f32 0.0, %v917
    %919 = vdwg.mxu0
    %v921 = vrot.slane %v918, 4
    %v923 = vadd.f32 %v93, %v921
    %v924 = vxor.u32 %v923, 2147483648
    %v925 = vmul.f32 %v924, 1.442695
    %v926 = vpow.pop %v925
    %v927 = vadd.f32 %v926, 1.0
    %v928 = vrcp.pop %v927
    %v929 = vmul.f32 %v927, %v928
    %v930 = vsub.f32 1.0, %v929
    %v931 = vmul.f32 %v928, %v930
    %v932 = vadd.f32 %v928, %v931
    %vm933 = vweird.f32 %v927
    %vm934 = vweird.f32 %v928
    %vm935 = vmor %vm933, %vm934
    %v936 = vsel %vm935, %v928, %v932
    %v937 = vand.u32 2147483647, %v927
    %vm938 = vcmp.eq.f32.partialorder %v937, 8.507059e+37
    %v939 = vand.u32 %v927, 2147483648
    %v940 = vor.u32 1.1754944e-38, %v939
    %v941 = vsel %vm938, %v940, %v936
    %v942 = vmul.f32 1.0, %v941
    %v943 = vtanh.pop %v923
    %v945 = vrot.slane %v812, 2
    %v947 = vmul.f32 %v942, %v945
    %949 = vrot.lane.b32.xlu0 %v943, 64
    %v950 = vpop.permute.xlu0 %949
    %v952 = vmul.f32 %v942, %v950
    %954 = vrot.lane.b32.xlu0 %v952, 32
    %v955 = vpop.permute.xlu0 %954
    %v957 = vadd.f32 %v947, %v955
    %v958 = vtanh.pop %v957
    %960 = vrot.lane.b32.xlu0 %v958, 64
    %v961 = vpop.permute.xlu0 %960
    %v963 = vmul.f32 %v942, %v961
    %965 = vrot.lane.b32.xlu0 %v894, 32
    %v966 = vpop.permute.xlu0 %965
    %968 = vst.msk [vmem:[#allocation2 + $0x8] sm:$0xc] %vm380, %v966
    %970 = vrot.lane.b32.xlu0 %v963, 64
    %v971 = vpop.permute.xlu0 %970
    %973 = vst.msk [vmem:[#allocation2] sm:$0x30] %vm386, %v971
    %v974 = vrot.slane %v894, 2
    %975 = vrot.lane.b32.xlu0 %v974, 32
    %v976 = vpop.permute.xlu0 %975
    %v977 = vsel %vm106, %v976, 0
    %979 = vmatpush.msra.mxu0 0.0
    %980 = vmatpush.msra.mxu0 0.0
    %981 = vmatpush.msra.mxu0 0.0
    %982 = vmatpush.msra.mxu0 0.0
    %983 = vmatpush.msra.mxu0 0.0
    %984 = vmatpush.msra.mxu0 0.0
    %985 = vmatpush.msra.mxu0 0.0
    %986 = vmatpush.msra.mxu0 0.0
    %987 = vmatpush.msra.mxu0 0.0
    %988 = vmatpush.msra.mxu0 0.0
    %989 = vmatpush.msra.mxu0 0.0
    %990 = vmatpush.msra.mxu0 0.0
    %991 = vmatpush.msra.mxu0 %v101
    %992 = vmatpush.msra.mxu0 %v100
    %993 = vmatpush.msra.mxu0 %v99
    %994 = vmatpush.msra.mxu0 %v98
    %995 = vmatmul.f32.gmra.mxu0 %v977
    %v996 = vpop.f32.mrf.mxu0
    %v997 = vadd.f32 0.0, %v996
    %998 = vdwg.mxu0
    %v1000 = vrot.slane %v997, 4
    %v1002 = vadd.f32 %v73, %v1000
    %v1003 = vxor.u32 %v1002, 2147483648
    %v1004 = vmul.f32 %v1003, 1.442695
    %v1005 = vpow.pop %v1004
    %v1006 = vadd.f32 %v1005, 1.0
    %v1007 = vrcp.pop %v1006
    %v1008 = vmul.f32 %v1006, %v1007
    %v1009 = vsub.f32 1.0, %v1008
    %v1010 = vmul.f32 %v1007, %v1009
    %v1011 = vadd.f32 %v1007, %v1010
    %vm1012 = vweird.f32 %v1006
    %vm1013 = vweird.f32 %v1007
    %vm1014 = vmor %vm1012, %vm1013
    %v1015 = vsel %vm1014, %v1007, %v1011
    %v1016 = vand.u32 2147483647, %v1006
    %vm1017 = vcmp.eq.f32.partialorder %v1016, 8.507059e+37
    %v1018 = vand.u32 %v1006, 2147483648
    %v1019 = vor.u32 1.1754944e-38, %v1018
    %v1020 = vsel %vm1017, %v1019, %v1015
    %v1021 = vmul.f32 1.0, %v1020
    %v1022 = vtanh.pop %v1002
    %v1024 = vrot.slane %v888, 6
    %v1026 = vmul.f32 %v1021, %v1024
    %1028 = vrot.lane.b32.xlu0 %v1022, 64
    %v1029 = vpop.permute.xlu0 %1028
    %v1031 = vmul.f32 %v1021, %v1029
    %1033 = vrot.lane.b32.xlu0 %v1031, 32
    %v1034 = vpop.permute.xlu0 %1033
    %v1036 = vadd.f32 %v1026, %v1034
    %v1037 = vtanh.pop %v1036
    %1039 = vrot.lane.b32.xlu0 %v1037, 64
    %v1040 = vpop.permute.xlu0 %1039
    %v1042 = vmul.f32 %v1021, %v1040
    %v1043 = vrot.slane %v963, 4
    %1044 = vrot.lane.b32.xlu0 %v1043, 32
    %v1045 = vpop.permute.xlu0 %1044
    %v1046 = vsel %vm106, %v1045, 0
    %1048 = vmatpush.msra.mxu0 0.0
    %1049 = vmatpush.msra.mxu0 0.0
    %1050 = vmatpush.msra.mxu0 0.0
    %1051 = vmatpush.msra.mxu0 0.0
    %1052 = vmatpush.msra.mxu0 0.0
    %1053 = vmatpush.msra.mxu0 0.0
    %1054 = vmatpush.msra.mxu0 0.0
    %1055 = vmatpush.msra.mxu0 0.0
    %1056 = vmatpush.msra.mxu0 0.0
    %1057 = vmatpush.msra.mxu0 0.0
    %1058 = vmatpush.msra.mxu0 0.0
    %1059 = vmatpush.msra.mxu0 0.0
    %1060 = vmatpush.msra.mxu0 %v105
    %1061 = vmatpush.msra.mxu0 %v104
    %1062 = vmatpush.msra.mxu0 %v103
    %1063 = vmatpush.msra.mxu0 %v102
    %1064 = vmatmul.f32.gmra.mxu0 %v1046
    %v1065 = vpop.f32.mrf.mxu0
    %v1066 = vadd.f32 0.0, %v1065
    %1067 = vdwg.mxu0
    %v1069 = vrot.slane %v1066, 6
    %v1071 = vadd.f32 %v93, %v1069
    %v1072 = vxor.u32 %v1071, 2147483648
    %v1073 = vmul.f32 %v1072, 1.442695
    %v1074 = vpow.pop %v1073
    %v1075 = vadd.f32 %v1074, 1.0
    %v1076 = vrcp.pop %v1075
    %v1077 = vmul.f32 %v1075, %v1076
    %v1078 = vsub.f32 1.0, %v1077
    %v1079 = vmul.f32 %v1076, %v1078
    %v1080 = vadd.f32 %v1076, %v1079
    %vm1081 = vweird.f32 %v1075
    %vm1082 = vweird.f32 %v1076
    %vm1083 = vmor %vm1081, %vm1082
    %v1084 = vsel %vm1083, %v1076, %v1080
    %v1085 = vand.u32 2147483647, %v1075
    %vm1086 = vcmp.eq.f32.partialorder %v1085, 8.507059e+37
    %v1087 = vand.u32 %v1075, 2147483648
    %v1088 = vor.u32 1.1754944e-38, %v1087
    %v1089 = vsel %vm1086, %v1088, %v1084
    %v1090 = vmul.f32 1.0, %v1089
    %v1091 = vtanh.pop %v1071
    %v1093 = vrot.slane %v957, 2
    %v1095 = vmul.f32 %v1090, %v1093
    %1097 = vrot.lane.b32.xlu0 %v1091, 64
    %v1098 = vpop.permute.xlu0 %1097
    %v1100 = vmul.f32 %v1090, %v1098
    %1102 = vrot.lane.b32.xlu0 %v1100, 32
    %v1103 = vpop.permute.xlu0 %1102
    %v1105 = vadd.f32 %v1095, %v1103
    %v1106 = vtanh.pop %v1105
    %1108 = vrot.lane.b32.xlu0 %v1106, 64
    %v1109 = vpop.permute.xlu0 %1108
    %v1111 = vmul.f32 %v1090, %v1109
    %1113 = vrot.lane.b32.xlu0 %v1042, 32
    %v1114 = vpop.permute.xlu0 %1113
    %1116 = vst.msk [vmem:[#allocation2 + $0x8] sm:$0x30] %vm530, %v1114
    %1118 = vrot.lane.b32.xlu0 %v1111, 64
    %v1119 = vpop.permute.xlu0 %1118
    %1121 = vst.msk [vmem:[#allocation2] sm:$0xc] %vm536, %v1119
    %v1122 = vrot.slane %v1042, 4
    %1123 = vrot.lane.b32.xlu0 %v1122, 32
    %v1124 = vpop.permute.xlu0 %1123
    %v1125 = vsel %vm106, %v1124, 0
    %1127 = vmatpush.msra.mxu0 0.0
    %1128 = vmatpush.msra.mxu0 0.0
    %1129 = vmatpush.msra.mxu0 0.0
    %1130 = vmatpush.msra.mxu0 0.0
    %1131 = vmatpush.msra.mxu0 0.0
    %1132 = vmatpush.msra.mxu0 0.0
    %1133 = vmatpush.msra.mxu0 0.0
    %1134 = vmatpush.msra.mxu0 0.0
    %1135 = vmatpush.msra.mxu0 0.0
    %1136 = vmatpush.msra.mxu0 0.0
    %1137 = vmatpush.msra.mxu0 0.0
    %1138 = vmatpush.msra.mxu0 0.0
    %1139 = vmatpush.msra.mxu0 %v101
    %1140 = vmatpush.msra.mxu0 %v100
    %1141 = vmatpush.msra.mxu0 %v99
    %1142 = vmatpush.msra.mxu0 %v98
    %1143 = vmatmul.f32.gmra.mxu0 %v1125
    %v1144 = vpop.f32.mrf.mxu0
    %v1145 = vadd.f32 0.0, %v1144
    %1146 = vdwg.mxu0
    %v1148 = vrot.slane %v1145, 2
    %v1150 = vadd.f32 %v73, %v1148
    %v1151 = vxor.u32 %v1150, 2147483648
    %v1152 = vmul.f32 %v1151, 1.442695
    %v1153 = vpow.pop %v1152
    %v1154 = vadd.f32 %v1153, 1.0
    %v1155 = vrcp.pop %v1154
    %v1156 = vmul.f32 %v1154, %v1155
    %v1157 = vsub.f32 1.0, %v1156
    %v1158 = vmul.f32 %v1155, %v1157
    %v1159 = vadd.f32 %v1155, %v1158
    %vm1160 = vweird.f32 %v1154
    %vm1161 = vweird.f32 %v1155
    %vm1162 = vmor %vm1160, %vm1161
    %v1163 = vsel %vm1162, %v1155, %v1159
    %v1164 = vand.u32 2147483647, %v1154
    %vm1165 = vcmp.eq.f32.partialorder %v1164, 8.507059e+37
    %v1166 = vand.u32 %v1154, 2147483648
    %v1167 = vor.u32 1.1754944e-38, %v1166
    %v1168 = vsel %vm1165, %v1167, %v1163
    %v1169 = vmul.f32 1.0, %v1168
    %v1170 = vtanh.pop %v1150
    %v1172 = vrot.slane %v1036, 6
    %v1174 = vmul.f32 %v1169, %v1172
    %1176 = vrot.lane.b32.xlu0 %v1170, 64
    %v1177 = vpop.permute.xlu0 %1176
    %v1179 = vmul.f32 %v1169, %v1177
    %1181 = vrot.lane.b32.xlu0 %v1179, 32
    %v1182 = vpop.permute.xlu0 %1181
    %v1184 = vadd.f32 %v1174, %v1182
    %v1185 = vtanh.pop %v1184
    %1187 = vrot.lane.b32.xlu0 %v1185, 64
    %v1188 = vpop.permute.xlu0 %1187
    %v1190 = vmul.f32 %v1169, %v1188
    %v1191 = vrot.slane %v1111, 2
    %1192 = vrot.lane.b32.xlu0 %v1191, 32
    %v1193 = vpop.permute.xlu0 %1192
    %v1194 = vsel %vm106, %v1193, 0
    %1196 = vmatpush.msra.mxu0 0.0
    %1197 = vmatpush.msra.mxu0 0.0
    %1198 = vmatpush.msra.mxu0 0.0
    %1199 = vmatpush.msra.mxu0 0.0
    %1200 = vmatpush.msra.mxu0 0.0
    %1201 = vmatpush.msra.mxu0 0.0
    %1202 = vmatpush.msra.mxu0 0.0
    %1203 = vmatpush.msra.mxu0 0.0
    %1204 = vmatpush.msra.mxu0 0.0
    %1205 = vmatpush.msra.mxu0 0.0
    %1206 = vmatpush.msra.mxu0 0.0
    %1207 = vmatpush.msra.mxu0 0.0
    %1208 = vmatpush.msra.mxu0 %v105
    %1209 = vmatpush.msra.mxu0 %v104
    %1210 = vmatpush.msra.mxu0 %v103
    %1211 = vmatpush.msra.mxu0 %v102
    %1212 = vmatmul.f32.gmra.mxu0 %v1194
    %v1213 = vpop.f32.mrf.mxu0
    %v1214 = vadd.f32 0.0, %v1213
    %1215 = vdwg.mxu0
    %v1216 = vadd.f32 %v93, %v1214
    %v1217 = vxor.u32 %v1216, 2147483648
    %v1218 = vmul.f32 %v1217, 1.442695
    %v1219 = vpow.pop %v1218
    %v1220 = vadd.f32 %v1219, 1.0
    %v1221 = vrcp.pop %v1220
    %v1222 = vmul.f32 %v1220, %v1221
    %v1223 = vsub.f32 1.0, %v1222
    %v1224 = vmul.f32 %v1221, %v1223
    %v1225 = vadd.f32 %v1221, %v1224
    %vm1226 = vweird.f32 %v1220
    %vm1227 = vweird.f32 %v1221
    %vm1228 = vmor %vm1226, %vm1227
    %v1229 = vsel %vm1228, %v1221, %v1225
    %v1230 = vand.u32 2147483647, %v1220
    %vm1231 = vcmp.eq.f32.partialorder %v1230, 8.507059e+37
    %v1232 = vand.u32 %v1220, 2147483648
    %v1233 = vor.u32 1.1754944e-38, %v1232
    %v1234 = vsel %vm1231, %v1233, %v1229
    %v1235 = vmul.f32 1.0, %v1234
    %v1236 = vtanh.pop %v1216
    %v1238 = vrot.slane %v1105, 2
    %v1240 = vmul.f32 %v1235, %v1238
    %1242 = vrot.lane.b32.xlu0 %v1236, 64
    %v1243 = vpop.permute.xlu0 %1242
    %v1245 = vmul.f32 %v1235, %v1243
    %1247 = vrot.lane.b32.xlu0 %v1245, 32
    %v1248 = vpop.permute.xlu0 %1247
    %v1250 = vadd.f32 %v1240, %v1248
    %v1251 = vtanh.pop %v1250
    %1253 = vrot.lane.b32.xlu0 %v1251, 64
    %v1254 = vpop.permute.xlu0 %1253
    %v1256 = vmul.f32 %v1235, %v1254
    %1258 = vrot.lane.b32.xlu0 %v1190, 32
    %v1259 = vpop.permute.xlu0 %1258
    %1261 = vst.msk [vmem:[#allocation2 + $0x8] sm:$0xc0] %vm677, %v1259
    %1263 = vrot.lane.b32.xlu0 %v1256, 64
    %v1264 = vpop.permute.xlu0 %1263
    %1266 = vst.msk [vmem:[#allocation2] sm:$0x3] %vm683, %v1264
    %v1267 = vld [vmem:[#allocation2] sm:$0xff]
    %v1268 = vld [vmem:[#allocation2 + $0x8] sm:$0xff]
    %v1269 = vld [vmem:[%s4] sm:$0xff]
    %v1270 = vld [vmem:[%s4 + $0x8] sm:$0xff]
    %v1271 = vld [vmem:[%s4 + $0x10] sm:$0xff]
    %v1272 = vld [vmem:[%s4 + $0x18] sm:$0xff]
    %v1273 = vld [vmem:[%s4 + $0x20] sm:$0xff]
    %v1274 = vld [vmem:[%s4 + $0x28] sm:$0xff]
    %v1275 = vld [vmem:[%s4 + $0x30] sm:$0xff]
    %v1276 = vld [vmem:[%s4 + $0x38] sm:$0xff]
    %v1277 = vld [vmem:[%s4 + $0x40] sm:$0xff]
    %v1278 = vld [vmem:[%s4 + $0x48] sm:$0xff]
    %v1279 = vld [vmem:[%s4 + $0x50] sm:$0xff]
    %v1280 = vld [vmem:[%s4 + $0x58] sm:$0xff]
    %v1281 = vld [vmem:[%s4 + $0x60] sm:$0xff]
    %v1282 = vld [vmem:[%s4 + $0x68] sm:$0xff]
    %v1283 = vld [vmem:[%s4 + $0x70] sm:$0xff]
    %v1284 = vld [vmem:[%s4 + $0x78] sm:$0xff]
    %v1285 = vld [vmem:[%s6] sm:$0x3]
    %v1287 = vperm.slane %v1285, 0
    %v1288 = vperm.slane %v1285, 1
    %vm1291 = vcmask 523264
    %v1293 = vsel %vm1291, %v1267, 0
    %v1296 = vsel %vm1291, %v1268, 0
    %1298 = vmatpush.msra.mxu0 0.0
    %1299 = vmatpush.msra.mxu0 0.0
    %1300 = vmatpush.msra.mxu0 0.0
    %1301 = vmatpush.msra.mxu0 0.0
    %1302 = vmatpush.msra.mxu0 0.0
    %1303 = vmatpush.msra.mxu0 0.0
    %1304 = vmatpush.msra.mxu0 0.0
    %1305 = vmatpush.msra.mxu0 0.0
    %1306 = vmatpush.msra.mxu0 %v1283
    %1307 = vmatpush.msra.mxu0 %v1281
    %1308 = vmatpush.msra.mxu0 %v1279
    %1309 = vmatpush.msra.mxu0 %v1277
    %1310 = vmatpush.msra.mxu0 %v1275
    %1311 = vmatpush.msra.mxu0 %v1273
    %1312 = vmatpush.msra.mxu0 %v1271
    %1313 = vmatpush.msra.mxu0 %v1269
    %1314 = vmatmul.f32.gmra.mxu0 %v1293
    %v1315 = vpop.f32.mrf.mxu0
    %v1316 = vadd.f32 %v1287, %v1315
    %1317 = vmatmul.f32.gmra.mxu0 %v1296
    %v1318 = vpop.f32.mrf.mxu0
    %v1319 = vadd.f32 %v1287, %v1318
    %1320 = vdwg.mxu0
    %1321 = vmatpush.msra.mxu0 0.0
    %1322 = vmatpush.msra.mxu0 0.0
    %1323 = vmatpush.msra.mxu0 0.0
    %1324 = vmatpush.msra.mxu0 0.0
    %1325 = vmatpush.msra.mxu0 0.0
    %1326 = vmatpush.msra.mxu0 0.0
    %1327 = vmatpush.msra.mxu0 0.0
    %1328 = vmatpush.msra.mxu0 0.0
    %1329 = vmatpush.msra.mxu0 %v1284
    %1330 = vmatpush.msra.mxu0 %v1282
    %1331 = vmatpush.msra.mxu0 %v1280
    %1332 = vmatpush.msra.mxu0 %v1278
    %1333 = vmatpush.msra.mxu0 %v1276
    %1334 = vmatpush.msra.mxu0 %v1274
    %1335 = vmatpush.msra.mxu0 %v1272
    %1336 = vmatpush.msra.mxu0 %v1270
    %1337 = vmatmul.f32.gmra.mxu0 %v1293
    %v1338 = vpop.f32.mrf.mxu0
    %v1339 = vadd.f32 %v1288, %v1338
    %1340 = vmatmul.f32.gmra.mxu0 %v1296
    %v1341 = vpop.f32.mrf.mxu0
    %v1342 = vadd.f32 %v1288, %v1341
    %1343 = vdwg.mxu0
    %v1344 = vld [vmem:[%s5] sm:$0xff]
    %v1345 = vld [vmem:[%s5 + $0x10] sm:$0xff]
    %v1346 = vld [vmem:[%s5 + $0x20] sm:$0xff]
    %v1347 = vld [vmem:[%s5 + $0x30] sm:$0xff]
    %v1348 = vld [vmem:[%s5 + $0x8] sm:$0xff]
    %v1349 = vld [vmem:[%s5 + $0x18] sm:$0xff]
    %v1350 = vld [vmem:[%s5 + $0x28] sm:$0xff]
    %v1351 = vld [vmem:[%s5 + $0x38] sm:$0xff]
    %1352 = vmatpush.msra.mxu0 0.0
    %1353 = vmatpush.msra.mxu0 0.0
    %1354 = vmatpush.msra.mxu0 0.0
    %1355 = vmatpush.msra.mxu0 0.0
    %1356 = vmatpush.msra.mxu0 0.0
    %1357 = vmatpush.msra.mxu0 0.0
    %1358 = vmatpush.msra.mxu0 0.0
    %1359 = vmatpush.msra.mxu0 0.0
    %1360 = vmatpush.msra.mxu0 0.0
    %1361 = vmatpush.msra.mxu0 0.0
    %1362 = vmatpush.msra.mxu0 0.0
    %1363 = vmatpush.msra.mxu0 0.0
    %1364 = vmatpush.msra.mxu0 %v1347
    %1365 = vmatpush.msra.mxu0 %v1346
    %1366 = vmatpush.msra.mxu0 %v1345
    %1367 = vmatpush.msra.mxu0 %v1344
    %1368 = vmatmul.f32.gmra.mxu0 %v108
    %v1369 = vpop.f32.mrf.mxu0
    %v1370 = vadd.f32 0.0, %v1369
    %1371 = vdwg.mxu0
    %v1372 = vadd.f32 %v1316, %v1370
    %v1373 = vxor.u32 %v1372, 2147483648
    %v1374 = vmul.f32 %v1373, 1.442695
    %v1375 = vpow.pop %v1374
    %v1376 = vadd.f32 %v1375, 1.0
    %v1377 = vrcp.pop %v1376
    %v1378 = vmul.f32 %v1376, %v1377
    %v1379 = vsub.f32 1.0, %v1378
    %v1380 = vmul.f32 %v1377, %v1379
    %v1381 = vadd.f32 %v1377, %v1380
    %vm1382 = vweird.f32 %v1376
    %vm1383 = vweird.f32 %v1377
    %vm1384 = vmor %vm1382, %vm1383
    %v1385 = vsel %vm1384, %v1377, %v1381
    %v1386 = vand.u32 2147483647, %v1376
    %vm1387 = vcmp.eq.f32.partialorder %v1386, 8.507059e+37
    %v1388 = vand.u32 %v1376, 2147483648
    %v1389 = vor.u32 1.1754944e-38, %v1388
    %v1390 = vsel %vm1387, %v1389, %v1385
    %v1391 = vmul.f32 1.0, %v1390
    %v1392 = vtanh.pop %v1372
    %v1393 = vmul.f32 %v1391, 0.0
    %1395 = vrot.lane.b32.xlu0 %v1392, 64
    %v1396 = vpop.permute.xlu0 %1395
    %v1398 = vmul.f32 %v1391, %v1396
    %1400 = vrot.lane.b32.xlu0 %v1398, 32
    %v1401 = vpop.permute.xlu0 %1400
    %v1403 = vadd.f32 %v1393, %v1401
    %v1404 = vtanh.pop %v1403
    %1406 = vrot.lane.b32.xlu0 %v1404, 64
    %v1407 = vpop.permute.xlu0 %1406
    %v1409 = vmul.f32 %v1391, %v1407
    %1410 = vmatpush.msra.mxu0 0.0
    %1411 = vmatpush.msra.mxu0 0.0
    %1412 = vmatpush.msra.mxu0 0.0
    %1413 = vmatpush.msra.mxu0 0.0
    %1414 = vmatpush.msra.mxu0 0.0
    %1415 = vmatpush.msra.mxu0 0.0
    %1416 = vmatpush.msra.mxu0 0.0
    %1417 = vmatpush.msra.mxu0 0.0
    %1418 = vmatpush.msra.mxu0 0.0
    %1419 = vmatpush.msra.mxu0 0.0
    %1420 = vmatpush.msra.mxu0 0.0
    %1421 = vmatpush.msra.mxu0 0.0
    %1422 = vmatpush.msra.mxu0 %v1351
    %1423 = vmatpush.msra.mxu0 %v1350
    %1424 = vmatpush.msra.mxu0 %v1349
    %1425 = vmatpush.msra.mxu0 %v1348
    %1426 = vmatmul.f32.gmra.mxu0 %v108
    %v1427 = vpop.f32.mrf.mxu0
    %v1428 = vadd.f32 0.0, %v1427
    %1429 = vdwg.mxu0
    %v1431 = vrot.slane %v1428, 2
    %v1433 = vadd.f32 %v1342, %v1431
    %v1434 = vxor.u32 %v1433, 2147483648
    %v1435 = vmul.f32 %v1434, 1.442695
    %v1436 = vpow.pop %v1435
    %v1437 = vadd.f32 %v1436, 1.0
    %v1438 = vrcp.pop %v1437
    %v1439 = vmul.f32 %v1437, %v1438
    %v1440 = vsub.f32 1.0, %v1439
    %v1441 = vmul.f32 %v1438, %v1440
    %v1442 = vadd.f32 %v1438, %v1441
    %vm1443 = vweird.f32 %v1437
    %vm1444 = vweird.f32 %v1438
    %vm1445 = vmor %vm1443, %vm1444
    %v1446 = vsel %vm1445, %v1438, %v1442
    %v1447 = vand.u32 2147483647, %v1437
    %vm1448 = vcmp.eq.f32.partialorder %v1447, 8.507059e+37
    %v1449 = vand.u32 %v1437, 2147483648
    %v1450 = vor.u32 1.1754944e-38, %v1449
    %v1451 = vsel %vm1448, %v1450, %v1446
    %v1452 = vmul.f32 1.0, %v1451
    %v1453 = vtanh.pop %v1433
    %v1454 = vmul.f32 %v1452, 0.0
    %1456 = vrot.lane.b32.xlu0 %v1453, 64
    %v1457 = vpop.permute.xlu0 %1456
    %v1459 = vmul.f32 %v1452, %v1457
    %1461 = vrot.lane.b32.xlu0 %v1459, 32
    %v1462 = vpop.permute.xlu0 %1461
    %v1464 = vadd.f32 %v1454, %v1462
    %v1465 = vtanh.pop %v1464
    %1467 = vrot.lane.b32.xlu0 %v1465, 64
    %v1468 = vpop.permute.xlu0 %1467
    %v1470 = vmul.f32 %v1452, %v1468
    %1472 = vrot.lane.b32.xlu0 %v1409, 32
    %v1473 = vpop.permute.xlu0 %1472
    %1475 = vst.msk [vmem:[#allocation2] sm:$0x3] %vm233, %v1473
    %1477 = vrot.lane.b32.xlu0 %v1470, 64
    %v1478 = vpop.permute.xlu0 %1477
    %1480 = vst.msk [vmem:[#allocation2 + $0x8] sm:$0xc0] %vm239, %v1478
    %v1481 = vsel %vm106, %v1473, 0
    %1483 = vmatpush.msra.mxu0 0.0
    %1484 = vmatpush.msra.mxu0 0.0
    %1485 = vmatpush.msra.mxu0 0.0
    %1486 = vmatpush.msra.mxu0 0.0
    %1487 = vmatpush.msra.mxu0 0.0
    %1488 = vmatpush.msra.mxu0 0.0
    %1489 = vmatpush.msra.mxu0 0.0
    %1490 = vmatpush.msra.mxu0 0.0
    %1491 = vmatpush.msra.mxu0 0.0
    %1492 = vmatpush.msra.mxu0 0.0
    %1493 = vmatpush.msra.mxu0 0.0
    %1494 = vmatpush.msra.mxu0 0.0
    %1495 = vmatpush.msra.mxu0 %v1347
    %1496 = vmatpush.msra.mxu0 %v1346
    %1497 = vmatpush.msra.mxu0 %v1345
    %1498 = vmatpush.msra.mxu0 %v1344
    %1499 = vmatmul.f32.gmra.mxu0 %v1481
    %v1500 = vpop.f32.mrf.mxu0
    %v1501 = vadd.f32 0.0, %v1500
    %1502 = vdwg.mxu0
    %v1504 = vrot.slane %v1501, 6
    %v1506 = vadd.f32 %v1316, %v1504
    %v1507 = vxor.u32 %v1506, 2147483648
    %v1508 = vmul.f32 %v1507, 1.442695
    %v1509 = vpow.pop %v1508
    %v1510 = vadd.f32 %v1509, 1.0
    %v1511 = vrcp.pop %v1510
    %v1512 = vmul.f32 %v1510, %v1511
    %v1513 = vsub.f32 1.0, %v1512
    %v1514 = vmul.f32 %v1511, %v1513
    %v1515 = vadd.f32 %v1511, %v1514
    %vm1516 = vweird.f32 %v1510
    %vm1517 = vweird.f32 %v1511
    %vm1518 = vmor %vm1516, %vm1517
    %v1519 = vsel %vm1518, %v1511, %v1515
    %v1520 = vand.u32 2147483647, %v1510
    %vm1521 = vcmp.eq.f32.partialorder %v1520, 8.507059e+37
    %v1522 = vand.u32 %v1510, 2147483648
    %v1523 = vor.u32 1.1754944e-38, %v1522
    %v1524 = vsel %vm1521, %v1523, %v1519
    %v1525 = vmul.f32 1.0, %v1524
    %v1526 = vtanh.pop %v1506
    %v1528 = vrot.slane %v1403, 6
    %v1530 = vmul.f32 %v1525, %v1528
    %1532 = vrot.lane.b32.xlu0 %v1526, 64
    %v1533 = vpop.permute.xlu0 %1532
    %v1535 = vmul.f32 %v1525, %v1533
    %1537 = vrot.lane.b32.xlu0 %v1535, 32
    %v1538 = vpop.permute.xlu0 %1537
    %v1540 = vadd.f32 %v1530, %v1538
    %v1541 = vtanh.pop %v1540
    %1543 = vrot.lane.b32.xlu0 %v1541, 64
    %v1544 = vpop.permute.xlu0 %1543
    %v1546 = vmul.f32 %v1525, %v1544
    %v1547 = vrot.slane %v1470, 6
    %1548 = vrot.lane.b32.xlu0 %v1547, 32
    %v1549 = vpop.permute.xlu0 %1548
    %v1550 = vsel %vm106, %v1549, 0
    %1552 = vmatpush.msra.mxu0 0.0
    %1553 = vmatpush.msra.mxu0 0.0
    %1554 = vmatpush.msra.mxu0 0.0
    %1555 = vmatpush.msra.mxu0 0.0
    %1556 = vmatpush.msra.mxu0 0.0
    %1557 = vmatpush.msra.mxu0 0.0
    %1558 = vmatpush.msra.mxu0 0.0
    %1559 = vmatpush.msra.mxu0 0.0
    %1560 = vmatpush.msra.mxu0 0.0
    %1561 = vmatpush.msra.mxu0 0.0
    %1562 = vmatpush.msra.mxu0 0.0
    %1563 = vmatpush.msra.mxu0 0.0
    %1564 = vmatpush.msra.mxu0 %v1351
    %1565 = vmatpush.msra.mxu0 %v1350
    %1566 = vmatpush.msra.mxu0 %v1349
    %1567 = vmatpush.msra.mxu0 %v1348
    %1568 = vmatmul.f32.gmra.mxu0 %v1550
    %v1569 = vpop.f32.mrf.mxu0
    %v1570 = vadd.f32 0.0, %v1569
    %1571 = vdwg.mxu0
    %v1573 = vrot.slane %v1570, 4
    %v1575 = vadd.f32 %v1342, %v1573
    %v1576 = vxor.u32 %v1575, 2147483648
    %v1577 = vmul.f32 %v1576, 1.442695
    %v1578 = vpow.pop %v1577
    %v1579 = vadd.f32 %v1578, 1.0
    %v1580 = vrcp.pop %v1579
    %v1581 = vmul.f32 %v1579, %v1580
    %v1582 = vsub.f32 1.0, %v1581
    %v1583 = vmul.f32 %v1580, %v1582
    %v1584 = vadd.f32 %v1580, %v1583
    %vm1585 = vweird.f32 %v1579
    %vm1586 = vweird.f32 %v1580
    %vm1587 = vmor %vm1585, %vm1586
    %v1588 = vsel %vm1587, %v1580, %v1584
    %v1589 = vand.u32 2147483647, %v1579
    %vm1590 = vcmp.eq.f32.partialorder %v1589, 8.507059e+37
    %v1591 = vand.u32 %v1579, 2147483648
    %v1592 = vor.u32 1.1754944e-38, %v1591
    %v1593 = vsel %vm1590, %v1592, %v1588
    %v1594 = vmul.f32 1.0, %v1593
    %v1595 = vtanh.pop %v1575
    %v1597 = vrot.slane %v1464, 2
    %v1599 = vmul.f32 %v1594, %v1597
    %1601 = vrot.lane.b32.xlu0 %v1595, 64
    %v1602 = vpop.permute.xlu0 %1601
    %v1604 = vmul.f32 %v1594, %v1602
    %1606 = vrot.lane.b32.xlu0 %v1604, 32
    %v1607 = vpop.permute.xlu0 %1606
    %v1609 = vadd.f32 %v1599, %v1607
    %v1610 = vtanh.pop %v1609
    %1612 = vrot.lane.b32.xlu0 %v1610, 64
    %v1613 = vpop.permute.xlu0 %1612
    %v1615 = vmul.f32 %v1594, %v1613
    %1617 = vrot.lane.b32.xlu0 %v1546, 32
    %v1618 = vpop.permute.xlu0 %1617
    %1620 = vst.msk [vmem:[#allocation2] sm:$0xc] %vm380, %v1618
    %1622 = vrot.lane.b32.xlu0 %v1615, 64
    %v1623 = vpop.permute.xlu0 %1622
    %1625 = vst.msk [vmem:[#allocation2 + $0x8] sm:$0x30] %vm386, %v1623
    %v1626 = vrot.slane %v1546, 2
    %1627 = vrot.lane.b32.xlu0 %v1626, 32
    %v1628 = vpop.permute.xlu0 %1627
    %v1629 = vsel %vm106, %v1628, 0
    %1631 = vmatpush.msra.mxu0 0.0
    %1632 = vmatpush.msra.mxu0 0.0
    %1633 = vmatpush.msra.mxu0 0.0
    %1634 = vmatpush.msra.mxu0 0.0
    %1635 = vmatpush.msra.mxu0 0.0
    %1636 = vmatpush.msra.mxu0 0.0
    %1637 = vmatpush.msra.mxu0 0.0
    %1638 = vmatpush.msra.mxu0 0.0
    %1639 = vmatpush.msra.mxu0 0.0
    %1640 = vmatpush.msra.mxu0 0.0
    %1641 = vmatpush.msra.mxu0 0.0
    %1642 = vmatpush.msra.mxu0 0.0
    %1643 = vmatpush.msra.mxu0 %v1347
    %1644 = vmatpush.msra.mxu0 %v1346
    %1645 = vmatpush.msra.mxu0 %v1345
    %1646 = vmatpush.msra.mxu0 %v1344
    %1647 = vmatmul.f32.gmra.mxu0 %v1629
    %v1648 = vpop.f32.mrf.mxu0
    %v1649 = vadd.f32 0.0, %v1648
    %1650 = vdwg.mxu0
    %v1652 = vrot.slane %v1649, 4
    %v1654 = vadd.f32 %v1316, %v1652
    %v1655 = vxor.u32 %v1654, 2147483648
    %v1656 = vmul.f32 %v1655, 1.442695
    %v1657 = vpow.pop %v1656
    %v1658 = vadd.f32 %v1657, 1.0
    %v1659 = vrcp.pop %v1658
    %v1660 = vmul.f32 %v1658, %v1659
    %v1661 = vsub.f32 1.0, %v1660
    %v1662 = vmul.f32 %v1659, %v1661
    %v1663 = vadd.f32 %v1659, %v1662
    %vm1664 = vweird.f32 %v1658
    %vm1665 = vweird.f32 %v1659
    %vm1666 = vmor %vm1664, %vm1665
    %v1667 = vsel %vm1666, %v1659, %v1663
    %v1668 = vand.u32 2147483647, %v1658
    %vm1669 = vcmp.eq.f32.partialorder %v1668, 8.507059e+37
    %v1670 = vand.u32 %v1658, 2147483648
    %v1671 = vor.u32 1.1754944e-38, %v1670
    %v1672 = vsel %vm1669, %v1671, %v1667
    %v1673 = vmul.f32 1.0, %v1672
    %v1674 = vtanh.pop %v1654
    %v1676 = vrot.slane %v1540, 6
    %v1678 = vmul.f32 %v1673, %v1676
    %1680 = vrot.lane.b32.xlu0 %v1674, 64
    %v1681 = vpop.permute.xlu0 %1680
    %v1683 = vmul.f32 %v1673, %v1681
    %1685 = vrot.lane.b32.xlu0 %v1683, 32
    %v1686 = vpop.permute.xlu0 %1685
    %v1688 = vadd.f32 %v1678, %v1686
    %v1689 = vtanh.pop %v1688
    %1691 = vrot.lane.b32.xlu0 %v1689, 64
    %v1692 = vpop.permute.xlu0 %1691
    %v1694 = vmul.f32 %v1673, %v1692
    %v1695 = vrot.slane %v1615, 4
    %1696 = vrot.lane.b32.xlu0 %v1695, 32
    %v1697 = vpop.permute.xlu0 %1696
    %v1698 = vsel %vm106, %v1697, 0
    %1700 = vmatpush.msra.mxu0 0.0
    %1701 = vmatpush.msra.mxu0 0.0
    %1702 = vmatpush.msra.mxu0 0.0
    %1703 = vmatpush.msra.mxu0 0.0
    %1704 = vmatpush.msra.mxu0 0.0
    %1705 = vmatpush.msra.mxu0 0.0
    %1706 = vmatpush.msra.mxu0 0.0
    %1707 = vmatpush.msra.mxu0 0.0
    %1708 = vmatpush.msra.mxu0 0.0
    %1709 = vmatpush.msra.mxu0 0.0
    %1710 = vmatpush.msra.mxu0 0.0
    %1711 = vmatpush.msra.mxu0 0.0
    %1712 = vmatpush.msra.mxu0 %v1351
    %1713 = vmatpush.msra.mxu0 %v1350
    %1714 = vmatpush.msra.mxu0 %v1349
    %1715 = vmatpush.msra.mxu0 %v1348
    %1716 = vmatmul.f32.gmra.mxu0 %v1698
    %v1717 = vpop.f32.mrf.mxu0
    %v1718 = vadd.f32 0.0, %v1717
    %1719 = vdwg.mxu0
    %v1721 = vrot.slane %v1718, 6
    %v1723 = vadd.f32 %v1342, %v1721
    %v1724 = vxor.u32 %v1723, 2147483648
    %v1725 = vmul.f32 %v1724, 1.442695
    %v1726 = vpow.pop %v1725
    %v1727 = vadd.f32 %v1726, 1.0
    %v1728 = vrcp.pop %v1727
    %v1729 = vmul.f32 %v1727, %v1728
    %v1730 = vsub.f32 1.0, %v1729
    %v1731 = vmul.f32 %v1728, %v1730
    %v1732 = vadd.f32 %v1728, %v1731
    %vm1733 = vweird.f32 %v1727
    %vm1734 = vweird.f32 %v1728
    %vm1735 = vmor %vm1733, %vm1734
    %v1736 = vsel %vm1735, %v1728, %v1732
    %v1737 = vand.u32 2147483647, %v1727
    %vm1738 = vcmp.eq.f32.partialorder %v1737, 8.507059e+37
    %v1739 = vand.u32 %v1727, 2147483648
    %v1740 = vor.u32 1.1754944e-38, %v1739
    %v1741 = vsel %vm1738, %v1740, %v1736
    %v1742 = vmul.f32 1.0, %v1741
    %v1743 = vtanh.pop %v1723
    %v1745 = vrot.slane %v1609, 2
    %v1747 = vmul.f32 %v1742, %v1745
    %1749 = vrot.lane.b32.xlu0 %v1743, 64
    %v1750 = vpop.permute.xlu0 %1749
    %v1752 = vmul.f32 %v1742, %v1750
    %1754 = vrot.lane.b32.xlu0 %v1752, 32
    %v1755 = vpop.permute.xlu0 %1754
    %v1757 = vadd.f32 %v1747, %v1755
    %v1758 = vtanh.pop %v1757
    %1760 = vrot.lane.b32.xlu0 %v1758, 64
    %v1761 = vpop.permute.xlu0 %1760
    %v1763 = vmul.f32 %v1742, %v1761
    %1765 = vrot.lane.b32.xlu0 %v1694, 32
    %v1766 = vpop.permute.xlu0 %1765
    %1768 = vst.msk [vmem:[#allocation2] sm:$0x30] %vm530, %v1766
    %1770 = vrot.lane.b32.xlu0 %v1763, 64
    %v1771 = vpop.permute.xlu0 %1770
    %1773 = vst.msk [vmem:[#allocation2 + $0x8] sm:$0xc] %vm536, %v1771
    %v1774 = vrot.slane %v1694, 4
    %1775 = vrot.lane.b32.xlu0 %v1774, 32
    %v1776 = vpop.permute.xlu0 %1775
    %v1777 = vsel %vm106, %v1776, 0
    %1779 = vmatpush.msra.mxu0 0.0
    %1780 = vmatpush.msra.mxu0 0.0
    %1781 = vmatpush.msra.mxu0 0.0
    %1782 = vmatpush.msra.mxu0 0.0
    %1783 = vmatpush.msra.mxu0 0.0
    %1784 = vmatpush.msra.mxu0 0.0
    %1785 = vmatpush.msra.mxu0 0.0
    %1786 = vmatpush.msra.mxu0 0.0
    %1787 = vmatpush.msra.mxu0 0.0
    %1788 = vmatpush.msra.mxu0 0.0
    %1789 = vmatpush.msra.mxu0 0.0
    %1790 = vmatpush.msra.mxu0 0.0
    %1791 = vmatpush.msra.mxu0 %v1347
    %1792 = vmatpush.msra.mxu0 %v1346
    %1793 = vmatpush.msra.mxu0 %v1345
    %1794 = vmatpush.msra.mxu0 %v1344
    %1795 = vmatmul.f32.gmra.mxu0 %v1777
    %v1796 = vpop.f32.mrf.mxu0
    %v1797 = vadd.f32 0.0, %v1796
    %1798 = vdwg.mxu0
    %v1800 = vrot.slane %v1797, 2
    %v1802 = vadd.f32 %v1316, %v1800
    %v1803 = vxor.u32 %v1802, 2147483648
    %v1804 = vmul.f32 %v1803, 1.442695
    %v1805 = vpow.pop %v1804
    %v1806 = vadd.f32 %v1805, 1.0
    %v1807 = vrcp.pop %v1806
    %v1808 = vmul.f32 %v1806, %v1807
    %v1809 = vsub.f32 1.0, %v1808
    %v1810 = vmul.f32 %v1807, %v1809
    %v1811 = vadd.f32 %v1807, %v1810
    %vm1812 = vweird.f32 %v1806
    %vm1813 = vweird.f32 %v1807
    %vm1814 = vmor %vm1812, %vm1813
    %v1815 = vsel %vm1814, %v1807, %v1811
    %v1816 = vand.u32 2147483647, %v1806
    %vm1817 = vcmp.eq.f32.partialorder %v1816, 8.507059e+37
    %v1818 = vand.u32 %v1806, 2147483648
    %v1819 = vor.u32 1.1754944e-38, %v1818
    %v1820 = vsel %vm1817, %v1819, %v1815
    %v1821 = vmul.f32 1.0, %v1820
    %v1822 = vtanh.pop %v1802
    %v1824 = vrot.slane %v1688, 6
    %v1826 = vmul.f32 %v1821, %v1824
    %1828 = vrot.lane.b32.xlu0 %v1822, 64
    %v1829 = vpop.permute.xlu0 %1828
    %v1831 = vmul.f32 %v1821, %v1829
    %1833 = vrot.lane.b32.xlu0 %v1831, 32
    %v1834 = vpop.permute.xlu0 %1833
    %v1836 = vadd.f32 %v1826, %v1834
    %v1837 = vtanh.pop %v1836
    %1839 = vrot.lane.b32.xlu0 %v1837, 64
    %v1840 = vpop.permute.xlu0 %1839
    %v1842 = vmul.f32 %v1821, %v1840
    %v1843 = vrot.slane %v1763, 2
    %1844 = vrot.lane.b32.xlu0 %v1843, 32
    %v1845 = vpop.permute.xlu0 %1844
    %v1846 = vsel %vm106, %v1845, 0
    %1848 = vmatpush.msra.mxu0 0.0
    %1849 = vmatpush.msra.mxu0 0.0
    %1850 = vmatpush.msra.mxu0 0.0
    %1851 = vmatpush.msra.mxu0 0.0
    %1852 = vmatpush.msra.mxu0 0.0
    %1853 = vmatpush.msra.mxu0 0.0
    %1854 = vmatpush.msra.mxu0 0.0
    %1855 = vmatpush.msra.mxu0 0.0
    %1856 = vmatpush.msra.mxu0 0.0
    %1857 = vmatpush.msra.mxu0 0.0
    %1858 = vmatpush.msra.mxu0 0.0
    %1859 = vmatpush.msra.mxu0 0.0
    %1860 = vmatpush.msra.mxu0 %v1351
    %1861 = vmatpush.msra.mxu0 %v1350
    %1862 = vmatpush.msra.mxu0 %v1349
    %1863 = vmatpush.msra.mxu0 %v1348
    %1864 = vmatmul.f32.gmra.mxu0 %v1846
    %v1865 = vpop.f32.mrf.mxu0
    %v1866 = vadd.f32 0.0, %v1865
    %1867 = vdwg.mxu0
    %v1868 = vadd.f32 %v1342, %v1866
    %v1869 = vxor.u32 %v1868, 2147483648
    %v1870 = vmul.f32 %v1869, 1.442695
    %v1871 = vpow.pop %v1870
    %v1872 = vadd.f32 %v1871, 1.0
    %v1873 = vrcp.pop %v1872
    %v1874 = vmul.f32 %v1872, %v1873
    %v1875 = vsub.f32 1.0, %v1874
    %v1876 = vmul.f32 %v1873, %v1875
    %v1877 = vadd.f32 %v1873, %v1876
    %vm1878 = vweird.f32 %v1872
    %vm1879 = vweird.f32 %v1873
    %vm1880 = vmor %vm1878, %vm1879
    %v1881 = vsel %vm1880, %v1873, %v1877
    %v1882 = vand.u32 2147483647, %v1872
    %vm1883 = vcmp.eq.f32.partialorder %v1882, 8.507059e+37
    %v1884 = vand.u32 %v1872, 2147483648
    %v1885 = vor.u32 1.1754944e-38, %v1884
    %v1886 = vsel %vm1883, %v1885, %v1881
    %v1887 = vmul.f32 1.0, %v1886
    %v1888 = vtanh.pop %v1868
    %v1890 = vrot.slane %v1757, 2
    %v1892 = vmul.f32 %v1887, %v1890
    %1894 = vrot.lane.b32.xlu0 %v1888, 64
    %v1895 = vpop.permute.xlu0 %1894
    %v1897 = vmul.f32 %v1887, %v1895
    %1899 = vrot.lane.b32.xlu0 %v1897, 32
    %v1900 = vpop.permute.xlu0 %1899
    %v1902 = vadd.f32 %v1892, %v1900
    %v1903 = vtanh.pop %v1902
    %1905 = vrot.lane.b32.xlu0 %v1903, 64
    %v1906 = vpop.permute.xlu0 %1905
    %v1908 = vmul.f32 %v1887, %v1906
    %1910 = vrot.lane.b32.xlu0 %v1842, 32
    %v1911 = vpop.permute.xlu0 %1910
    %1913 = vst.msk [vmem:[#allocation2] sm:$0xc0] %vm677, %v1911
    %1915 = vrot.lane.b32.xlu0 %v1908, 64
    %v1916 = vpop.permute.xlu0 %1915
    %1918 = vst.msk [vmem:[#allocation2 + $0x8] sm:$0x3] %vm683, %v1916
    %v1919 = vrot.slane %v1842, 6
    %1920 = vrot.lane.b32.xlu0 %v1919, 32
    %v1921 = vpop.permute.xlu0 %1920
    %v1922 = vsel %vm106, %v1921, 0
    %1924 = vmatpush.msra.mxu0 0.0
    %1925 = vmatpush.msra.mxu0 0.0
    %1926 = vmatpush.msra.mxu0 0.0
    %1927 = vmatpush.msra.mxu0 0.0
    %1928 = vmatpush.msra.mxu0 0.0
    %1929 = vmatpush.msra.mxu0 0.0
    %1930 = vmatpush.msra.mxu0 0.0
    %1931 = vmatpush.msra.mxu0 0.0
    %1932 = vmatpush.msra.mxu0 0.0
    %1933 = vmatpush.msra.mxu0 0.0
    %1934 = vmatpush.msra.mxu0 0.0
    %1935 = vmatpush.msra.mxu0 0.0
    %1936 = vmatpush.msra.mxu0 %v1347
    %1937 = vmatpush.msra.mxu0 %v1346
    %1938 = vmatpush.msra.mxu0 %v1345
    %1939 = vmatpush.msra.mxu0 %v1344
    %1940 = vmatmul.f32.gmra.mxu0 %v1922
    %v1941 = vpop.f32.mrf.mxu0
    %v1942 = vadd.f32 0.0, %v1941
    %1943 = vdwg.mxu0
    %v1944 = vadd.f32 %v1319, %v1942
    %v1945 = vxor.u32 %v1944, 2147483648
    %v1946 = vmul.f32 %v1945, 1.442695
    %v1947 = vpow.pop %v1946
    %v1948 = vadd.f32 %v1947, 1.0
    %v1949 = vrcp.pop %v1948
    %v1950 = vmul.f32 %v1948, %v1949
    %v1951 = vsub.f32 1.0, %v1950
    %v1952 = vmul.f32 %v1949, %v1951
    %v1953 = vadd.f32 %v1949, %v1952
    %vm1954 = vweird.f32 %v1948
    %vm1955 = vweird.f32 %v1949
    %vm1956 = vmor %vm1954, %vm1955
    %v1957 = vsel %vm1956, %v1949, %v1953
    %v1958 = vand.u32 2147483647, %v1948
    %vm1959 = vcmp.eq.f32.partialorder %v1958, 8.507059e+37
    %v1960 = vand.u32 %v1948, 2147483648
    %v1961 = vor.u32 1.1754944e-38, %v1960
    %v1962 = vsel %vm1959, %v1961, %v1957
    %v1963 = vmul.f32 1.0, %v1962
    %v1964 = vtanh.pop %v1944
    %v1966 = vrot.slane %v1836, 6
    %v1968 = vmul.f32 %v1963, %v1966
    %1970 = vrot.lane.b32.xlu0 %v1964, 64
    %v1971 = vpop.permute.xlu0 %1970
    %v1973 = vmul.f32 %v1963, %v1971
    %1975 = vrot.lane.b32.xlu0 %v1973, 32
    %v1976 = vpop.permute.xlu0 %1975
    %v1978 = vadd.f32 %v1968, %v1976
    %v1979 = vtanh.pop %v1978
    %1981 = vrot.lane.b32.xlu0 %v1979, 64
    %v1982 = vpop.permute.xlu0 %1981
    %v1984 = vmul.f32 %v1963, %v1982
    %1985 = vrot.lane.b32.xlu0 %v1908, 32
    %v1986 = vpop.permute.xlu0 %1985
    %v1987 = vsel %vm106, %v1986, 0
    %1989 = vmatpush.msra.mxu0 0.0
    %1990 = vmatpush.msra.mxu0 0.0
    %1991 = vmatpush.msra.mxu0 0.0
    %1992 = vmatpush.msra.mxu0 0.0
    %1993 = vmatpush.msra.mxu0 0.0
    %1994 = vmatpush.msra.mxu0 0.0
    %1995 = vmatpush.msra.mxu0 0.0
    %1996 = vmatpush.msra.mxu0 0.0
    %1997 = vmatpush.msra.mxu0 0.0
    %1998 = vmatpush.msra.mxu0 0.0
    %1999 = vmatpush.msra.mxu0 0.0
    %2000 = vmatpush.msra.mxu0 0.0
    %2001 = vmatpush.msra.mxu0 %v1351
    %2002 = vmatpush.msra.mxu0 %v1350
    %2003 = vmatpush.msra.mxu0 %v1349
    %2004 = vmatpush.msra.mxu0 %v1348
    %2005 = vmatmul.f32.gmra.mxu0 %v1987
    %v2006 = vpop.f32.mrf.mxu0
    %v2007 = vadd.f32 0.0, %v2006
    %2008 = vdwg.mxu0
    %v2010 = vrot.slane %v2007, 2
    %v2012 = vadd.f32 %v1339, %v2010
    %v2013 = vxor.u32 %v2012, 2147483648
    %v2014 = vmul.f32 %v2013, 1.442695
    %v2015 = vpow.pop %v2014
    %v2016 = vadd.f32 %v2015, 1.0
    %v2017 = vrcp.pop %v2016
    %v2018 = vmul.f32 %v2016, %v2017
    %v2019 = vsub.f32 1.0, %v2018
    %v2020 = vmul.f32 %v2017, %v2019
    %v2021 = vadd.f32 %v2017, %v2020
    %vm2022 = vweird.f32 %v2016
    %vm2023 = vweird.f32 %v2017
    %vm2024 = vmor %vm2022, %vm2023
    %v2025 = vsel %vm2024, %v2017, %v2021
    %v2026 = vand.u32 2147483647, %v2016
    %vm2027 = vcmp.eq.f32.partialorder %v2026, 8.507059e+37
    %v2028 = vand.u32 %v2016, 2147483648
    %v2029 = vor.u32 1.1754944e-38, %v2028
    %v2030 = vsel %vm2027, %v2029, %v2025
    %v2031 = vmul.f32 1.0, %v2030
    %v2032 = vtanh.pop %v2012
    %v2034 = vrot.slane %v1902, 2
    %v2036 = vmul.f32 %v2031, %v2034
    %2038 = vrot.lane.b32.xlu0 %v2032, 64
    %v2039 = vpop.permute.xlu0 %2038
    %v2041 = vmul.f32 %v2031, %v2039
    %2043 = vrot.lane.b32.xlu0 %v2041, 32
    %v2044 = vpop.permute.xlu0 %2043
    %v2046 = vadd.f32 %v2036, %v2044
    %v2047 = vtanh.pop %v2046
    %2049 = vrot.lane.b32.xlu0 %v2047, 64
    %v2050 = vpop.permute.xlu0 %2049
    %v2052 = vmul.f32 %v2031, %v2050
    %2054 = vrot.lane.b32.xlu0 %v1984, 32
    %v2055 = vpop.permute.xlu0 %2054
    %2057 = vst.msk [vmem:[#allocation2 + $0x8] sm:$0x3] %vm233, %v2055
    %2059 = vrot.lane.b32.xlu0 %v2052, 64
    %v2060 = vpop.permute.xlu0 %2059
    %2062 = vst.msk [vmem:[#allocation2] sm:$0xc0] %vm239, %v2060
    %v2063 = vsel %vm106, %v2055, 0
    %2065 = vmatpush.msra.mxu0 0.0
    %2066 = vmatpush.msra.mxu0 0.0
    %2067 = vmatpush.msra.mxu0 0.0
    %2068 = vmatpush.msra.mxu0 0.0
    %2069 = vmatpush.msra.mxu0 0.0
    %2070 = vmatpush.msra.mxu0 0.0
    %2071 = vmatpush.msra.mxu0 0.0
    %2072 = vmatpush.msra.mxu0 0.0
    %2073 = vmatpush.msra.mxu0 0.0
    %2074 = vmatpush.msra.mxu0 0.0
    %2075 = vmatpush.msra.mxu0 0.0
    %2076 = vmatpush.msra.mxu0 0.0
    %2077 = vmatpush.msra.mxu0 %v1347
    %2078 = vmatpush.msra.mxu0 %v1346
    %2079 = vmatpush.msra.mxu0 %v1345
    %2080 = vmatpush.msra.mxu0 %v1344
    %2081 = vmatmul.f32.gmra.mxu0 %v2063
    %v2082 = vpop.f32.mrf.mxu0
    %v2083 = vadd.f32 0.0, %v2082
    %2084 = vdwg.mxu0
    %v2086 = vrot.slane %v2083, 6
    %v2088 = vadd.f32 %v1319, %v2086
    %v2089 = vxor.u32 %v2088, 2147483648
    %v2090 = vmul.f32 %v2089, 1.442695
    %v2091 = vpow.pop %v2090
    %v2092 = vadd.f32 %v2091, 1.0
    %v2093 = vrcp.pop %v2092
    %v2094 = vmul.f32 %v2092, %v2093
    %v2095 = vsub.f32 1.0, %v2094
    %v2096 = vmul.f32 %v2093, %v2095
    %v2097 = vadd.f32 %v2093, %v2096
    %vm2098 = vweird.f32 %v2092
    %vm2099 = vweird.f32 %v2093
    %vm2100 = vmor %vm2098, %vm2099
    %v2101 = vsel %vm2100, %v2093, %v2097
    %v2102 = vand.u32 2147483647, %v2092
    %vm2103 = vcmp.eq.f32.partialorder %v2102, 8.507059e+37
    %v2104 = vand.u32 %v2092, 2147483648
    %v2105 = vor.u32 1.1754944e-38, %v2104
    %v2106 = vsel %vm2103, %v2105, %v2101
    %v2107 = vmul.f32 1.0, %v2106
    %v2108 = vtanh.pop %v2088
    %v2110 = vrot.slane %v1978, 6
    %v2112 = vmul.f32 %v2107, %v2110
    %2114 = vrot.lane.b32.xlu0 %v2108, 64
    %v2115 = vpop.permute.xlu0 %2114
    %v2117 = vmul.f32 %v2107, %v2115
    %2119 = vrot.lane.b32.xlu0 %v2117, 32
    %v2120 = vpop.permute.xlu0 %2119
    %v2122 = vadd.f32 %v2112, %v2120
    %v2123 = vtanh.pop %v2122
    %2125 = vrot.lane.b32.xlu0 %v2123, 64
    %v2126 = vpop.permute.xlu0 %2125
    %v2128 = vmul.f32 %v2107, %v2126
    %v2129 = vrot.slane %v2052, 6
    %2130 = vrot.lane.b32.xlu0 %v2129, 32
    %v2131 = vpop.permute.xlu0 %2130
    %v2132 = vsel %vm106, %v2131, 0
    %2134 = vmatpush.msra.mxu0 0.0
    %2135 = vmatpush.msra.mxu0 0.0
    %2136 = vmatpush.msra.mxu0 0.0
    %2137 = vmatpush.msra.mxu0 0.0
    %2138 = vmatpush.msra.mxu0 0.0
    %2139 = vmatpush.msra.mxu0 0.0
    %2140 = vmatpush.msra.mxu0 0.0
    %2141 = vmatpush.msra.mxu0 0.0
    %2142 = vmatpush.msra.mxu0 0.0
    %2143 = vmatpush.msra.mxu0 0.0
    %2144 = vmatpush.msra.mxu0 0.0
    %2145 = vmatpush.msra.mxu0 0.0
    %2146 = vmatpush.msra.mxu0 %v1351
    %2147 = vmatpush.msra.mxu0 %v1350
    %2148 = vmatpush.msra.mxu0 %v1349
    %2149 = vmatpush.msra.mxu0 %v1348
    %2150 = vmatmul.f32.gmra.mxu0 %v2132
    %v2151 = vpop.f32.mrf.mxu0
    %v2152 = vadd.f32 0.0, %v2151
    %2153 = vdwg.mxu0
    %v2155 = vrot.slane %v2152, 4
    %v2157 = vadd.f32 %v1339, %v2155
    %v2158 = vxor.u32 %v2157, 2147483648
    %v2159 = vmul.f32 %v2158, 1.442695
    %v2160 = vpow.pop %v2159
    %v2161 = vadd.f32 %v2160, 1.0
    %v2162 = vrcp.pop %v2161
    %v2163 = vmul.f32 %v2161, %v2162
    %v2164 = vsub.f32 1.0, %v2163
    %v2165 = vmul.f32 %v2162, %v2164
    %v2166 = vadd.f32 %v2162, %v2165
    %vm2167 = vweird.f32 %v2161
    %vm2168 = vweird.f32 %v2162
    %vm2169 = vmor %vm2167, %vm2168
    %v2170 = vsel %vm2169, %v2162, %v2166
    %v2171 = vand.u32 2147483647, %v2161
    %vm2172 = vcmp.eq.f32.partialorder %v2171, 8.507059e+37
    %v2173 = vand.u32 %v2161, 2147483648
    %v2174 = vor.u32 1.1754944e-38, %v2173
    %v2175 = vsel %vm2172, %v2174, %v2170
    %v2176 = vmul.f32 1.0, %v2175
    %v2177 = vtanh.pop %v2157
    %v2179 = vrot.slane %v2046, 2
    %v2181 = vmul.f32 %v2176, %v2179
    %2183 = vrot.lane.b32.xlu0 %v2177, 64
    %v2184 = vpop.permute.xlu0 %2183
    %v2186 = vmul.f32 %v2176, %v2184
    %2188 = vrot.lane.b32.xlu0 %v2186, 32
    %v2189 = vpop.permute.xlu0 %2188
    %v2191 = vadd.f32 %v2181, %v2189
    %v2192 = vtanh.pop %v2191
    %2194 = vrot.lane.b32.xlu0 %v2192, 64
    %v2195 = vpop.permute.xlu0 %2194
    %v2197 = vmul.f32 %v2176, %v2195
    %2199 = vrot.lane.b32.xlu0 %v2128, 32
    %v2200 = vpop.permute.xlu0 %2199
    %2202 = vst.msk [vmem:[#allocation2 + $0x8] sm:$0xc] %vm380, %v2200
    %2204 = vrot.lane.b32.xlu0 %v2197, 64
    %v2205 = vpop.permute.xlu0 %2204
    %2207 = vst.msk [vmem:[#allocation2] sm:$0x30] %vm386, %v2205
    %v2208 = vrot.slane %v2128, 2
    %2209 = vrot.lane.b32.xlu0 %v2208, 32
    %v2210 = vpop.permute.xlu0 %2209
    %v2211 = vsel %vm106, %v2210, 0
    %2213 = vmatpush.msra.mxu0 0.0
    %2214 = vmatpush.msra.mxu0 0.0
    %2215 = vmatpush.msra.mxu0 0.0
    %2216 = vmatpush.msra.mxu0 0.0
    %2217 = vmatpush.msra.mxu0 0.0
    %2218 = vmatpush.msra.mxu0 0.0
    %2219 = vmatpush.msra.mxu0 0.0
    %2220 = vmatpush.msra.mxu0 0.0
    %2221 = vmatpush.msra.mxu0 0.0
    %2222 = vmatpush.msra.mxu0 0.0
    %2223 = vmatpush.msra.mxu0 0.0
    %2224 = vmatpush.msra.mxu0 0.0
    %2225 = vmatpush.msra.mxu0 %v1347
    %2226 = vmatpush.msra.mxu0 %v1346
    %2227 = vmatpush.msra.mxu0 %v1345
    %2228 = vmatpush.msra.mxu0 %v1344
    %2229 = vmatmul.f32.gmra.mxu0 %v2211
    %v2230 = vpop.f32.mrf.mxu0
    %v2231 = vadd.f32 0.0, %v2230
    %2232 = vdwg.mxu0
    %v2234 = vrot.slane %v2231, 4
    %v2236 = vadd.f32 %v1319, %v2234
    %v2237 = vxor.u32 %v2236, 2147483648
    %v2238 = vmul.f32 %v2237, 1.442695
    %v2239 = vpow.pop %v2238
    %v2240 = vadd.f32 %v2239, 1.0
    %v2241 = vrcp.pop %v2240
    %v2242 = vmul.f32 %v2240, %v2241
    %v2243 = vsub.f32 1.0, %v2242
    %v2244 = vmul.f32 %v2241, %v2243
    %v2245 = vadd.f32 %v2241, %v2244
    %vm2246 = vweird.f32 %v2240
    %vm2247 = vweird.f32 %v2241
    %vm2248 = vmor %vm2246, %vm2247
    %v2249 = vsel %vm2248, %v2241, %v2245
    %v2250 = vand.u32 2147483647, %v2240
    %vm2251 = vcmp.eq.f32.partialorder %v2250, 8.507059e+37
    %v2252 = vand.u32 %v2240, 2147483648
    %v2253 = vor.u32 1.1754944e-38, %v2252
    %v2254 = vsel %vm2251, %v2253, %v2249
    %v2255 = vmul.f32 1.0, %v2254
    %v2256 = vtanh.pop %v2236
    %v2258 = vrot.slane %v2122, 6
    %v2260 = vmul.f32 %v2255, %v2258
    %2262 = vrot.lane.b32.xlu0 %v2256, 64
    %v2263 = vpop.permute.xlu0 %2262
    %v2265 = vmul.f32 %v2255, %v2263
    %2267 = vrot.lane.b32.xlu0 %v2265, 32
    %v2268 = vpop.permute.xlu0 %2267
    %v2270 = vadd.f32 %v2260, %v2268
    %v2271 = vtanh.pop %v2270
    %2273 = vrot.lane.b32.xlu0 %v2271, 64
    %v2274 = vpop.permute.xlu0 %2273
    %v2276 = vmul.f32 %v2255, %v2274
    %v2277 = vrot.slane %v2197, 4
    %2278 = vrot.lane.b32.xlu0 %v2277, 32
    %v2279 = vpop.permute.xlu0 %2278
    %v2280 = vsel %vm106, %v2279, 0
    %2282 = vmatpush.msra.mxu0 0.0
    %2283 = vmatpush.msra.mxu0 0.0
    %2284 = vmatpush.msra.mxu0 0.0
    %2285 = vmatpush.msra.mxu0 0.0
    %2286 = vmatpush.msra.mxu0 0.0
    %2287 = vmatpush.msra.mxu0 0.0
    %2288 = vmatpush.msra.mxu0 0.0
    %2289 = vmatpush.msra.mxu0 0.0
    %2290 = vmatpush.msra.mxu0 0.0
    %2291 = vmatpush.msra.mxu0 0.0
    %2292 = vmatpush.msra.mxu0 0.0
    %2293 = vmatpush.msra.mxu0 0.0
    %2294 = vmatpush.msra.mxu0 %v1351
    %2295 = vmatpush.msra.mxu0 %v1350
    %2296 = vmatpush.msra.mxu0 %v1349
    %2297 = vmatpush.msra.mxu0 %v1348
    %2298 = vmatmul.f32.gmra.mxu0 %v2280
    %v2299 = vpop.f32.mrf.mxu0
    %v2300 = vadd.f32 0.0, %v2299
    %2301 = vdwg.mxu0
    %v2303 = vrot.slane %v2300, 6
    %v2305 = vadd.f32 %v1339, %v2303
    %v2306 = vxor.u32 %v2305, 2147483648
    %v2307 = vmul.f32 %v2306, 1.442695
    %v2308 = vpow.pop %v2307
    %v2309 = vadd.f32 %v2308, 1.0
    %v2310 = vrcp.pop %v2309
    %v2311 = vmul.f32 %v2309, %v2310
    %v2312 = vsub.f32 1.0, %v2311
    %v2313 = vmul.f32 %v2310, %v2312
    %v2314 = vadd.f32 %v2310, %v2313
    %vm2315 = vweird.f32 %v2309
    %vm2316 = vweird.f32 %v2310
    %vm2317 = vmor %vm2315, %vm2316
    %v2318 = vsel %vm2317, %v2310, %v2314
    %v2319 = vand.u32 2147483647, %v2309
    %vm2320 = vcmp.eq.f32.partialorder %v2319, 8.507059e+37
    %v2321 = vand.u32 %v2309, 2147483648
    %v2322 = vor.u32 1.1754944e-38, %v2321
    %v2323 = vsel %vm2320, %v2322, %v2318
    %v2324 = vmul.f32 1.0, %v2323
    %v2325 = vtanh.pop %v2305
    %v2327 = vrot.slane %v2191, 2
    %v2329 = vmul.f32 %v2324, %v2327
    %2331 = vrot.lane.b32.xlu0 %v2325, 64
    %v2332 = vpop.permute.xlu0 %2331
    %v2334 = vmul.f32 %v2324, %v2332
    %2336 = vrot.lane.b32.xlu0 %v2334, 32
    %v2337 = vpop.permute.xlu0 %2336
    %v2339 = vadd.f32 %v2329, %v2337
    %v2340 = vtanh.pop %v2339
    %2342 = vrot.lane.b32.xlu0 %v2340, 64
    %v2343 = vpop.permute.xlu0 %2342
    %v2345 = vmul.f32 %v2324, %v2343
    %2347 = vrot.lane.b32.xlu0 %v2276, 32
    %v2348 = vpop.permute.xlu0 %2347
    %2350 = vst.msk [vmem:[#allocation2 + $0x8] sm:$0x30] %vm530, %v2348
    %2352 = vrot.lane.b32.xlu0 %v2345, 64
    %v2353 = vpop.permute.xlu0 %2352
    %2355 = vst.msk [vmem:[#allocation2] sm:$0xc] %vm536, %v2353
    %v2356 = vrot.slane %v2276, 4
    %2357 = vrot.lane.b32.xlu0 %v2356, 32
    %v2358 = vpop.permute.xlu0 %2357
    %v2359 = vsel %vm106, %v2358, 0
    %2361 = vmatpush.msra.mxu0 0.0
    %2362 = vmatpush.msra.mxu0 0.0
    %2363 = vmatpush.msra.mxu0 0.0
    %2364 = vmatpush.msra.mxu0 0.0
    %2365 = vmatpush.msra.mxu0 0.0
    %2366 = vmatpush.msra.mxu0 0.0
    %2367 = vmatpush.msra.mxu0 0.0
    %2368 = vmatpush.msra.mxu0 0.0
    %2369 = vmatpush.msra.mxu0 0.0
    %2370 = vmatpush.msra.mxu0 0.0
    %2371 = vmatpush.msra.mxu0 0.0
    %2372 = vmatpush.msra.mxu0 0.0
    %2373 = vmatpush.msra.mxu0 %v1347
    %2374 = vmatpush.msra.mxu0 %v1346
    %2375 = vmatpush.msra.mxu0 %v1345
    %2376 = vmatpush.msra.mxu0 %v1344
    %2377 = vmatmul.f32.gmra.mxu0 %v2359
    %v2378 = vpop.f32.mrf.mxu0
    %v2379 = vadd.f32 0.0, %v2378
    %2380 = vdwg.mxu0
    %v2382 = vrot.slane %v2379, 2
    %v2384 = vadd.f32 %v1319, %v2382
    %v2385 = vxor.u32 %v2384, 2147483648
    %v2386 = vmul.f32 %v2385, 1.442695
    %v2387 = vpow.pop %v2386
    %v2388 = vadd.f32 %v2387, 1.0
    %v2389 = vrcp.pop %v2388
    %v2390 = vmul.f32 %v2388, %v2389
    %v2391 = vsub.f32 1.0, %v2390
    %v2392 = vmul.f32 %v2389, %v2391
    %v2393 = vadd.f32 %v2389, %v2392
    %vm2394 = vweird.f32 %v2388
    %vm2395 = vweird.f32 %v2389
    %vm2396 = vmor %vm2394, %vm2395
    %v2397 = vsel %vm2396, %v2389, %v2393
    %v2398 = vand.u32 2147483647, %v2388
    %vm2399 = vcmp.eq.f32.partialorder %v2398, 8.507059e+37
    %v2400 = vand.u32 %v2388, 2147483648
    %v2401 = vor.u32 1.1754944e-38, %v2400
    %v2402 = vsel %vm2399, %v2401, %v2397
    %v2403 = vmul.f32 1.0, %v2402
    %v2404 = vtanh.pop %v2384
    %v2406 = vrot.slane %v2270, 6
    %v2408 = vmul.f32 %v2403, %v2406
    %2410 = vrot.lane.b32.xlu0 %v2404, 64
    %v2411 = vpop.permute.xlu0 %2410
    %v2413 = vmul.f32 %v2403, %v2411
    %2415 = vrot.lane.b32.xlu0 %v2413, 32
    %v2416 = vpop.permute.xlu0 %2415
    %v2418 = vadd.f32 %v2408, %v2416
    %v2419 = vtanh.pop %v2418
    %2421 = vrot.lane.b32.xlu0 %v2419, 64
    %v2422 = vpop.permute.xlu0 %2421
    %v2424 = vmul.f32 %v2403, %v2422
    %v2425 = vrot.slane %v2345, 2
    %2426 = vrot.lane.b32.xlu0 %v2425, 32
    %v2427 = vpop.permute.xlu0 %2426
    %v2428 = vsel %vm106, %v2427, 0
    %2430 = vmatpush.msra.mxu0 0.0
    %2431 = vmatpush.msra.mxu0 0.0
    %2432 = vmatpush.msra.mxu0 0.0
    %2433 = vmatpush.msra.mxu0 0.0
    %2434 = vmatpush.msra.mxu0 0.0
    %2435 = vmatpush.msra.mxu0 0.0
    %2436 = vmatpush.msra.mxu0 0.0
    %2437 = vmatpush.msra.mxu0 0.0
    %2438 = vmatpush.msra.mxu0 0.0
    %2439 = vmatpush.msra.mxu0 0.0
    %2440 = vmatpush.msra.mxu0 0.0
    %2441 = vmatpush.msra.mxu0 0.0
    %2442 = vmatpush.msra.mxu0 %v1351
    %2443 = vmatpush.msra.mxu0 %v1350
    %2444 = vmatpush.msra.mxu0 %v1349
    %2445 = vmatpush.msra.mxu0 %v1348
    %2446 = vmatmul.f32.gmra.mxu0 %v2428
    %v2447 = vpop.f32.mrf.mxu0
    %v2448 = vadd.f32 0.0, %v2447
    %2449 = vdwg.mxu0
    %v2450 = vadd.f32 %v1339, %v2448
    %v2451 = vxor.u32 %v2450, 2147483648
    %v2452 = vmul.f32 %v2451, 1.442695
    %v2453 = vpow.pop %v2452
    %v2454 = vadd.f32 %v2453, 1.0
    %v2455 = vrcp.pop %v2454
    %v2456 = vmul.f32 %v2454, %v2455
    %v2457 = vsub.f32 1.0, %v2456
    %v2458 = vmul.f32 %v2455, %v2457
    %v2459 = vadd.f32 %v2455, %v2458
    %vm2460 = vweird.f32 %v2454
    %vm2461 = vweird.f32 %v2455
    %vm2462 = vmor %vm2460, %vm2461
    %v2463 = vsel %vm2462, %v2455, %v2459
    %v2464 = vand.u32 2147483647, %v2454
    %vm2465 = vcmp.eq.f32.partialorder %v2464, 8.507059e+37
    %v2466 = vand.u32 %v2454, 2147483648
    %v2467 = vor.u32 1.1754944e-38, %v2466
    %v2468 = vsel %vm2465, %v2467, %v2463
    %v2469 = vmul.f32 1.0, %v2468
    %v2470 = vtanh.pop %v2450
    %v2472 = vrot.slane %v2339, 2
    %v2474 = vmul.f32 %v2469, %v2472
    %2476 = vrot.lane.b32.xlu0 %v2470, 64
    %v2477 = vpop.permute.xlu0 %2476
    %v2479 = vmul.f32 %v2469, %v2477
    %2481 = vrot.lane.b32.xlu0 %v2479, 32
    %v2482 = vpop.permute.xlu0 %2481
    %v2484 = vadd.f32 %v2474, %v2482
    %v2485 = vtanh.pop %v2484
    %2487 = vrot.lane.b32.xlu0 %v2485, 64
    %v2488 = vpop.permute.xlu0 %2487
    %v2490 = vmul.f32 %v2469, %v2488
    %2492 = vrot.lane.b32.xlu0 %v2424, 32
    %v2493 = vpop.permute.xlu0 %2492
    %2495 = vst.msk [vmem:[#allocation2 + $0x8] sm:$0xc0] %vm677, %v2493
    %2497 = vrot.lane.b32.xlu0 %v2490, 64
    %v2498 = vpop.permute.xlu0 %2497
    %2500 = vst.msk [vmem:[#allocation2] sm:$0x3] %vm683, %v2498
    %v2501 = vld [vmem:[#allocation2] sm:$0xff]
    %v2502 = vld [vmem:[#allocation2 + $0x8] sm:$0xff]
    %v2503 = vld [vmem:[%s7] sm:$0xff]
    %v2504 = vld [vmem:[%s7 + $0x8] sm:$0xff]
    %v2505 = vld [vmem:[%s7 + $0x10] sm:$0xff]
    %v2506 = vld [vmem:[%s7 + $0x18] sm:$0xff]
    %v2507 = vld [vmem:[%s7 + $0x20] sm:$0xff]
    %v2508 = vld [vmem:[%s7 + $0x28] sm:$0xff]
    %v2509 = vld [vmem:[%s7 + $0x30] sm:$0xff]
    %v2510 = vld [vmem:[%s7 + $0x38] sm:$0xff]
    %v2511 = vld [vmem:[%s8] sm:$0x1]
    %v2513 = vperm.slane %v2511, 0
    %v2516 = vsel %vm1291, %v2501, 0
    %v2519 = vsel %vm1291, %v2502, 0
    %2521 = vmatpush.msra.mxu0 0.0
    %2522 = vmatpush.msra.mxu0 0.0
    %2523 = vmatpush.msra.mxu0 0.0
    %2524 = vmatpush.msra.mxu0 0.0
    %2525 = vmatpush.msra.mxu0 0.0
    %2526 = vmatpush.msra.mxu0 0.0
    %2527 = vmatpush.msra.mxu0 0.0
    %2528 = vmatpush.msra.mxu0 0.0
    %2529 = vmatpush.msra.mxu0 %v2510
    %2530 = vmatpush.msra.mxu0 %v2509
    %2531 = vmatpush.msra.mxu0 %v2508
    %2532 = vmatpush.msra.mxu0 %v2507
    %2533 = vmatpush.msra.mxu0 %v2506
    %2534 = vmatpush.msra.mxu0 %v2505
    %2535 = vmatpush.msra.mxu0 %v2504
    %2536 = vmatpush.msra.mxu0 %v2503
    %2537 = vmatmul.f32.gmra.mxu0 %v2516
    %v2538 = vpop.f32.mrf.mxu0
    %v2539 = vadd.f32 %v2513, %v2538
    %2540 = vmatmul.f32.gmra.mxu0 %v2519
    %v2541 = vpop.f32.mrf.mxu0
    %v2542 = vadd.f32 %v2513, %v2541
    %2543 = vdwg.mxu0
    %2544 = vst [vmem:[#allocation3] sm:$0xff] %v2539
    %2545 = vst [vmem:[#allocation3 + $0x8] sm:$0xff] %v2542
    // Predicated region
    $region38: #{_blstm_forward_impl.1} parent=1 // pred_check
      _
    $region39: #{_blstm_forward_impl.1} parent=1 // pred_check_branch
      %2547 = sbr.rel (0) target = $region41
    $region40: #{_blstm_forward_impl.1} parent=1 // pred_region
      %2549 = vsyncadd [#allocation4], 0
      %s2550 = sshll.u32 [#allocation3], 4
      %s2551 = int_to_ptr.vmem [resolvable:$true] %s2550
      %s2552 = sshll.u32 %s9, 4
      %s2553 = int_to_ptr.hbm [resolvable:$true] %s2552
      %2558 = dma.vmem_to_hbm [thread:$0]  %s2551, 256, %s2553, [#allocation4], 128, 128, 8
    $region41: #{_blstm_forward_impl.1} parent=1 // pred_fallthru
      _
    // Predicated region
    $region42: #{_blstm_forward_impl.1} parent=1 // pred_check
      _
    $region43: #{_blstm_forward_impl.1} parent=1 // pred_check_branch
      %2560 = sbr.rel (0) target = $region45
    $region44: #{_blstm_forward_impl.1} parent=1 // pred_region
      %2562 = dma.done [#allocation4], 256
    $region45: #{_blstm_forward_impl.1} parent=1 // pred_fallthru
      _
    %2563 = vsyncpa [#allocation4], 1

</llo_original>
